<compile_context>
chip_gen: v5e
topology: v5e:2x2
jax: 0.10.0
libtpu: 0.0.40
codegen_flags: <defaults>
</compile_context>

<pallas_src>
import math
from functools import partial

import jax
import jax.numpy as jnp
from jax import lax
from jax.experimental import pallas as pl
from jax.experimental.pallas import tpu as pltpu

# Scaled-down BERT config (module: hidden=768 / 12 heads / 2 layers / vocab=4;
# we keep layers=2 and vocab=4 and shrink hidden for a small, lane-aligned run).
HIDDEN = 128
NUM_HEADS = 4
HEAD_DIM = HIDDEN // NUM_HEADS
INTERMEDIATE = 4 * HIDDEN
NUM_LAYERS = 2
VOCAB = 4
TYPE_VOCAB = 2
MAX_POS = 32
LN_EPS = 1e-12
NUM_CLASSES = 2

BF16 = jnp.bfloat16
ACT_DTYPE = jnp.bfloat16          # inter-kernel activation dtype (h chain)
VMEM_LIMIT = 32 * 1024 * 1024     # explicit scoped-VMEM limit (safe on v5e/v6e/v7x)
# TODO(synk): at production shapes (H=768, I=3072, B*S~4096) size VMEM_LIMIT
# from the actual double-buffered block bytes and switch attention to a
# flash-style (B, nH, q-block) grid with online-softmax accumulators.


def _row_tile(m):
    """Row tile: multiple of 16 (bf16 sublane tile) that divides m, aiming for
    >=2 blocks so v7x's two TensorCores both get work (neutral on v5e/v6e)."""
    if m % 16 != 0:
        return m
    target = max(16, min(256, m // 2))
    t = target - target % 16
    while t >= 16 and m % t != 0:
        t -= 16
    return t if t >= 16 else m


# ----------------------------- in-kernel helpers ---------------------------

def _erf(x):
    # A&S 7.1.26 polynomial (max abs err ~1.5e-7); exact divide keeps the bound.
    a1, a2, a3, a4, a5 = (0.254829592, -0.284496736, 1.421413741,
                          -1.453152027, 1.061405429)
    p = 0.3275911
    sgn = jnp.where(x >= 0.0, 1.0, -1.0)
    ax = jnp.abs(x)
    t = 1.0 / (1.0 + p * ax)
    poly = ((((a5 * t + a4) * t + a3) * t + a2) * t + a1) * t
    return sgn * (1.0 - poly * jnp.exp(-ax * ax))


def _gelu(y):
    # HF "gelu" = exact erf-based GELU (computed in f32).
    return 0.5 * y * (1.0 + _erf(y * (1.0 / math.sqrt(2.0))))


def _layernorm(h, g, b):
    # Single-pass f32 statistics: two independent cross-lane reductions.
    mean = jnp.mean(h, axis=-1, keepdims=True)
    msq = jnp.mean(h * h, axis=-1, keepdims=True)
    var = jnp.maximum(msq - mean * mean, 0.0)
    return (h - mean) * lax.rsqrt(var + LN_EPS) * g + b


# ----------------------------- Pallas kernels ------------------------------

def _ln_kernel(x_ref, g_ref, b_ref, o_ref):
    o_ref[...] = _layernorm(x_ref[...].astype(jnp.float32),
                            g_ref[...], b_ref[...]).astype(o_ref.dtype)


def layernorm(x, gamma, beta):
    """No-residual LayerNorm (embeddings), M-tiled with a parallel grid."""
    M, H = x.shape
    tm = _row_tile(M)
    return pl.pallas_call(
        _ln_kernel,
        grid=(M // tm,),
        out_shape=jax.ShapeDtypeStruct((M, H), ACT_DTYPE),
        in_specs=[pl.BlockSpec((tm, H), lambda i: (i, 0)),
                  pl.BlockSpec((1, H), lambda i: (0, 0)),
                  pl.BlockSpec((1, H), lambda i: (0, 0))],
        out_specs=pl.BlockSpec((tm, H), lambda i: (i, 0)),
        compiler_params=pltpu.CompilerParams(
            dimension_semantics=("parallel",)),
    )(x, gamma, beta)


def _attn_block_kernel(h_ref, m_ref, qkv_w_ref, qkv_b_ref, ao_w_ref, ao_b_ref,
                       g_ref, b_ref, o_ref, *, scale, num_heads, head_dim,
                       hidden):
    x_bf = h_ref[0]                                    # (S, H) bf16 activations
    m = m_ref[...]                                     # (1, 1, S) additive mask

    # Fused QKV projection: stays in VMEM, never round-trips HBM.
    qkv = jnp.dot(x_bf, qkv_w_ref[...],
                  preferred_element_type=jnp.float32) + qkv_b_ref[...]
    qkv_bf = qkv.astype(BF16)                          # (S, 3H)

    # Head-batched views (nH, S, Dh): lane slices stacked along a new major
    # axis (no lane-merging transposes/concats).
    def split_heads(base):
        return jnp.stack(
            [qkv_bf[:, base + hd * head_dim: base + (hd + 1) * head_dim]
             for hd in range(num_heads)], axis=0)

    qh = split_heads(0)
    kh = split_heads(hidden)
    vh = split_heads(2 * hidden)

    # Batched scores + softmax (f32 stats, EUP reciprocal for the denominator).
    s = jnp.einsum("hqd,hkd->hqk", qh, kh,
                   preferred_element_type=jnp.float32) * scale   # (nH, S, S)
    s = s + m
    s_max = jnp.max(s, axis=-1, keepdims=True)
    p = jnp.exp(s - s_max)
    p = p * pl.reciprocal(jnp.sum(p, axis=-1, keepdims=True), approx=True)

    ctx = jnp.einsum("hqk,hkd->hqd", p.astype(BF16), vh,
                     preferred_element_type=jnp.float32)          # (nH, S, Dh)

    # Head-merge fused into the output projection: attn = sum_h ctx_h @ Wo_h.
    # Keeps the only store lane-dense (S, H); no concat / masked partial stores.
    ao_w = ao_w_ref[...]                                          # (H, H) bf16
    seq = x_bf.shape[0]
    attn = jnp.zeros((seq, hidden), jnp.float32)
    for hd in range(num_heads):
        attn = attn + jnp.dot(ctx[hd].astype(BF16),
                              ao_w[hd * head_dim:(hd + 1) * head_dim, :],
                              preferred_element_type=jnp.float32)
    attn = attn + ao_b_ref[...]

    resid = x_bf.astype(jnp.float32)
    o_ref[0] = _layernorm(attn + resid, g_ref[...], b_ref[...]).astype(o_ref.dtype)


def attention_block(h, add_mask, qkv_w, qkv_b, ao_w, ao_b, ln_g, ln_b):
    """Fused QKV dense + multi-head attention + output projection + residual
    + LayerNorm in ONE pallas_call, gridded (parallel) over the batch."""
    B, S, H = h.shape
    scale = 1.0 / math.sqrt(HEAD_DIM)
    return pl.pallas_call(
        partial(_attn_block_kernel, scale=scale, num_heads=NUM_HEADS,
                head_dim=HEAD_DIM, hidden=H),
        grid=(B,),
        out_shape=jax.ShapeDtypeStruct((B, S, H), ACT_DTYPE),
        in_specs=[pl.BlockSpec((1, S, H), lambda b: (b, 0, 0)),        # h (bf16)
                  pl.BlockSpec((1, 1, S), lambda b: (b, 0, 0)),        # mask
                  pl.BlockSpec((H, 3 * H), lambda b: (0, 0)),          # qkv_w bf16
                  pl.BlockSpec((1, 3 * H), lambda b: (0, 0)),          # qkv_b
                  pl.BlockSpec((H, H), lambda b: (0, 0)),              # ao_w bf16
                  pl.BlockSpec((1, H), lambda b: (0, 0)),              # ao_b
                  pl.BlockSpec((1, H), lambda b: (0, 0)),              # ln_g
                  pl.BlockSpec((1, H), lambda b: (0, 0))],             # ln_b
        out_specs=pl.BlockSpec((1, S, H), lambda b: (b, 0, 0)),
        compiler_params=pltpu.CompilerParams(
            dimension_semantics=("parallel",),
            vmem_limit_bytes=VMEM_LIMIT),
    )(h, add_mask, qkv_w, qkv_b.reshape(1, 3 * H), ao_w,
      ao_b.reshape(1, H), ln_g, ln_b)


def _ffn_kernel(h_ref, iw_ref, ib_ref, ow_ref, ob_ref, g_ref, b_ref, o_ref):
    x_bf = h_ref[...]                                               # (tm, H) bf16
    inter = jnp.dot(x_bf, iw_ref[...],
                    preferred_element_type=jnp.float32) + ib_ref[...]
    inter = _gelu(inter)                                            # (tm, I) f32
    y = jnp.dot(inter.astype(BF16), ow_ref[...],
                preferred_element_type=jnp.float32) + ob_ref[...]   # (tm, H)
    o_ref[...] = _layernorm(y + x_bf.astype(jnp.float32),
                            g_ref[...], b_ref[...]).astype(o_ref.dtype)


def ffn_block(h, i_w, i_b, o_w, o_b, ln_g, ln_b):
    """Intermediate matmul + GELU + output matmul + residual + LayerNorm,
    M-tiled (parallel) so the (tm, I) intermediate stays in VMEM and v7x's
    two TensorCores both get tiles; weights are the only resident blocks."""
    M, H = h.shape
    I = i_w.shape[1]
    tm = _row_tile(M)
    return pl.pallas_call(
        _ffn_kernel,
        grid=(M // tm,),
        out_shape=jax.ShapeDtypeStruct((M, H), ACT_DTYPE),
        in_specs=[pl.BlockSpec((tm, H), lambda i: (i, 0)),
                  pl.BlockSpec((H, I), lambda i: (0, 0)),
                  pl.BlockSpec((1, I), lambda i: (0, 0)),
                  pl.BlockSpec((I, H), lambda i: (0, 0)),
                  pl.BlockSpec((1, H), lambda i: (0, 0)),
                  pl.BlockSpec((1, H), lambda i: (0, 0)),
                  pl.BlockSpec((1, H), lambda i: (0, 0))],
        out_specs=pl.BlockSpec((tm, H), lambda i: (i, 0)),
        compiler_params=pltpu.CompilerParams(
            dimension_semantics=("parallel",),
            vmem_limit_bytes=VMEM_LIMIT),
    )(h, i_w, i_b.reshape(1, I), o_w, o_b.reshape(1, H), ln_g, ln_b)


def _pool_head_kernel(cls_ref, pw_ref, pb_ref, hw_ref, hb_ref, o_ref):
    pooled = jnp.tanh(jnp.dot(cls_ref[...], pw_ref[...],
                              preferred_element_type=jnp.float32) + pb_ref[...])
    o_ref[...] = jnp.dot(pooled.astype(BF16), hw_ref[...],
                         preferred_element_type=jnp.float32) + hb_ref[...]


def pooler_head(cls, pool_w, pool_b, head_w, head_b):
    """Fused pooler (dense+tanh on [CLS]) + classification head."""
    B, H = cls.shape
    C = head_w.shape[1]
    # TODO(synk): with B < 8 rows the (8,128) block rule forces a single block;
    # at serving batch sizes give this a parallel B-tiled grid for v7x.
    return pl.pallas_call(
        _pool_head_kernel,
        grid=(1,),
        out_shape=jax.ShapeDtypeStruct((B, C), jnp.float32),
        in_specs=[pl.BlockSpec((B, H), lambda i: (0, 0)),
                  pl.BlockSpec((H, H), lambda i: (0, 0)),
                  pl.BlockSpec((1, H), lambda i: (0, 0)),
                  pl.BlockSpec((H, C), lambda i: (0, 0)),
                  pl.BlockSpec((1, C), lambda i: (0, 0))],
        out_specs=pl.BlockSpec((B, C), lambda i: (0, 0)),
    )(cls, pool_w, pool_b.reshape(1, H), head_w, head_b.reshape(1, C))


# ------------------------- parameters & forward ---------------------------

def init_params(key):
    keys = iter(jax.random.split(key, 64))

    def nrm(shape):
        return 0.02 * jax.random.normal(next(keys), shape, jnp.float32)

    def zeros(shape):
        return jnp.zeros(shape, jnp.float32)

    params = {
        "word_emb": nrm((VOCAB, HIDDEN)),
        "pos_emb": nrm((MAX_POS, HIDDEN)),
        "type_emb": nrm((TYPE_VOCAB, HIDDEN)),
        "emb_ln_g": jnp.ones((1, HIDDEN), jnp.float32),
        "emb_ln_b": zeros((1, HIDDEN)),
        "layers": [],
        "pool_w": nrm((HIDDEN, HIDDEN)),
        "pool_b": zeros((HIDDEN,)),
        "head_w": nrm((HIDDEN, NUM_CLASSES)),
        "head_b": zeros((NUM_CLASSES,)),
    }
    for _ in range(NUM_LAYERS):
        params["layers"].append({
            "qkv_w": nrm((HIDDEN, 3 * HIDDEN)),   # fused [q_w | k_w | v_w]
            "qkv_b": zeros((3 * HIDDEN,)),
            "ao_w": nrm((HIDDEN, HIDDEN)), "ao_b": zeros((HIDDEN,)),
            "ao_ln_g": jnp.ones((1, HIDDEN), jnp.float32),
            "ao_ln_b": zeros((1, HIDDEN)),
            "i_w": nrm((HIDDEN, INTERMEDIATE)), "i_b": zeros((INTERMEDIATE,)),
            "o_w": nrm((INTERMEDIATE, HIDDEN)), "o_b": zeros((HIDDEN,)),
            "o_ln_g": jnp.ones((1, HIDDEN), jnp.float32),
            "o_ln_b": zeros((1, HIDDEN)),
        })
    return params


def prepare_params(params):
    """One-time bf16 cast of every MXU weight matrix (halves weight DMA bytes
    and VMEM footprint); biases / LN params / embedding tables stay f32."""
    p = dict(params)
    p["pool_w"] = params["pool_w"].astype(BF16)
    p["head_w"] = params["head_w"].astype(BF16)
    p["layers"] = []
    for lyr in params["layers"]:
        l = dict(lyr)
        for k in ("qkv_w", "ao_w", "i_w", "o_w"):
            l[k] = lyr[k].astype(BF16)
        p["layers"].append(l)
    return p


def bert_forward(params, input_ids, attention_mask, token_type_ids):
    B, S = input_ids.shape

    # Embeddings: table gathers + sum are XLA glue; LN is a Pallas kernel.
    we = jnp.take(params["word_emb"], input_ids, axis=0)           # (B,S,H)
    pe = params["pos_emb"][:S][None, :, :]                         # (1,S,H)
    te = jnp.take(params["type_emb"], token_type_ids, axis=0)      # (B,S,H)
    emb = (we + pe + te).reshape(B * S, HIDDEN)
    h = layernorm(emb, params["emb_ln_g"], params["emb_ln_b"])     # bf16
    # TODO(synk): dropout layers are identity here (inference/eval semantics).

    add_mask = ((1.0 - attention_mask.astype(jnp.float32)) * -1e9
                ).reshape(B, 1, S)

    # Encoder layers: 2 pallas_calls per layer (fused-QKV attention, fused FFN).
    for lyr in params["layers"]:
        h = attention_block(h.reshape(B, S, HIDDEN), add_mask,
                            lyr["qkv_w"], lyr["qkv_b"],
                            lyr["ao_w"], lyr["ao_b"],
                            lyr["ao_ln_g"], lyr["ao_ln_b"]
                            ).reshape(B * S, HIDDEN)
        h = ffn_block(h, lyr["i_w"], lyr["i_b"], lyr["o_w"], lyr["o_b"],
                      lyr["o_ln_g"], lyr["o_ln_b"])

    cls = h.reshape(B, S, HIDDEN)[:, 0, :]                         # (B,H) bf16
    return pooler_head(cls, params["pool_w"], params["pool_b"],
                       params["head_w"], params["head_b"])         # (B,2) f32


if __name__ == "__main__":
    key = jax.random.PRNGKey(0)
    pkey, ikey = jax.random.split(key)
    params = prepare_params(init_params(pkey))

    B, S = 2, 16
    input_ids = jax.random.randint(ikey, (B, S), 0, VOCAB, dtype=jnp.int32)
    attention_mask = jnp.array([[1] * S, [1] * (S - 3) + [0] * 3],
                               dtype=jnp.int32)
    token_type_ids = jnp.zeros((B, S), dtype=jnp.int32)

    fwd = jax.jit(bert_forward)
    logits = fwd(params, input_ids, attention_mask, token_type_ids)
    jax.block_until_ready(logits)
    assert logits.shape == (B, NUM_CLASSES)
    assert bool(jnp.all(jnp.isfinite(logits)))
    print("KERNEL_OK")
</pallas_src>

<mosaic_0001>
module attributes {stable_mosaic.version = 11 : i64} {
  func.func @_ffn_kernel(%arg0: i32, %arg1: memref<16x128xbf16, #tpu.memory_space<vmem>>, %arg2: memref<128x512xbf16, #tpu.memory_space<vmem>>, %arg3: memref<1x512xf32, #tpu.memory_space<vmem>>, %arg4: memref<512x128xbf16, #tpu.memory_space<vmem>>, %arg5: memref<1x128xf32, #tpu.memory_space<vmem>>, %arg6: memref<1x128xf32, #tpu.memory_space<vmem>>, %arg7: memref<1x128xf32, #tpu.memory_space<vmem>>, %arg8: memref<16x128xbf16, #tpu.memory_space<vmem>>) attributes {dimension_semantics = [#tpu.dimension_semantics<parallel>], iteration_bounds = array<i64: 2>, scalar_prefetch = 0 : i64, scratch_operands = 0 : i64, tpu.core_type = #tpu.core_type<tc>, window_params = [{transform_indices = @transform_0, window_bounds = array<i64: 16, 128>}, {pipeline_mode = #tpu.pipeline_mode<synchronous>, transform_indices = @transform_1, window_bounds = array<i64: 128, 512>}, {pipeline_mode = #tpu.pipeline_mode<synchronous>, transform_indices = @transform_2, window_bounds = array<i64: 1, 512>}, {pipeline_mode = #tpu.pipeline_mode<synchronous>, transform_indices = @transform_3, window_bounds = array<i64: 512, 128>}, {pipeline_mode = #tpu.pipeline_mode<synchronous>, transform_indices = @transform_4, window_bounds = array<i64: 1, 128>}, {pipeline_mode = #tpu.pipeline_mode<synchronous>, transform_indices = @transform_5, window_bounds = array<i64: 1, 128>}, {pipeline_mode = #tpu.pipeline_mode<synchronous>, transform_indices = @transform_6, window_bounds = array<i64: 1, 128>}, {transform_indices = @transform_7, window_bounds = array<i64: 16, 128>}]} {
    %c0 = arith.constant 0 : index
    %c0_0 = arith.constant 0 : index
    %0 = vector.load %arg1[%c0, %c0_0] : memref<16x128xbf16, #tpu.memory_space<vmem>>, vector<16x128xbf16>
    %c0_1 = arith.constant 0 : index
    %c0_2 = arith.constant 0 : index
    %1 = vector.load %arg2[%c0_1, %c0_2] : memref<128x512xbf16, #tpu.memory_space<vmem>>, vector<128x512xbf16>
    %cst = arith.constant dense<0.000000e+00> : vector<16x512xf32>
    %2 = tpu.matmul %0, %1, %cst {dimension_numbers = #tpu.dot_dimension_numbers<[1], [0], [0], [1], [0, 0, 1, 1], [], []>} : vector<16x128xbf16>, vector<128x512xbf16>, vector<16x512xf32> -> vector<16x512xf32>
    %c0_3 = arith.constant 0 : index
    %c0_4 = arith.constant 0 : index
    %3 = vector.load %arg3[%c0_3, %c0_4] : memref<1x512xf32, #tpu.memory_space<vmem>>, vector<1x512xf32>
    %4 = vector.broadcast %3 : vector<1x512xf32> to vector<16x512xf32>
    %5 = arith.addf %2, %4 : vector<16x512xf32>
    %cst_5 = arith.constant 5.000000e-01 : f32
    %6 = vector.broadcast %cst_5 : f32 to vector<16x512xf32>
    %7 = arith.mulf %6, %5 : vector<16x512xf32>
    %cst_6 = arith.constant 0.707106769 : f32
    %8 = vector.broadcast %cst_6 : f32 to vector<16x512xf32>
    %9 = arith.mulf %5, %8 : vector<16x512xf32>
    %cst_7 = arith.constant 0.000000e+00 : f32
    %10 = vector.broadcast %cst_7 : f32 to vector<16x512xf32>
    %11 = arith.cmpf oge, %9, %10 : vector<16x512xf32>
    %cst_8 = arith.constant 1.000000e+00 : f32
    %cst_9 = arith.constant -1.000000e+00 : f32
    %12 = vector.broadcast %cst_8 : f32 to vector<16x512xf32>
    %13 = vector.broadcast %cst_9 : f32 to vector<16x512xf32>
    %14 = arith.select %11, %12, %13 : vector<16x512xi1>, vector<16x512xf32>
    %15 = math.absf %9 : vector<16x512xf32>
    %cst_10 = arith.constant 0.327591091 : f32
    %16 = vector.broadcast %cst_10 : f32 to vector<16x512xf32>
    %17 = arith.mulf %16, %15 : vector<16x512xf32>
    %cst_11 = arith.constant 1.000000e+00 : f32
    %18 = vector.broadcast %cst_11 : f32 to vector<16x512xf32>
    %19 = arith.addf %18, %17 : vector<16x512xf32>
    %cst_12 = arith.constant 1.000000e+00 : f32
    %20 = vector.broadcast %cst_12 : f32 to vector<16x512xf32>
    %21 = arith.divf %20, %19 : vector<16x512xf32>
    %cst_13 = arith.constant 1.06140542 : f32
    %22 = vector.broadcast %cst_13 : f32 to vector<16x512xf32>
    %23 = arith.mulf %22, %21 : vector<16x512xf32>
    %cst_14 = arith.constant -1.45315206 : f32
    %24 = vector.broadcast %cst_14 : f32 to vector<16x512xf32>
    %25 = arith.addf %23, %24 : vector<16x512xf32>
    %26 = arith.mulf %25, %21 : vector<16x512xf32>
    %cst_15 = arith.constant 1.42141378 : f32
    %27 = vector.broadcast %cst_15 : f32 to vector<16x512xf32>
    %28 = arith.addf %26, %27 : vector<16x512xf32>
    %29 = arith.mulf %28, %21 : vector<16x512xf32>
    %cst_16 = arith.constant -0.284496725 : f32
    %30 = vector.broadcast %cst_16 : f32 to vector<16x512xf32>
    %31 = arith.addf %29, %30 : vector<16x512xf32>
    %32 = arith.mulf %31, %21 : vector<16x512xf32>
    %cst_17 = arith.constant 0.254829586 : f32
    %33 = vector.broadcast %cst_17 : f32 to vector<16x512xf32>
    %34 = arith.addf %32, %33 : vector<16x512xf32>
    %35 = arith.mulf %34, %21 : vector<16x512xf32>
    %cst_18 = arith.constant 0.000000e+00 : f32
    %36 = vector.broadcast %cst_18 : f32 to vector<16x512xf32>
    %37 = arith.subf %36, %15 : vector<16x512xf32>
    %38 = arith.mulf %37, %15 : vector<16x512xf32>
    %39 = math.exp %38 : vector<16x512xf32>
    %40 = arith.mulf %35, %39 : vector<16x512xf32>
    %cst_19 = arith.constant 1.000000e+00 : f32
    %41 = vector.broadcast %cst_19 : f32 to vector<16x512xf32>
    %42 = arith.subf %41, %40 : vector<16x512xf32>
    %43 = arith.mulf %14, %42 : vector<16x512xf32>
    %cst_20 = arith.constant 1.000000e+00 : f32
    %44 = vector.broadcast %cst_20 : f32 to vector<16x512xf32>
    %45 = arith.addf %44, %43 : vector<16x512xf32>
    %46 = arith.mulf %7, %45 : vector<16x512xf32>
    %47 = arith.truncf %46 : vector<16x512xf32> to vector<16x512xbf16>
    %c0_21 = arith.constant 0 : index
    %c0_22 = arith.constant 0 : index
    %48 = vector.load %arg4[%c0_21, %c0_22] : memref<512x128xbf16, #tpu.memory_space<vmem>>, vector<512x128xbf16>
    %cst_23 = arith.constant dense<0.000000e+00> : vector<16x128xf32>
    %49 = tpu.matmul %47, %48, %cst_23 {dimension_numbers = #tpu.dot_dimension_numbers<[1], [0], [0], [1], [0, 0, 1, 1], [], []>} : vector<16x512xbf16>, vector<512x128xbf16>, vector<16x128xf32> -> vector<16x128xf32>
    %c0_24 = arith.constant 0 : index
    %c0_25 = arith.constant 0 : index
    %50 = vector.load %arg5[%c0_24, %c0_25] : memref<1x128xf32, #tpu.memory_space<vmem>>, vector<1x128xf32>
    %51 = vector.broadcast %50 : vector<1x128xf32> to vector<16x128xf32>
    %52 = arith.addf %49, %51 : vector<16x128xf32>
    %53 = arith.extf %0 : vector<16x128xbf16> to vector<16x128xf32>
    %54 = arith.addf %52, %53 : vector<16x128xf32>
    %c0_26 = arith.constant 0 : index
    %c0_27 = arith.constant 0 : index
    %55 = vector.load %arg6[%c0_26, %c0_27] : memref<1x128xf32, #tpu.memory_space<vmem>>, vector<1x128xf32>
    %c0_28 = arith.constant 0 : index
    %c0_29 = arith.constant 0 : index
    %56 = vector.load %arg7[%c0_28, %c0_29] : memref<1x128xf32, #tpu.memory_space<vmem>>, vector<1x128xf32>
    %cst_30 = arith.constant dense<0.000000e+00> : vector<16xf32>
    %57 = vector.multi_reduction <add>, %54, %cst_30 [1] : vector<16x128xf32> to vector<16xf32>
    %58 = vector.shape_cast %57 : vector<16xf32> to vector<16x1xf32>
    %cst_31 = arith.constant 1.280000e+02 : f32
    %59 = vector.broadcast %cst_31 : f32 to vector<16x1xf32>
    %60 = arith.divf %58, %59 : vector<16x1xf32>
    %61 = arith.mulf %54, %54 : vector<16x128xf32>
    %cst_32 = arith.constant dense<0.000000e+00> : vector<16xf32>
    %62 = vector.multi_reduction <add>, %61, %cst_32 [1] : vector<16x128xf32> to vector<16xf32>
    %63 = vector.shape_cast %62 : vector<16xf32> to vector<16x1xf32>
    %cst_33 = arith.constant 1.280000e+02 : f32
    %64 = vector.broadcast %cst_33 : f32 to vector<16x1xf32>
    %65 = arith.divf %63, %64 : vector<16x1xf32>
    %66 = arith.mulf %60, %60 : vector<16x1xf32>
    %67 = arith.subf %65, %66 : vector<16x1xf32>
    %cst_34 = arith.constant 0.000000e+00 : f32
    %68 = vector.broadcast %cst_34 : f32 to vector<16x1xf32>
    %69 = arith.maximumf %67, %68 : vector<16x1xf32>
    %70 = vector.broadcast %60 : vector<16x1xf32> to vector<16x128xf32>
    %71 = arith.subf %54, %70 : vector<16x128xf32>
    %cst_35 = arith.constant 9.99999996E-13 : f32
    %72 = vector.broadcast %cst_35 : f32 to vector<16x1xf32>
    %73 = arith.addf %69, %72 : vector<16x1xf32>
    %74 = math.rsqrt %73 : vector<16x1xf32>
    %75 = vector.broadcast %74 : vector<16x1xf32> to vector<16x128xf32>
    %76 = arith.mulf %71, %75 : vector<16x128xf32>
    %77 = vector.broadcast %55 : vector<1x128xf32> to vector<16x128xf32>
    %78 = arith.mulf %76, %77 : vector<16x128xf32>
    %79 = vector.broadcast %56 : vector<1x128xf32> to vector<16x128xf32>
    %80 = arith.addf %78, %79 : vector<16x128xf32>
    %81 = arith.truncf %80 : vector<16x128xf32> to vector<16x128xbf16>
    %c0_36 = arith.constant 0 : index
    %c0_37 = arith.constant 0 : index
    %82 = vector.load %arg8[%c0_36, %c0_37] : memref<16x128xbf16, #tpu.memory_space<vmem>>, vector<16x128xbf16>
    tpu.vector_store %arg8[%c0_36, %c0_37], %81 {strides = array<i32>} : memref<16x128xbf16, #tpu.memory_space<vmem>>, vector<16x128xbf16>,
    return
  }
  func.func @transform_0(%arg0: i32) -> (i32, i32) {
    %c0_i32 = arith.constant 0 : i32
    %c0_i32_0 = arith.constant 0 : i32
    return %arg0, %c0_i32 : i32, i32
  }
  func.func @transform_1(%arg0: i32) -> (i32, i32) {
    %c0_i32 = arith.constant 0 : i32
    %c0_i32_0 = arith.constant 0 : i32
    %c0_i32_1 = arith.constant 0 : i32
    return %c0_i32, %c0_i32_0 : i32, i32
  }
  func.func @transform_2(%arg0: i32) -> (i32, i32) {
    %c0_i32 = arith.constant 0 : i32
    %c0_i32_0 = arith.constant 0 : i32
    %c0_i32_1 = arith.constant 0 : i32
    return %c0_i32, %c0_i32_0 : i32, i32
  }
  func.func @transform_3(%arg0: i32) -> (i32, i32) {
    %c0_i32 = arith.constant 0 : i32
    %c0_i32_0 = arith.constant 0 : i32
    %c0_i32_1 = arith.constant 0 : i32
    return %c0_i32, %c0_i32_0 : i32, i32
  }
  func.func @transform_4(%arg0: i32) -> (i32, i32) {
    %c0_i32 = arith.constant 0 : i32
    %c0_i32_0 = arith.constant 0 : i32
    %c0_i32_1 = arith.constant 0 : i32
    return %c0_i32, %c0_i32_0 : i32, i32
  }
  func.func @transform_5(%arg0: i32) -> (i32, i32) {
    %c0_i32 = arith.constant 0 : i32
    %c0_i32_0 = arith.constant 0 : i32
    %c0_i32_1 = arith.constant 0 : i32
    return %c0_i32, %c0_i32_0 : i32, i32
  }
  func.func @transform_6(%arg0: i32) -> (i32, i32) {
    %c0_i32 = arith.constant 0 : i32
    %c0_i32_0 = arith.constant 0 : i32
    %c0_i32_1 = arith.constant 0 : i32
    return %c0_i32, %c0_i32_0 : i32, i32
  }
  func.func @transform_7(%arg0: i32) -> (i32, i32) {
    %c0_i32 = arith.constant 0 : i32
    %c0_i32_0 = arith.constant 0 : i32
    return %arg0, %c0_i32 : i32, i32
  }
}

module attributes {stable_mosaic.version = 11 : i64} {
  func.func @_ln_kernel(%arg0: i32, %arg1: memref<16x128xf32, #tpu.memory_space<vmem>>, %arg2: memref<1x128xf32, #tpu.memory_space<vmem>>, %arg3: memref<1x128xf32, #tpu.memory_space<vmem>>, %arg4: memref<16x128xbf16, #tpu.memory_space<vmem>>) attributes {dimension_semantics = [#tpu.dimension_semantics<parallel>], iteration_bounds = array<i64: 2>, scalar_prefetch = 0 : i64, scratch_operands = 0 : i64, tpu.core_type = #tpu.core_type<tc>, window_params = [{transform_indices = @transform_0, window_bounds = array<i64: 16, 128>}, {pipeline_mode = #tpu.pipeline_mode<synchronous>, transform_indices = @transform_1, window_bounds = array<i64: 1, 128>}, {pipeline_mode = #tpu.pipeline_mode<synchronous>, transform_indices = @transform_2, window_bounds = array<i64: 1, 128>}, {transform_indices = @transform_3, window_bounds = array<i64: 16, 128>}]} {
    %c0 = arith.constant 0 : index
    %c0_0 = arith.constant 0 : index
    %0 = vector.load %arg1[%c0, %c0_0] : memref<16x128xf32, #tpu.memory_space<vmem>>, vector<16x128xf32>
    %c0_1 = arith.constant 0 : index
    %c0_2 = arith.constant 0 : index
    %1 = vector.load %arg2[%c0_1, %c0_2] : memref<1x128xf32, #tpu.memory_space<vmem>>, vector<1x128xf32>
    %c0_3 = arith.constant 0 : index
    %c0_4 = arith.constant 0 : index
    %2 = vector.load %arg3[%c0_3, %c0_4] : memref<1x128xf32, #tpu.memory_space<vmem>>, vector<1x128xf32>
    %cst = arith.constant dense<0.000000e+00> : vector<16xf32>
    %3 = vector.multi_reduction <add>, %0, %cst [1] : vector<16x128xf32> to vector<16xf32>
    %4 = vector.shape_cast %3 : vector<16xf32> to vector<16x1xf32>
    %cst_5 = arith.constant 1.280000e+02 : f32
    %5 = vector.broadcast %cst_5 : f32 to vector<16x1xf32>
    %6 = arith.divf %4, %5 : vector<16x1xf32>
    %7 = arith.mulf %0, %0 : vector<16x128xf32>
    %cst_6 = arith.constant dense<0.000000e+00> : vector<16xf32>
    %8 = vector.multi_reduction <add>, %7, %cst_6 [1] : vector<16x128xf32> to vector<16xf32>
    %9 = vector.shape_cast %8 : vector<16xf32> to vector<16x1xf32>
    %cst_7 = arith.constant 1.280000e+02 : f32
    %10 = vector.broadcast %cst_7 : f32 to vector<16x1xf32>
    %11 = arith.divf %9, %10 : vector<16x1xf32>
    %12 = arith.mulf %6, %6 : vector<16x1xf32>
    %13 = arith.subf %11, %12 : vector<16x1xf32>
    %cst_8 = arith.constant 0.000000e+00 : f32
    %14 = vector.broadcast %cst_8 : f32 to vector<16x1xf32>
    %15 = arith.maximumf %13, %14 : vector<16x1xf32>
    %16 = vector.broadcast %6 : vector<16x1xf32> to vector<16x128xf32>
    %17 = arith.subf %0, %16 : vector<16x128xf32>
    %cst_9 = arith.constant 9.99999996E-13 : f32
    %18 = vector.broadcast %cst_9 : f32 to vector<16x1xf32>
    %19 = arith.addf %15, %18 : vector<16x1xf32>
    %20 = math.rsqrt %19 : vector<16x1xf32>
    %21 = vector.broadcast %20 : vector<16x1xf32> to vector<16x128xf32>
    %22 = arith.mulf %17, %21 : vector<16x128xf32>
    %23 = vector.broadcast %1 : vector<1x128xf32> to vector<16x128xf32>
    %24 = arith.mulf %22, %23 : vector<16x128xf32>
    %25 = vector.broadcast %2 : vector<1x128xf32> to vector<16x128xf32>
    %26 = arith.addf %24, %25 : vector<16x128xf32>
    %27 = arith.truncf %26 : vector<16x128xf32> to vector<16x128xbf16>
    %c0_10 = arith.constant 0 : index
    %c0_11 = arith.constant 0 : index
    %28 = vector.load %arg4[%c0_10, %c0_11] : memref<16x128xbf16, #tpu.memory_space<vmem>>, vector<16x128xbf16>
    tpu.vector_store %arg4[%c0_10, %c0_11], %27 {strides = array<i32>} : memref<16x128xbf16, #tpu.memory_space<vmem>>, vector<16x128xbf16>,
    return
  }
  func.func @transform_0(%arg0: i32) -> (i32, i32) {
    %c0_i32 = arith.constant 0 : i32
    %c0_i32_0 = arith.constant 0 : i32
    return %arg0, %c0_i32 : i32, i32
  }
  func.func @transform_1(%arg0: i32) -> (i32, i32) {
    %c0_i32 = arith.constant 0 : i32
    %c0_i32_0 = arith.constant 0 : i32
    %c0_i32_1 = arith.constant 0 : i32
    return %c0_i32, %c0_i32_0 : i32, i32
  }
  func.func @transform_2(%arg0: i32) -> (i32, i32) {
    %c0_i32 = arith.constant 0 : i32
    %c0_i32_0 = arith.constant 0 : i32
    %c0_i32_1 = arith.constant 0 : i32
    return %c0_i32, %c0_i32_0 : i32, i32
  }
  func.func @transform_3(%arg0: i32) -> (i32, i32) {
    %c0_i32 = arith.constant 0 : i32
    %c0_i32_0 = arith.constant 0 : i32
    return %arg0, %c0_i32 : i32, i32
  }
}

module attributes {stable_mosaic.version = 11 : i64} {
  func.func @_attn_block_kernel(%arg0: i32, %arg1: memref<1x16x128xbf16, #tpu.memory_space<vmem>>, %arg2: memref<1x1x16xf32, #tpu.memory_space<vmem>>, %arg3: memref<128x384xbf16, #tpu.memory_space<vmem>>, %arg4: memref<1x384xf32, #tpu.memory_space<vmem>>, %arg5: memref<128x128xbf16, #tpu.memory_space<vmem>>, %arg6: memref<1x128xf32, #tpu.memory_space<vmem>>, %arg7: memref<1x128xf32, #tpu.memory_space<vmem>>, %arg8: memref<1x128xf32, #tpu.memory_space<vmem>>, %arg9: memref<1x16x128xbf16, #tpu.memory_space<vmem>>) attributes {dimension_semantics = [#tpu.dimension_semantics<parallel>], iteration_bounds = array<i64: 2>, scalar_prefetch = 0 : i64, scratch_operands = 0 : i64, tpu.core_type = #tpu.core_type<tc>, window_params = [{transform_indices = @transform_0, window_bounds = array<i64: 1, 16, 128>}, {transform_indices = @transform_1, window_bounds = array<i64: 1, 1, 16>}, {pipeline_mode = #tpu.pipeline_mode<synchronous>, transform_indices = @transform_2, window_bounds = array<i64: 128, 384>}, {pipeline_mode = #tpu.pipeline_mode<synchronous>, transform_indices = @transform_3, window_bounds = array<i64: 1, 384>}, {pipeline_mode = #tpu.pipeline_mode<synchronous>, transform_indices = @transform_4, window_bounds = array<i64: 128, 128>}, {pipeline_mode = #tpu.pipeline_mode<synchronous>, transform_indices = @transform_5, window_bounds = array<i64: 1, 128>}, {pipeline_mode = #tpu.pipeline_mode<synchronous>, transform_indices = @transform_6, window_bounds = array<i64: 1, 128>}, {pipeline_mode = #tpu.pipeline_mode<synchronous>, transform_indices = @transform_7, window_bounds = array<i64: 1, 128>}, {transform_indices = @transform_8, window_bounds = array<i64: 1, 16, 128>}]} {
    %c0 = arith.constant 0 : index
    %c0_0 = arith.constant 0 : index
    %c0_1 = arith.constant 0 : index
    %0 = vector.load %arg1[%c0, %c0_0, %c0_1] : memref<1x16x128xbf16, #tpu.memory_space<vmem>>, vector<1x16x128xbf16>
    %1 = vector.shape_cast %0 : vector<1x16x128xbf16> to vector<16x128xbf16>
    %c0_2 = arith.constant 0 : index
    %c0_3 = arith.constant 0 : index
    %c0_4 = arith.constant 0 : index
    %2 = vector.load %arg2[%c0_2, %c0_3, %c0_4] : memref<1x1x16xf32, #tpu.memory_space<vmem>>, vector<1x1x16xf32>
    %c0_5 = arith.constant 0 : index
    %c0_6 = arith.constant 0 : index
    %3 = vector.load %arg3[%c0_5, %c0_6] : memref<128x384xbf16, #tpu.memory_space<vmem>>, vector<128x384xbf16>
    %cst = arith.constant dense<0.000000e+00> : vector<16x384xf32>
    %4 = tpu.matmul %1, %3, %cst {dimension_numbers = #tpu.dot_dimension_numbers<[1], [0], [0], [1], [0, 0, 1, 1], [], []>} : vector<16x128xbf16>, vector<128x384xbf16>, vector<16x384xf32> -> vector<16x384xf32>
    %c0_7 = arith.constant 0 : index
    %c0_8 = arith.constant 0 : index
    %5 = vector.load %arg4[%c0_7, %c0_8] : memref<1x384xf32, #tpu.memory_space<vmem>>, vector<1x384xf32>
    %6 = vector.broadcast %5 : vector<1x384xf32> to vector<16x384xf32>
    %7 = arith.addf %4, %6 : vector<16x384xf32>
    %8 = arith.truncf %7 : vector<16x384xf32> to vector<16x384xbf16>
    %9 = vector.extract_strided_slice %8 {offsets = [0, 0], sizes = [16, 32], strides = [1, 1]} : vector<16x384xbf16> to vector<16x32xbf16>
    %10 = vector.extract_strided_slice %8 {offsets = [0, 32], sizes = [16, 32], strides = [1, 1]} : vector<16x384xbf16> to vector<16x32xbf16>
    %11 = vector.extract_strided_slice %8 {offsets = [0, 64], sizes = [16, 32], strides = [1, 1]} : vector<16x384xbf16> to vector<16x32xbf16>
    %12 = vector.extract_strided_slice %8 {offsets = [0, 96], sizes = [16, 32], strides = [1, 1]} : vector<16x384xbf16> to vector<16x32xbf16>
    %13 = vector.shape_cast %9 : vector<16x32xbf16> to vector<1x16x32xbf16>
    %14 = vector.shape_cast %10 : vector<16x32xbf16> to vector<1x16x32xbf16>
    %15 = vector.shape_cast %11 : vector<16x32xbf16> to vector<1x16x32xbf16>
    %16 = vector.shape_cast %12 : vector<16x32xbf16> to vector<1x16x32xbf16>
    %17 = tpu.concatenate %13, %14, %15, %16 in 0 : vector<1x16x32xbf16>, vector<1x16x32xbf16>, vector<1x16x32xbf16>, vector<1x16x32xbf16> -> vector<4x16x32xbf16>
    %18 = vector.extract_strided_slice %8 {offsets = [0, 128], sizes = [16, 32], strides = [1, 1]} : vector<16x384xbf16> to vector<16x32xbf16>
    %19 = vector.extract_strided_slice %8 {offsets = [0, 160], sizes = [16, 32], strides = [1, 1]} : vector<16x384xbf16> to vector<16x32xbf16>
    %20 = vector.extract_strided_slice %8 {offsets = [0, 192], sizes = [16, 32], strides = [1, 1]} : vector<16x384xbf16> to vector<16x32xbf16>
    %21 = vector.extract_strided_slice %8 {offsets = [0, 224], sizes = [16, 32], strides = [1, 1]} : vector<16x384xbf16> to vector<16x32xbf16>
    %22 = vector.shape_cast %18 : vector<16x32xbf16> to vector<1x16x32xbf16>
    %23 = vector.shape_cast %19 : vector<16x32xbf16> to vector<1x16x32xbf16>
    %24 = vector.shape_cast %20 : vector<16x32xbf16> to vector<1x16x32xbf16>
    %25 = vector.shape_cast %21 : vector<16x32xbf16> to vector<1x16x32xbf16>
    %26 = tpu.concatenate %22, %23, %24, %25 in 0 : vector<1x16x32xbf16>, vector<1x16x32xbf16>, vector<1x16x32xbf16>, vector<1x16x32xbf16> -> vector<4x16x32xbf16>
    %27 = vector.extract_strided_slice %8 {offsets = [0, 256], sizes = [16, 32], strides = [1, 1]} : vector<16x384xbf16> to vector<16x32xbf16>
    %28 = vector.extract_strided_slice %8 {offsets = [0, 288], sizes = [16, 32], strides = [1, 1]} : vector<16x384xbf16> to vector<16x32xbf16>
    %29 = vector.extract_strided_slice %8 {offsets = [0, 320], sizes = [16, 32], strides = [1, 1]} : vector<16x384xbf16> to vector<16x32xbf16>
    %30 = vector.extract_strided_slice %8 {offsets = [0, 352], sizes = [16, 32], strides = [1, 1]} : vector<16x384xbf16> to vector<16x32xbf16>
    %31 = vector.shape_cast %27 : vector<16x32xbf16> to vector<1x16x32xbf16>
    %32 = vector.shape_cast %28 : vector<16x32xbf16> to vector<1x16x32xbf16>
    %33 = vector.shape_cast %29 : vector<16x32xbf16> to vector<1x16x32xbf16>
    %34 = vector.shape_cast %30 : vector<16x32xbf16> to vector<1x16x32xbf16>
    %35 = tpu.concatenate %31, %32, %33, %34 in 0 : vector<1x16x32xbf16>, vector<1x16x32xbf16>, vector<1x16x32xbf16>, vector<1x16x32xbf16> -> vector<4x16x32xbf16>
    "tpu.trace_start"() <{level = 10 : i32, message = "hqd,hkd->hqk"}> : () -> ()
    %cst_9 = arith.constant dense<0.000000e+00> : vector<4x16x16xf32>
    %36 = tpu.matmul %17, %26, %cst_9 {dimension_numbers = #tpu.dot_dimension_numbers<[2], [2], [1], [1], [0, 0, 0, 1, 1, 1], [0], [0]>} : vector<4x16x32xbf16>, vector<4x16x32xbf16>, vector<4x16x16xf32> -> vector<4x16x16xf32>
    "tpu.trace_stop"() : () -> ()
    %cst_10 = arith.constant 0.176776692 : f32
    %37 = vector.broadcast %cst_10 : f32 to vector<4x16x16xf32>
    %38 = arith.mulf %36, %37 : vector<4x16x16xf32>
    %39 = vector.broadcast %2 : vector<1x1x16xf32> to vector<4x16x16xf32>
    %40 = arith.addf %38, %39 : vector<4x16x16xf32>
    %cst_11 = arith.constant dense<0xFF800000> : vector<4x16xf32>
    %41 = vector.multi_reduction <maximumf>, %40, %cst_11 [2] : vector<4x16x16xf32> to vector<4x16xf32>
    %42 = vector.shape_cast %41 : vector<4x16xf32> to vector<4x16x1xf32>
    %43 = vector.broadcast %42 : vector<4x16x1xf32> to vector<4x16x16xf32>
    %44 = arith.subf %40, %43 : vector<4x16x16xf32>
    %45 = math.exp %44 : vector<4x16x16xf32>
    %cst_12 = arith.constant dense<0.000000e+00> : vector<4x16xf32>
    %46 = vector.multi_reduction <add>, %45, %cst_12 [2] : vector<4x16x16xf32> to vector<4x16xf32>
    %47 = vector.shape_cast %46 : vector<4x16xf32> to vector<4x16x1xf32>
    %48 = tpu.reciprocal %47 {approx = true} : vector<4x16x1xf32> -> vector<4x16x1xf32>
    %49 = vector.broadcast %48 : vector<4x16x1xf32> to vector<4x16x16xf32>
    %50 = arith.mulf %45, %49 : vector<4x16x16xf32>
    %51 = arith.truncf %50 : vector<4x16x16xf32> to vector<4x16x16xbf16>
    "tpu.trace_start"() <{level = 10 : i32, message = "hqk,hkd->hqd"}> : () -> ()
    %cst_13 = arith.constant dense<0.000000e+00> : vector<4x16x32xf32>
    %52 = tpu.matmul %51, %35, %cst_13 {dimension_numbers = #tpu.dot_dimension_numbers<[2], [1], [1], [2], [0, 0, 0, 1, 1, 2], [0], [0]>} : vector<4x16x16xbf16>, vector<4x16x32xbf16>, vector<4x16x32xf32> -> vector<4x16x32xf32>
    "tpu.trace_stop"() : () -> ()
    %c0_14 = arith.constant 0 : index
    %c0_15 = arith.constant 0 : index
    %53 = vector.load %arg5[%c0_14, %c0_15] : memref<128x128xbf16, #tpu.memory_space<vmem>>, vector<128x128xbf16>
    %cst_16 = arith.constant 0.000000e+00 : f32
    %54 = vector.broadcast %cst_16 : f32 to vector<16x128xf32>
    %55 = vector.extract_strided_slice %52 {offsets = [0, 0, 0], sizes = [1, 16, 32], strides = [1, 1, 1]} : vector<4x16x32xf32> to vector<1x16x32xf32>
    %56 = vector.shape_cast %55 : vector<1x16x32xf32> to vector<16x32xf32>
    %57 = arith.truncf %56 : vector<16x32xf32> to vector<16x32xbf16>
    %58 = vector.extract_strided_slice %53 {offsets = [0, 0], sizes = [32, 128], strides = [1, 1]} : vector<128x128xbf16> to vector<32x128xbf16>
    %cst_17 = arith.constant dense<0.000000e+00> : vector<16x128xf32>
    %59 = tpu.matmul %57, %58, %cst_17 {dimension_numbers = #tpu.dot_dimension_numbers<[1], [0], [0], [1], [0, 0, 1, 1], [], []>} : vector<16x32xbf16>, vector<32x128xbf16>, vector<16x128xf32> -> vector<16x128xf32>
    %60 = arith.addf %54, %59 : vector<16x128xf32>
    %61 = vector.extract_strided_slice %52 {offsets = [1, 0, 0], sizes = [1, 16, 32], strides = [1, 1, 1]} : vector<4x16x32xf32> to vector<1x16x32xf32>
    %62 = vector.shape_cast %61 : vector<1x16x32xf32> to vector<16x32xf32>
    %63 = arith.truncf %62 : vector<16x32xf32> to vector<16x32xbf16>
    %64 = vector.extract_strided_slice %53 {offsets = [32, 0], sizes = [32, 128], strides = [1, 1]} : vector<128x128xbf16> to vector<32x128xbf16>
    %cst_18 = arith.constant dense<0.000000e+00> : vector<16x128xf32>
    %65 = tpu.matmul %63, %64, %cst_18 {dimension_numbers = #tpu.dot_dimension_numbers<[1], [0], [0], [1], [0, 0, 1, 1], [], []>} : vector<16x32xbf16>, vector<32x128xbf16>, vector<16x128xf32> -> vector<16x128xf32>
    %66 = arith.addf %60, %65 : vector<16x128xf32>
    %67 = vector.extract_strided_slice %52 {offsets = [2, 0, 0], sizes = [1, 16, 32], strides = [1, 1, 1]} : vector<4x16x32xf32> to vector<1x16x32xf32>
    %68 = vector.shape_cast %67 : vector<1x16x32xf32> to vector<16x32xf32>
    %69 = arith.truncf %68 : vector<16x32xf32> to vector<16x32xbf16>
    %70 = vector.extract_strided_slice %53 {offsets = [64, 0], sizes = [32, 128], strides = [1, 1]} : vector<128x128xbf16> to vector<32x128xbf16>
    %cst_19 = arith.constant dense<0.000000e+00> : vector<16x128xf32>
    %71 = tpu.matmul %69, %70, %cst_19 {dimension_numbers = #tpu.dot_dimension_numbers<[1], [0], [0], [1], [0, 0, 1, 1], [], []>} : vector<16x32xbf16>, vector<32x128xbf16>, vector<16x128xf32> -> vector<16x128xf32>
    %72 = arith.addf %66, %71 : vector<16x128xf32>
    %73 = vector.extract_strided_slice %52 {offsets = [3, 0, 0], sizes = [1, 16, 32], strides = [1, 1, 1]} : vector<4x16x32xf32> to vector<1x16x32xf32>
    %74 = vector.shape_cast %73 : vector<1x16x32xf32> to vector<16x32xf32>
    %75 = arith.truncf %74 : vector<16x32xf32> to vector<16x32xbf16>
    %76 = vector.extract_strided_slice %53 {offsets = [96, 0], sizes = [32, 128], strides = [1, 1]} : vector<128x128xbf16> to vector<32x128xbf16>
    %cst_20 = arith.constant dense<0.000000e+00> : vector<16x128xf32>
    %77 = tpu.matmul %75, %76, %cst_20 {dimension_numbers = #tpu.dot_dimension_numbers<[1], [0], [0], [1], [0, 0, 1, 1], [], []>} : vector<16x32xbf16>, vector<32x128xbf16>, vector<16x128xf32> -> vector<16x128xf32>
    %78 = arith.addf %72, %77 : vector<16x128xf32>
    %c0_21 = arith.constant 0 : index
    %c0_22 = arith.constant 0 : index
    %79 = vector.load %arg6[%c0_21, %c0_22] : memref<1x128xf32, #tpu.memory_space<vmem>>, vector<1x128xf32>
    %80 = vector.broadcast %79 : vector<1x128xf32> to vector<16x128xf32>
    %81 = arith.addf %78, %80 : vector<16x128xf32>
    %82 = arith.extf %1 : vector<16x128xbf16> to vector<16x128xf32>
    %83 = arith.addf %81, %82 : vector<16x128xf32>
    %c0_23 = arith.constant 0 : index
    %c0_24 = arith.constant 0 : index
    %84 = vector.load %arg7[%c0_23, %c0_24] : memref<1x128xf32, #tpu.memory_space<vmem>>, vector<1x128xf32>
    %c0_25 = arith.constant 0 : index
    %c0_26 = arith.constant 0 : index
    %85 = vector.load %arg8[%c0_25, %c0_26] : memref<1x128xf32, #tpu.memory_space<vmem>>, vector<1x128xf32>
    %cst_27 = arith.constant dense<0.000000e+00> : vector<16xf32>
    %86 = vector.multi_reduction <add>, %83, %cst_27 [1] : vector<16x128xf32> to vector<16xf32>
    %87 = vector.shape_cast %86 : vector<16xf32> to vector<16x1xf32>
    %cst_28 = arith.constant 1.280000e+02 : f32
    %88 = vector.broadcast %cst_28 : f32 to vector<16x1xf32>
    %89 = arith.divf %87, %88 : vector<16x1xf32>
    %90 = arith.mulf %83, %83 : vector<16x128xf32>
    %cst_29 = arith.constant dense<0.000000e+00> : vector<16xf32>
    %91 = vector.multi_reduction <add>, %90, %cst_29 [1] : vector<16x128xf32> to vector<16xf32>
    %92 = vector.shape_cast %91 : vector<16xf32> to vector<16x1xf32>
    %cst_30 = arith.constant 1.280000e+02 : f32
    %93 = vector.broadcast %cst_30 : f32 to vector<16x1xf32>
    %94 = arith.divf %92, %93 : vector<16x1xf32>
    %95 = arith.mulf %89, %89 : vector<16x1xf32>
    %96 = arith.subf %94, %95 : vector<16x1xf32>
    %cst_31 = arith.constant 0.000000e+00 : f32
    %97 = vector.broadcast %cst_31 : f32 to vector<16x1xf32>
    %98 = arith.maximumf %96, %97 : vector<16x1xf32>
    %99 = vector.broadcast %89 : vector<16x1xf32> to vector<16x128xf32>
    %100 = arith.subf %83, %99 : vector<16x128xf32>
    %cst_32 = arith.constant 9.99999996E-13 : f32
    %101 = vector.broadcast %cst_32 : f32 to vector<16x1xf32>
    %102 = arith.addf %98, %101 : vector<16x1xf32>
    %103 = math.rsqrt %102 : vector<16x1xf32>
    %104 = vector.broadcast %103 : vector<16x1xf32> to vector<16x128xf32>
    %105 = arith.mulf %100, %104 : vector<16x128xf32>
    %106 = vector.broadcast %84 : vector<1x128xf32> to vector<16x128xf32>
    %107 = arith.mulf %105, %106 : vector<16x128xf32>
    %108 = vector.broadcast %85 : vector<1x128xf32> to vector<16x128xf32>
    %109 = arith.addf %107, %108 : vector<16x128xf32>
    %110 = arith.truncf %109 : vector<16x128xf32> to vector<16x128xbf16>
    %c0_33 = arith.constant 0 : index
    %c0_34 = arith.constant 0 : index
    %c0_35 = arith.constant 0 : index
    %111 = vector.load %arg9[%c0_33, %c0_34, %c0_35] : memref<1x16x128xbf16, #tpu.memory_space<vmem>>, vector<1x16x128xbf16>
    %112 = vector.shape_cast %111 : vector<1x16x128xbf16> to vector<16x128xbf16>
    %113 = vector.shape_cast %110 : vector<16x128xbf16> to vector<1x16x128xbf16>
    tpu.vector_store %arg9[%c0_33, %c0_34, %c0_35], %113 {strides = array<i32>} : memref<1x16x128xbf16, #tpu.memory_space<vmem>>, vector<1x16x128xbf16>,
    return
  }
  func.func @transform_0(%arg0: i32) -> (i32, i32, i32) {
    %c0_i32 = arith.constant 0 : i32
    %c0_i32_0 = arith.constant 0 : i32
    %c0_i32_1 = arith.constant 0 : i32
    return %arg0, %c0_i32, %c0_i32_0 : i32, i32, i32
  }
  func.func @transform_1(%arg0: i32) -> (i32, i32, i32) {
    %c0_i32 = arith.constant 0 : i32
    %c0_i32_0 = arith.constant 0 : i32
    %c0_i32_1 = arith.constant 0 : i32
    return %arg0, %c0_i32, %c0_i32_0 : i32, i32, i32
  }
  func.func @transform_2(%arg0: i32) -> (i32, i32) {
    %c0_i32 = arith.constant 0 : i32
    %c0_i32_0 = arith.constant 0 : i32
    %c0_i32_1 = arith.constant 0 : i32
    return %c0_i32, %c0_i32_0 : i32, i32
  }
  func.func @transform_3(%arg0: i32) -> (i32, i32) {
    %c0_i32 = arith.constant 0 : i32
    %c0_i32_0 = arith.constant 0 : i32
    %c0_i32_1 = arith.constant 0 : i32
    return %c0_i32, %c0_i32_0 : i32, i32
  }
  func.func @transform_4(%arg0: i32) -> (i32, i32) {
    %c0_i32 = arith.constant 0 : i32
    %c0_i32_0 = arith.constant 0 : i32
    %c0_i32_1 = arith.constant 0 : i32
    return %c0_i32, %c0_i32_0 : i32, i32
  }
  func.func @transform_5(%arg0: i32) -> (i32, i32) {
    %c0_i32 = arith.constant 0 : i32
    %c0_i32_0 = arith.constant 0 : i32
    %c0_i32_1 = arith.constant 0 : i32
    return %c0_i32, %c0_i32_0 : i32, i32
  }
  func.func @transform_6(%arg0: i32) -> (i32, i32) {
    %c0_i32 = arith.constant 0 : i32
    %c0_i32_0 = arith.constant 0 : i32
    %c0_i32_1 = arith.constant 0 : i32
    return %c0_i32, %c0_i32_0 : i32, i32
  }
  func.func @transform_7(%arg0: i32) -> (i32, i32) {
    %c0_i32 = arith.constant 0 : i32
    %c0_i32_0 = arith.constant 0 : i32
    %c0_i32_1 = arith.constant 0 : i32
    return %c0_i32, %c0_i32_0 : i32, i32
  }
  func.func @transform_8(%arg0: i32) -> (i32, i32, i32) {
    %c0_i32 = arith.constant 0 : i32
    %c0_i32_0 = arith.constant 0 : i32
    %c0_i32_1 = arith.constant 0 : i32
    return %arg0, %c0_i32, %c0_i32_0 : i32, i32, i32
  }
}

module attributes {stable_mosaic.version = 11 : i64} {
  func.func @_attn_block_kernel(%arg0: i32, %arg1: memref<1x16x128xbf16, #tpu.memory_space<vmem>>, %arg2: memref<1x1x16xf32, #tpu.memory_space<vmem>>, %arg3: memref<128x384xbf16, #tpu.memory_space<vmem>>, %arg4: memref<1x384xf32, #tpu.memory_space<vmem>>, %arg5: memref<128x128xbf16, #tpu.memory_space<vmem>>, %arg6: memref<1x128xf32, #tpu.memory_space<vmem>>, %arg7: memref<1x128xf32, #tpu.memory_space<vmem>>, %arg8: memref<1x128xf32, #tpu.memory_space<vmem>>, %arg9: memref<1x16x128xbf16, #tpu.memory_space<vmem>>) attributes {dimension_semantics = [#tpu.dimension_semantics<parallel>], iteration_bounds = array<i64: 2>, scalar_prefetch = 0 : i64, scratch_operands = 0 : i64, tpu.core_type = #tpu.core_type<tc>, window_params = [{transform_indices = @transform_0, window_bounds = array<i64: 1, 16, 128>}, {transform_indices = @transform_1, window_bounds = array<i64: 1, 1, 16>}, {pipeline_mode = #tpu.pipeline_mode<synchronous>, transform_indices = @transform_2, window_bounds = array<i64: 128, 384>}, {pipeline_mode = #tpu.pipeline_mode<synchronous>, transform_indices = @transform_3, window_bounds = array<i64: 1, 384>}, {pipeline_mode = #tpu.pipeline_mode<synchronous>, transform_indices = @transform_4, window_bounds = array<i64: 128, 128>}, {pipeline_mode = #tpu.pipeline_mode<synchronous>, transform_indices = @transform_5, window_bounds = array<i64: 1, 128>}, {pipeline_mode = #tpu.pipeline_mode<synchronous>, transform_indices = @transform_6, window_bounds = array<i64: 1, 128>}, {pipeline_mode = #tpu.pipeline_mode<synchronous>, transform_indices = @transform_7, window_bounds = array<i64: 1, 128>}, {transform_indices = @transform_8, window_bounds = array<i64: 1, 16, 128>}]} {
    %c0 = arith.constant 0 : index
    %c0_0 = arith.constant 0 : index
    %c0_1 = arith.constant 0 : index
    %0 = vector.load %arg1[%c0, %c0_0, %c0_1] : memref<1x16x128xbf16, #tpu.memory_space<vmem>>, vector<1x16x128xbf16>
    %1 = vector.shape_cast %0 : vector<1x16x128xbf16> to vector<16x128xbf16>
    %c0_2 = arith.constant 0 : index
    %c0_3 = arith.constant 0 : index
    %c0_4 = arith.constant 0 : index
    %2 = vector.load %arg2[%c0_2, %c0_3, %c0_4] : memref<1x1x16xf32, #tpu.memory_space<vmem>>, vector<1x1x16xf32>
    %c0_5 = arith.constant 0 : index
    %c0_6 = arith.constant 0 : index
    %3 = vector.load %arg3[%c0_5, %c0_6] : memref<128x384xbf16, #tpu.memory_space<vmem>>, vector<128x384xbf16>
    %cst = arith.constant dense<0.000000e+00> : vector<16x384xf32>
    %4 = tpu.matmul %1, %3, %cst {dimension_numbers = #tpu.dot_dimension_numbers<[1], [0], [0], [1], [0, 0, 1, 1], [], []>} : vector<16x128xbf16>, vector<128x384xbf16>, vector<16x384xf32> -> vector<16x384xf32>
    %c0_7 = arith.constant 0 : index
    %c0_8 = arith.constant 0 : index
    %5 = vector.load %arg4[%c0_7, %c0_8] : memref<1x384xf32, #tpu.memory_space<vmem>>, vector<1x384xf32>
    %6 = vector.broadcast %5 : vector<1x384xf32> to vector<16x384xf32>
    %7 = arith.addf %4, %6 : vector<16x384xf32>
    %8 = arith.truncf %7 : vector<16x384xf32> to vector<16x384xbf16>
    %9 = vector.extract_strided_slice %8 {offsets = [0, 0], sizes = [16, 32], strides = [1, 1]} : vector<16x384xbf16> to vector<16x32xbf16>
    %10 = vector.extract_strided_slice %8 {offsets = [0, 32], sizes = [16, 32], strides = [1, 1]} : vector<16x384xbf16> to vector<16x32xbf16>
    %11 = vector.extract_strided_slice %8 {offsets = [0, 64], sizes = [16, 32], strides = [1, 1]} : vector<16x384xbf16> to vector<16x32xbf16>
    %12 = vector.extract_strided_slice %8 {offsets = [0, 96], sizes = [16, 32], strides = [1, 1]} : vector<16x384xbf16> to vector<16x32xbf16>
    %13 = vector.shape_cast %9 : vector<16x32xbf16> to vector<1x16x32xbf16>
    %14 = vector.shape_cast %10 : vector<16x32xbf16> to vector<1x16x32xbf16>
    %15 = vector.shape_cast %11 : vector<16x32xbf16> to vector<1x16x32xbf16>
    %16 = vector.shape_cast %12 : vector<16x32xbf16> to vector<1x16x32xbf16>
    %17 = tpu.concatenate %13, %14, %15, %16 in 0 : vector<1x16x32xbf16>, vector<1x16x32xbf16>, vector<1x16x32xbf16>, vector<1x16x32xbf16> -> vector<4x16x32xbf16>
    %18 = vector.extract_strided_slice %8 {offsets = [0, 128], sizes = [16, 32], strides = [1, 1]} : vector<16x384xbf16> to vector<16x32xbf16>
    %19 = vector.extract_strided_slice %8 {offsets = [0, 160], sizes = [16, 32], strides = [1, 1]} : vector<16x384xbf16> to vector<16x32xbf16>
    %20 = vector.extract_strided_slice %8 {offsets = [0, 192], sizes = [16, 32], strides = [1, 1]} : vector<16x384xbf16> to vector<16x32xbf16>
    %21 = vector.extract_strided_slice %8 {offsets = [0, 224], sizes = [16, 32], strides = [1, 1]} : vector<16x384xbf16> to vector<16x32xbf16>
    %22 = vector.shape_cast %18 : vector<16x32xbf16> to vector<1x16x32xbf16>
    %23 = vector.shape_cast %19 : vector<16x32xbf16> to vector<1x16x32xbf16>
    %24 = vector.shape_cast %20 : vector<16x32xbf16> to vector<1x16x32xbf16>
    %25 = vector.shape_cast %21 : vector<16x32xbf16> to vector<1x16x32xbf16>
    %26 = tpu.concatenate %22, %23, %24, %25 in 0 : vector<1x16x32xbf16>, vector<1x16x32xbf16>, vector<1x16x32xbf16>, vector<1x16x32xbf16> -> vector<4x16x32xbf16>
    %27 = vector.extract_strided_slice %8 {offsets = [0, 256], sizes = [16, 32], strides = [1, 1]} : vector<16x384xbf16> to vector<16x32xbf16>
    %28 = vector.extract_strided_slice %8 {offsets = [0, 288], sizes = [16, 32], strides = [1, 1]} : vector<16x384xbf16> to vector<16x32xbf16>
    %29 = vector.extract_strided_slice %8 {offsets = [0, 320], sizes = [16, 32], strides = [1, 1]} : vector<16x384xbf16> to vector<16x32xbf16>
    %30 = vector.extract_strided_slice %8 {offsets = [0, 352], sizes = [16, 32], strides = [1, 1]} : vector<16x384xbf16> to vector<16x32xbf16>
    %31 = vector.shape_cast %27 : vector<16x32xbf16> to vector<1x16x32xbf16>
    %32 = vector.shape_cast %28 : vector<16x32xbf16> to vector<1x16x32xbf16>
    %33 = vector.shape_cast %29 : vector<16x32xbf16> to vector<1x16x32xbf16>
    %34 = vector.shape_cast %30 : vector<16x32xbf16> to vector<1x16x32xbf16>
    %35 = tpu.concatenate %31, %32, %33, %34 in 0 : vector<1x16x32xbf16>, vector<1x16x32xbf16>, vector<1x16x32xbf16>, vector<1x16x32xbf16> -> vector<4x16x32xbf16>
    "tpu.trace_start"() <{level = 10 : i32, message = "hqd,hkd->hqk"}> : () -> ()
    %cst_9 = arith.constant dense<0.000000e+00> : vector<4x16x16xf32>
    %36 = tpu.matmul %17, %26, %cst_9 {dimension_numbers = #tpu.dot_dimension_numbers<[2], [2], [1], [1], [0, 0, 0, 1, 1, 1], [0], [0]>} : vector<4x16x32xbf16>, vector<4x16x32xbf16>, vector<4x16x16xf32> -> vector<4x16x16xf32>
    "tpu.trace_stop"() : () -> ()
    %cst_10 = arith.constant 0.176776692 : f32
    %37 = vector.broadcast %cst_10 : f32 to vector<4x16x16xf32>
    %38 = arith.mulf %36, %37 : vector<4x16x16xf32>
    %39 = vector.broadcast %2 : vector<1x1x16xf32> to vector<4x16x16xf32>
    %40 = arith.addf %38, %39 : vector<4x16x16xf32>
    %cst_11 = arith.constant dense<0xFF800000> : vector<4x16xf32>
    %41 = vector.multi_reduction <maximumf>, %40, %cst_11 [2] : vector<4x16x16xf32> to vector<4x16xf32>
    %42 = vector.shape_cast %41 : vector<4x16xf32> to vector<4x16x1xf32>
    %43 = vector.broadcast %42 : vector<4x16x1xf32> to vector<4x16x16xf32>
    %44 = arith.subf %40, %43 : vector<4x16x16xf32>
    %45 = math.exp %44 : vector<4x16x16xf32>
    %cst_12 = arith.constant dense<0.000000e+00> : vector<4x16xf32>
    %46 = vector.multi_reduction <add>, %45, %cst_12 [2] : vector<4x16x16xf32> to vector<4x16xf32>
    %47 = vector.shape_cast %46 : vector<4x16xf32> to vector<4x16x1xf32>
    %48 = tpu.reciprocal %47 {approx = true} : vector<4x16x1xf32> -> vector<4x16x1xf32>
    %49 = vector.broadcast %48 : vector<4x16x1xf32> to vector<4x16x16xf32>
    %50 = arith.mulf %45, %49 : vector<4x16x16xf32>
    %51 = arith.truncf %50 : vector<4x16x16xf32> to vector<4x16x16xbf16>
    "tpu.trace_start"() <{level = 10 : i32, message = "hqk,hkd->hqd"}> : () -> ()
    %cst_13 = arith.constant dense<0.000000e+00> : vector<4x16x32xf32>
    %52 = tpu.matmul %51, %35, %cst_13 {dimension_numbers = #tpu.dot_dimension_numbers<[2], [1], [1], [2], [0, 0, 0, 1, 1, 2], [0], [0]>} : vector<4x16x16xbf16>, vector<4x16x32xbf16>, vector<4x16x32xf32> -> vector<4x16x32xf32>
    "tpu.trace_stop"() : () -> ()
    %c0_14 = arith.constant 0 : index
    %c0_15 = arith.constant 0 : index
    %53 = vector.load %arg5[%c0_14, %c0_15] : memref<128x128xbf16, #tpu.memory_space<vmem>>, vector<128x128xbf16>
    %cst_16 = arith.constant 0.000000e+00 : f32
    %54 = vector.broadcast %cst_16 : f32 to vector<16x128xf32>
    %55 = vector.extract_strided_slice %52 {offsets = [0, 0, 0], sizes = [1, 16, 32], strides = [1, 1, 1]} : vector<4x16x32xf32> to vector<1x16x32xf32>
    %56 = vector.shape_cast %55 : vector<1x16x32xf32> to vector<16x32xf32>
    %57 = arith.truncf %56 : vector<16x32xf32> to vector<16x32xbf16>
    %58 = vector.extract_strided_slice %53 {offsets = [0, 0], sizes = [32, 128], strides = [1, 1]} : vector<128x128xbf16> to vector<32x128xbf16>
    %cst_17 = arith.constant dense<0.000000e+00> : vector<16x128xf32>
    %59 = tpu.matmul %57, %58, %cst_17 {dimension_numbers = #tpu.dot_dimension_numbers<[1], [0], [0], [1], [0, 0, 1, 1], [], []>} : vector<16x32xbf16>, vector<32x128xbf16>, vector<16x128xf32> -> vector<16x128xf32>
    %60 = arith.addf %54, %59 : vector<16x128xf32>
    %61 = vector.extract_strided_slice %52 {offsets = [1, 0, 0], sizes = [1, 16, 32], strides = [1, 1, 1]} : vector<4x16x32xf32> to vector<1x16x32xf32>
    %62 = vector.shape_cast %61 : vector<1x16x32xf32> to vector<16x32xf32>
    %63 = arith.truncf %62 : vector<16x32xf32> to vector<16x32xbf16>
    %64 = vector.extract_strided_slice %53 {offsets = [32, 0], sizes = [32, 128], strides = [1, 1]} : vector<128x128xbf16> to vector<32x128xbf16>
    %cst_18 = arith.constant dense<0.000000e+00> : vector<16x128xf32>
    %65 = tpu.matmul %63, %64, %cst_18 {dimension_numbers = #tpu.dot_dimension_numbers<[1], [0], [0], [1], [0, 0, 1, 1], [], []>} : vector<16x32xbf16>, vector<32x128xbf16>, vector<16x128xf32> -> vector<16x128xf32>
    %66 = arith.addf %60, %65 : vector<16x128xf32>
    %67 = vector.extract_strided_slice %52 {offsets = [2, 0, 0], sizes = [1, 16, 32], strides = [1, 1, 1]} : vector<4x16x32xf32> to vector<1x16x32xf32>
    %68 = vector.shape_cast %67 : vector<1x16x32xf32> to vector<16x32xf32>
    %69 = arith.truncf %68 : vector<16x32xf32> to vector<16x32xbf16>
    %70 = vector.extract_strided_slice %53 {offsets = [64, 0], sizes = [32, 128], strides = [1, 1]} : vector<128x128xbf16> to vector<32x128xbf16>
    %cst_19 = arith.constant dense<0.000000e+00> : vector<16x128xf32>
    %71 = tpu.matmul %69, %70, %cst_19 {dimension_numbers = #tpu.dot_dimension_numbers<[1], [0], [0], [1], [0, 0, 1, 1], [], []>} : vector<16x32xbf16>, vector<32x128xbf16>, vector<16x128xf32> -> vector<16x128xf32>
    %72 = arith.addf %66, %71 : vector<16x128xf32>
    %73 = vector.extract_strided_slice %52 {offsets = [3, 0, 0], sizes = [1, 16, 32], strides = [1, 1, 1]} : vector<4x16x32xf32> to vector<1x16x32xf32>
    %74 = vector.shape_cast %73 : vector<1x16x32xf32> to vector<16x32xf32>
    %75 = arith.truncf %74 : vector<16x32xf32> to vector<16x32xbf16>
    %76 = vector.extract_strided_slice %53 {offsets = [96, 0], sizes = [32, 128], strides = [1, 1]} : vector<128x128xbf16> to vector<32x128xbf16>
    %cst_20 = arith.constant dense<0.000000e+00> : vector<16x128xf32>
    %77 = tpu.matmul %75, %76, %cst_20 {dimension_numbers = #tpu.dot_dimension_numbers<[1], [0], [0], [1], [0, 0, 1, 1], [], []>} : vector<16x32xbf16>, vector<32x128xbf16>, vector<16x128xf32> -> vector<16x128xf32>
    %78 = arith.addf %72, %77 : vector<16x128xf32>
    %c0_21 = arith.constant 0 : index
    %c0_22 = arith.constant 0 : index
    %79 = vector.load %arg6[%c0_21, %c0_22] : memref<1x128xf32, #tpu.memory_space<vmem>>, vector<1x128xf32>
    %80 = vector.broadcast %79 : vector<1x128xf32> to vector<16x128xf32>
    %81 = arith.addf %78, %80 : vector<16x128xf32>
    %82 = arith.extf %1 : vector<16x128xbf16> to vector<16x128xf32>
    %83 = arith.addf %81, %82 : vector<16x128xf32>
    %c0_23 = arith.constant 0 : index
    %c0_24 = arith.constant 0 : index
    %84 = vector.load %arg7[%c0_23, %c0_24] : memref<1x128xf32, #tpu.memory_space<vmem>>, vector<1x128xf32>
    %c0_25 = arith.constant 0 : index
    %c0_26 = arith.constant 0 : index
    %85 = vector.load %arg8[%c0_25, %c0_26] : memref<1x128xf32, #tpu.memory_space<vmem>>, vector<1x128xf32>
    %cst_27 = arith.constant dense<0.000000e+00> : vector<16xf32>
    %86 = vector.multi_reduction <add>, %83, %cst_27 [1] : vector<16x128xf32> to vector<16xf32>
    %87 = vector.shape_cast %86 : vector<16xf32> to vector<16x1xf32>
    %cst_28 = arith.constant 1.280000e+02 : f32
    %88 = vector.broadcast %cst_28 : f32 to vector<16x1xf32>
    %89 = arith.divf %87, %88 : vector<16x1xf32>
    %90 = arith.mulf %83, %83 : vector<16x128xf32>
    %cst_29 = arith.constant dense<0.000000e+00> : vector<16xf32>
    %91 = vector.multi_reduction <add>, %90, %cst_29 [1] : vector<16x128xf32> to vector<16xf32>
    %92 = vector.shape_cast %91 : vector<16xf32> to vector<16x1xf32>
    %cst_30 = arith.constant 1.280000e+02 : f32
    %93 = vector.broadcast %cst_30 : f32 to vector<16x1xf32>
    %94 = arith.divf %92, %93 : vector<16x1xf32>
    %95 = arith.mulf %89, %89 : vector<16x1xf32>
    %96 = arith.subf %94, %95 : vector<16x1xf32>
    %cst_31 = arith.constant 0.000000e+00 : f32
    %97 = vector.broadcast %cst_31 : f32 to vector<16x1xf32>
    %98 = arith.maximumf %96, %97 : vector<16x1xf32>
    %99 = vector.broadcast %89 : vector<16x1xf32> to vector<16x128xf32>
    %100 = arith.subf %83, %99 : vector<16x128xf32>
    %cst_32 = arith.constant 9.99999996E-13 : f32
    %101 = vector.broadcast %cst_32 : f32 to vector<16x1xf32>
    %102 = arith.addf %98, %101 : vector<16x1xf32>
    %103 = math.rsqrt %102 : vector<16x1xf32>
    %104 = vector.broadcast %103 : vector<16x1xf32> to vector<16x128xf32>
    %105 = arith.mulf %100, %104 : vector<16x128xf32>
    %106 = vector.broadcast %84 : vector<1x128xf32> to vector<16x128xf32>
    %107 = arith.mulf %105, %106 : vector<16x128xf32>
    %108 = vector.broadcast %85 : vector<1x128xf32> to vector<16x128xf32>
    %109 = arith.addf %107, %108 : vector<16x128xf32>
    %110 = arith.truncf %109 : vector<16x128xf32> to vector<16x128xbf16>
    %c0_33 = arith.constant 0 : index
    %c0_34 = arith.constant 0 : index
    %c0_35 = arith.constant 0 : index
    %111 = vector.load %arg9[%c0_33, %c0_34, %c0_35] : memref<1x16x128xbf16, #tpu.memory_space<vmem>>, vector<1x16x128xbf16>
    %112 = vector.shape_cast %111 : vector<1x16x128xbf16> to vector<16x128xbf16>
    %113 = vector.shape_cast %110 : vector<16x128xbf16> to vector<1x16x128xbf16>
    tpu.vector_store %arg9[%c0_33, %c0_34, %c0_35], %113 {strides = array<i32>} : memref<1x16x128xbf16, #tpu.memory_space<vmem>>, vector<1x16x128xbf16>,
    return
  }
  func.func @transform_0(%arg0: i32) -> (i32, i32, i32) {
    %c0_i32 = arith.constant 0 : i32
    %c0_i32_0 = arith.constant 0 : i32
    %c0_i32_1 = arith.constant 0 : i32
    return %arg0, %c0_i32, %c0_i32_0 : i32, i32, i32
  }
  func.func @transform_1(%arg0: i32) -> (i32, i32, i32) {
    %c0_i32 = arith.constant 0 : i32
    %c0_i32_0 = arith.constant 0 : i32
    %c0_i32_1 = arith.constant 0 : i32
    return %arg0, %c0_i32, %c0_i32_0 : i32, i32, i32
  }
  func.func @transform_2(%arg0: i32) -> (i32, i32) {
    %c0_i32 = arith.constant 0 : i32
    %c0_i32_0 = arith.constant 0 : i32
    %c0_i32_1 = arith.constant 0 : i32
    return %c0_i32, %c0_i32_0 : i32, i32
  }
  func.func @transform_3(%arg0: i32) -> (i32, i32) {
    %c0_i32 = arith.constant 0 : i32
    %c0_i32_0 = arith.constant 0 : i32
    %c0_i32_1 = arith.constant 0 : i32
    return %c0_i32, %c0_i32_0 : i32, i32
  }
  func.func @transform_4(%arg0: i32) -> (i32, i32) {
    %c0_i32 = arith.constant 0 : i32
    %c0_i32_0 = arith.constant 0 : i32
    %c0_i32_1 = arith.constant 0 : i32
    return %c0_i32, %c0_i32_0 : i32, i32
  }
  func.func @transform_5(%arg0: i32) -> (i32, i32) {
    %c0_i32 = arith.constant 0 : i32
    %c0_i32_0 = arith.constant 0 : i32
    %c0_i32_1 = arith.constant 0 : i32
    return %c0_i32, %c0_i32_0 : i32, i32
  }
  func.func @transform_6(%arg0: i32) -> (i32, i32) {
    %c0_i32 = arith.constant 0 : i32
    %c0_i32_0 = arith.constant 0 : i32
    %c0_i32_1 = arith.constant 0 : i32
    return %c0_i32, %c0_i32_0 : i32, i32
  }
  func.func @transform_7(%arg0: i32) -> (i32, i32) {
    %c0_i32 = arith.constant 0 : i32
    %c0_i32_0 = arith.constant 0 : i32
    %c0_i32_1 = arith.constant 0 : i32
    return %c0_i32, %c0_i32_0 : i32, i32
  }
  func.func @transform_8(%arg0: i32) -> (i32, i32, i32) {
    %c0_i32 = arith.constant 0 : i32
    %c0_i32_0 = arith.constant 0 : i32
    %c0_i32_1 = arith.constant 0 : i32
    return %arg0, %c0_i32, %c0_i32_0 : i32, i32, i32
  }
}

module attributes {stable_mosaic.version = 11 : i64} {
  func.func @_ffn_kernel(%arg0: i32, %arg1: memref<16x128xbf16, #tpu.memory_space<vmem>>, %arg2: memref<128x512xbf16, #tpu.memory_space<vmem>>, %arg3: memref<1x512xf32, #tpu.memory_space<vmem>>, %arg4: memref<512x128xbf16, #tpu.memory_space<vmem>>, %arg5: memref<1x128xf32, #tpu.memory_space<vmem>>, %arg6: memref<1x128xf32, #tpu.memory_space<vmem>>, %arg7: memref<1x128xf32, #tpu.memory_space<vmem>>, %arg8: memref<16x128xbf16, #tpu.memory_space<vmem>>) attributes {dimension_semantics = [#tpu.dimension_semantics<parallel>], iteration_bounds = array<i64: 2>, scalar_prefetch = 0 : i64, scratch_operands = 0 : i64, tpu.core_type = #tpu.core_type<tc>, window_params = [{transform_indices = @transform_0, window_bounds = array<i64: 16, 128>}, {pipeline_mode = #tpu.pipeline_mode<synchronous>, transform_indices = @transform_1, window_bounds = array<i64: 128, 512>}, {pipeline_mode = #tpu.pipeline_mode<synchronous>, transform_indices = @transform_2, window_bounds = array<i64: 1, 512>}, {pipeline_mode = #tpu.pipeline_mode<synchronous>, transform_indices = @transform_3, window_bounds = array<i64: 512, 128>}, {pipeline_mode = #tpu.pipeline_mode<synchronous>, transform_indices = @transform_4, window_bounds = array<i64: 1, 128>}, {pipeline_mode = #tpu.pipeline_mode<synchronous>, transform_indices = @transform_5, window_bounds = array<i64: 1, 128>}, {pipeline_mode = #tpu.pipeline_mode<synchronous>, transform_indices = @transform_6, window_bounds = array<i64: 1, 128>}, {transform_indices = @transform_7, window_bounds = array<i64: 16, 128>}]} {
    %c0 = arith.constant 0 : index
    %c0_0 = arith.constant 0 : index
    %0 = vector.load %arg1[%c0, %c0_0] : memref<16x128xbf16, #tpu.memory_space<vmem>>, vector<16x128xbf16>
    %c0_1 = arith.constant 0 : index
    %c0_2 = arith.constant 0 : index
    %1 = vector.load %arg2[%c0_1, %c0_2] : memref<128x512xbf16, #tpu.memory_space<vmem>>, vector<128x512xbf16>
    %cst = arith.constant dense<0.000000e+00> : vector<16x512xf32>
    %2 = tpu.matmul %0, %1, %cst {dimension_numbers = #tpu.dot_dimension_numbers<[1], [0], [0], [1], [0, 0, 1, 1], [], []>} : vector<16x128xbf16>, vector<128x512xbf16>, vector<16x512xf32> -> vector<16x512xf32>
    %c0_3 = arith.constant 0 : index
    %c0_4 = arith.constant 0 : index
    %3 = vector.load %arg3[%c0_3, %c0_4] : memref<1x512xf32, #tpu.memory_space<vmem>>, vector<1x512xf32>
    %4 = vector.broadcast %3 : vector<1x512xf32> to vector<16x512xf32>
    %5 = arith.addf %2, %4 : vector<16x512xf32>
    %cst_5 = arith.constant 5.000000e-01 : f32
    %6 = vector.broadcast %cst_5 : f32 to vector<16x512xf32>
    %7 = arith.mulf %6, %5 : vector<16x512xf32>
    %cst_6 = arith.constant 0.707106769 : f32
    %8 = vector.broadcast %cst_6 : f32 to vector<16x512xf32>
    %9 = arith.mulf %5, %8 : vector<16x512xf32>
    %cst_7 = arith.constant 0.000000e+00 : f32
    %10 = vector.broadcast %cst_7 : f32 to vector<16x512xf32>
    %11 = arith.cmpf oge, %9, %10 : vector<16x512xf32>
    %cst_8 = arith.constant 1.000000e+00 : f32
    %cst_9 = arith.constant -1.000000e+00 : f32
    %12 = vector.broadcast %cst_8 : f32 to vector<16x512xf32>
    %13 = vector.broadcast %cst_9 : f32 to vector<16x512xf32>
    %14 = arith.select %11, %12, %13 : vector<16x512xi1>, vector<16x512xf32>
    %15 = math.absf %9 : vector<16x512xf32>
    %cst_10 = arith.constant 0.327591091 : f32
    %16 = vector.broadcast %cst_10 : f32 to vector<16x512xf32>
    %17 = arith.mulf %16, %15 : vector<16x512xf32>
    %cst_11 = arith.constant 1.000000e+00 : f32
    %18 = vector.broadcast %cst_11 : f32 to vector<16x512xf32>
    %19 = arith.addf %18, %17 : vector<16x512xf32>
    %cst_12 = arith.constant 1.000000e+00 : f32
    %20 = vector.broadcast %cst_12 : f32 to vector<16x512xf32>
    %21 = arith.divf %20, %19 : vector<16x512xf32>
    %cst_13 = arith.constant 1.06140542 : f32
    %22 = vector.broadcast %cst_13 : f32 to vector<16x512xf32>
    %23 = arith.mulf %22, %21 : vector<16x512xf32>
    %cst_14 = arith.constant -1.45315206 : f32
    %24 = vector.broadcast %cst_14 : f32 to vector<16x512xf32>
    %25 = arith.addf %23, %24 : vector<16x512xf32>
    %26 = arith.mulf %25, %21 : vector<16x512xf32>
    %cst_15 = arith.constant 1.42141378 : f32
    %27 = vector.broadcast %cst_15 : f32 to vector<16x512xf32>
    %28 = arith.addf %26, %27 : vector<16x512xf32>
    %29 = arith.mulf %28, %21 : vector<16x512xf32>
    %cst_16 = arith.constant -0.284496725 : f32
    %30 = vector.broadcast %cst_16 : f32 to vector<16x512xf32>
    %31 = arith.addf %29, %30 : vector<16x512xf32>
    %32 = arith.mulf %31, %21 : vector<16x512xf32>
    %cst_17 = arith.constant 0.254829586 : f32
    %33 = vector.broadcast %cst_17 : f32 to vector<16x512xf32>
    %34 = arith.addf %32, %33 : vector<16x512xf32>
    %35 = arith.mulf %34, %21 : vector<16x512xf32>
    %cst_18 = arith.constant 0.000000e+00 : f32
    %36 = vector.broadcast %cst_18 : f32 to vector<16x512xf32>
    %37 = arith.subf %36, %15 : vector<16x512xf32>
    %38 = arith.mulf %37, %15 : vector<16x512xf32>
    %39 = math.exp %38 : vector<16x512xf32>
    %40 = arith.mulf %35, %39 : vector<16x512xf32>
    %cst_19 = arith.constant 1.000000e+00 : f32
    %41 = vector.broadcast %cst_19 : f32 to vector<16x512xf32>
    %42 = arith.subf %41, %40 : vector<16x512xf32>
    %43 = arith.mulf %14, %42 : vector<16x512xf32>
    %cst_20 = arith.constant 1.000000e+00 : f32
    %44 = vector.broadcast %cst_20 : f32 to vector<16x512xf32>
    %45 = arith.addf %44, %43 : vector<16x512xf32>
    %46 = arith.mulf %7, %45 : vector<16x512xf32>
    %47 = arith.truncf %46 : vector<16x512xf32> to vector<16x512xbf16>
    %c0_21 = arith.constant 0 : index
    %c0_22 = arith.constant 0 : index
    %48 = vector.load %arg4[%c0_21, %c0_22] : memref<512x128xbf16, #tpu.memory_space<vmem>>, vector<512x128xbf16>
    %cst_23 = arith.constant dense<0.000000e+00> : vector<16x128xf32>
    %49 = tpu.matmul %47, %48, %cst_23 {dimension_numbers = #tpu.dot_dimension_numbers<[1], [0], [0], [1], [0, 0, 1, 1], [], []>} : vector<16x512xbf16>, vector<512x128xbf16>, vector<16x128xf32> -> vector<16x128xf32>
    %c0_24 = arith.constant 0 : index
    %c0_25 = arith.constant 0 : index
    %50 = vector.load %arg5[%c0_24, %c0_25] : memref<1x128xf32, #tpu.memory_space<vmem>>, vector<1x128xf32>
    %51 = vector.broadcast %50 : vector<1x128xf32> to vector<16x128xf32>
    %52 = arith.addf %49, %51 : vector<16x128xf32>
    %53 = arith.extf %0 : vector<16x128xbf16> to vector<16x128xf32>
    %54 = arith.addf %52, %53 : vector<16x128xf32>
    %c0_26 = arith.constant 0 : index
    %c0_27 = arith.constant 0 : index
    %55 = vector.load %arg6[%c0_26, %c0_27] : memref<1x128xf32, #tpu.memory_space<vmem>>, vector<1x128xf32>
    %c0_28 = arith.constant 0 : index
    %c0_29 = arith.constant 0 : index
    %56 = vector.load %arg7[%c0_28, %c0_29] : memref<1x128xf32, #tpu.memory_space<vmem>>, vector<1x128xf32>
    %cst_30 = arith.constant dense<0.000000e+00> : vector<16xf32>
    %57 = vector.multi_reduction <add>, %54, %cst_30 [1] : vector<16x128xf32> to vector<16xf32>
    %58 = vector.shape_cast %57 : vector<16xf32> to vector<16x1xf32>
    %cst_31 = arith.constant 1.280000e+02 : f32
    %59 = vector.broadcast %cst_31 : f32 to vector<16x1xf32>
    %60 = arith.divf %58, %59 : vector<16x1xf32>
    %61 = arith.mulf %54, %54 : vector<16x128xf32>
    %cst_32 = arith.constant dense<0.000000e+00> : vector<16xf32>
    %62 = vector.multi_reduction <add>, %61, %cst_32 [1] : vector<16x128xf32> to vector<16xf32>
    %63 = vector.shape_cast %62 : vector<16xf32> to vector<16x1xf32>
    %cst_33 = arith.constant 1.280000e+02 : f32
    %64 = vector.broadcast %cst_33 : f32 to vector<16x1xf32>
    %65 = arith.divf %63, %64 : vector<16x1xf32>
    %66 = arith.mulf %60, %60 : vector<16x1xf32>
    %67 = arith.subf %65, %66 : vector<16x1xf32>
    %cst_34 = arith.constant 0.000000e+00 : f32
    %68 = vector.broadcast %cst_34 : f32 to vector<16x1xf32>
    %69 = arith.maximumf %67, %68 : vector<16x1xf32>
    %70 = vector.broadcast %60 : vector<16x1xf32> to vector<16x128xf32>
    %71 = arith.subf %54, %70 : vector<16x128xf32>
    %cst_35 = arith.constant 9.99999996E-13 : f32
    %72 = vector.broadcast %cst_35 : f32 to vector<16x1xf32>
    %73 = arith.addf %69, %72 : vector<16x1xf32>
    %74 = math.rsqrt %73 : vector<16x1xf32>
    %75 = vector.broadcast %74 : vector<16x1xf32> to vector<16x128xf32>
    %76 = arith.mulf %71, %75 : vector<16x128xf32>
    %77 = vector.broadcast %55 : vector<1x128xf32> to vector<16x128xf32>
    %78 = arith.mulf %76, %77 : vector<16x128xf32>
    %79 = vector.broadcast %56 : vector<1x128xf32> to vector<16x128xf32>
    %80 = arith.addf %78, %79 : vector<16x128xf32>
    %81 = arith.truncf %80 : vector<16x128xf32> to vector<16x128xbf16>
    %c0_36 = arith.constant 0 : index
    %c0_37 = arith.constant 0 : index
    %82 = vector.load %arg8[%c0_36, %c0_37] : memref<16x128xbf16, #tpu.memory_space<vmem>>, vector<16x128xbf16>
    tpu.vector_store %arg8[%c0_36, %c0_37], %81 {strides = array<i32>} : memref<16x128xbf16, #tpu.memory_space<vmem>>, vector<16x128xbf16>,
    return
  }
  func.func @transform_0(%arg0: i32) -> (i32, i32) {
    %c0_i32 = arith.constant 0 : i32
    %c0_i32_0 = arith.constant 0 : i32
    return %arg0, %c0_i32 : i32, i32
  }
  func.func @transform_1(%arg0: i32) -> (i32, i32) {
    %c0_i32 = arith.constant 0 : i32
    %c0_i32_0 = arith.constant 0 : i32
    %c0_i32_1 = arith.constant 0 : i32
    return %c0_i32, %c0_i32_0 : i32, i32
  }
  func.func @transform_2(%arg0: i32) -> (i32, i32) {
    %c0_i32 = arith.constant 0 : i32
    %c0_i32_0 = arith.constant 0 : i32
    %c0_i32_1 = arith.constant 0 : i32
    return %c0_i32, %c0_i32_0 : i32, i32
  }
  func.func @transform_3(%arg0: i32) -> (i32, i32) {
    %c0_i32 = arith.constant 0 : i32
    %c0_i32_0 = arith.constant 0 : i32
    %c0_i32_1 = arith.constant 0 : i32
    return %c0_i32, %c0_i32_0 : i32, i32
  }
  func.func @transform_4(%arg0: i32) -> (i32, i32) {
    %c0_i32 = arith.constant 0 : i32
    %c0_i32_0 = arith.constant 0 : i32
    %c0_i32_1 = arith.constant 0 : i32
    return %c0_i32, %c0_i32_0 : i32, i32
  }
  func.func @transform_5(%arg0: i32) -> (i32, i32) {
    %c0_i32 = arith.constant 0 : i32
    %c0_i32_0 = arith.constant 0 : i32
    %c0_i32_1 = arith.constant 0 : i32
    return %c0_i32, %c0_i32_0 : i32, i32
  }
  func.func @transform_6(%arg0: i32) -> (i32, i32) {
    %c0_i32 = arith.constant 0 : i32
    %c0_i32_0 = arith.constant 0 : i32
    %c0_i32_1 = arith.constant 0 : i32
    return %c0_i32, %c0_i32_0 : i32, i32
  }
  func.func @transform_7(%arg0: i32) -> (i32, i32) {
    %c0_i32 = arith.constant 0 : i32
    %c0_i32_0 = arith.constant 0 : i32
    return %arg0, %c0_i32 : i32, i32
  }
}

module attributes {stable_mosaic.version = 11 : i64} {
  func.func @_pool_head_kernel(%arg0: i32, %arg1: memref<2x128xbf16, #tpu.memory_space<vmem>>, %arg2: memref<128x128xbf16, #tpu.memory_space<vmem>>, %arg3: memref<1x128xf32, #tpu.memory_space<vmem>>, %arg4: memref<128x2xbf16, #tpu.memory_space<vmem>>, %arg5: memref<1x2xf32, #tpu.memory_space<vmem>>, %arg6: memref<2x2xf32, #tpu.memory_space<vmem>>) attributes {dimension_semantics = [#tpu.dimension_semantics<arbitrary>], iteration_bounds = array<i64: 1>, scalar_prefetch = 0 : i64, scratch_operands = 0 : i64, tpu.core_type = #tpu.core_type<tc>, window_params = [{pipeline_mode = #tpu.pipeline_mode<synchronous>, transform_indices = @transform_0, window_bounds = array<i64: 2, 128>}, {pipeline_mode = #tpu.pipeline_mode<synchronous>, transform_indices = @transform_1, window_bounds = array<i64: 128, 128>}, {pipeline_mode = #tpu.pipeline_mode<synchronous>, transform_indices = @transform_2, window_bounds = array<i64: 1, 128>}, {pipeline_mode = #tpu.pipeline_mode<synchronous>, transform_indices = @transform_3, window_bounds = array<i64: 128, 2>}, {pipeline_mode = #tpu.pipeline_mode<synchronous>, transform_indices = @transform_4, window_bounds = array<i64: 1, 2>}, {pipeline_mode = #tpu.pipeline_mode<synchronous>, transform_indices = @transform_5, window_bounds = array<i64: 2, 2>}]} {
    %c0 = arith.constant 0 : index
    %c0_0 = arith.constant 0 : index
    %0 = vector.load %arg1[%c0, %c0_0] : memref<2x128xbf16, #tpu.memory_space<vmem>>, vector<2x128xbf16>
    %c0_1 = arith.constant 0 : index
    %c0_2 = arith.constant 0 : index
    %1 = vector.load %arg2[%c0_1, %c0_2] : memref<128x128xbf16, #tpu.memory_space<vmem>>, vector<128x128xbf16>
    %cst = arith.constant dense<0.000000e+00> : vector<2x128xf32>
    %2 = tpu.matmul %0, %1, %cst {dimension_numbers = #tpu.dot_dimension_numbers<[1], [0], [0], [1], [0, 0, 1, 1], [], []>} : vector<2x128xbf16>, vector<128x128xbf16>, vector<2x128xf32> -> vector<2x128xf32>
    %c0_3 = arith.constant 0 : index
    %c0_4 = arith.constant 0 : index
    %3 = vector.load %arg3[%c0_3, %c0_4] : memref<1x128xf32, #tpu.memory_space<vmem>>, vector<1x128xf32>
    %4 = vector.broadcast %3 : vector<1x128xf32> to vector<2x128xf32>
    %5 = arith.addf %2, %4 : vector<2x128xf32>
    %6 = math.tanh %5 : vector<2x128xf32>
    %7 = arith.truncf %6 : vector<2x128xf32> to vector<2x128xbf16>
    %c0_5 = arith.constant 0 : index
    %c0_6 = arith.constant 0 : index
    %8 = vector.load %arg4[%c0_5, %c0_6] : memref<128x2xbf16, #tpu.memory_space<vmem>>, vector<128x2xbf16>
    %cst_7 = arith.constant dense<0.000000e+00> : vector<2x2xf32>
    %9 = tpu.matmul %7, %8, %cst_7 {dimension_numbers = #tpu.dot_dimension_numbers<[1], [0], [0], [1], [0, 0, 1, 1], [], []>} : vector<2x128xbf16>, vector<128x2xbf16>, vector<2x2xf32> -> vector<2x2xf32>
    %c0_8 = arith.constant 0 : index
    %c0_9 = arith.constant 0 : index
    %10 = vector.load %arg5[%c0_8, %c0_9] : memref<1x2xf32, #tpu.memory_space<vmem>>, vector<1x2xf32>
    %11 = vector.broadcast %10 : vector<1x2xf32> to vector<2x2xf32>
    %12 = arith.addf %9, %11 : vector<2x2xf32>
    %c0_10 = arith.constant 0 : index
    %c0_11 = arith.constant 0 : index
    %13 = vector.load %arg6[%c0_10, %c0_11] : memref<2x2xf32, #tpu.memory_space<vmem>>, vector<2x2xf32>
    tpu.vector_store %arg6[%c0_10, %c0_11], %12 {strides = array<i32>} : memref<2x2xf32, #tpu.memory_space<vmem>>, vector<2x2xf32>,
    return
  }
  func.func @transform_0(%arg0: i32) -> (i32, i32) {
    %c0_i32 = arith.constant 0 : i32
    %c0_i32_0 = arith.constant 0 : i32
    %c0_i32_1 = arith.constant 0 : i32
    return %c0_i32, %c0_i32_0 : i32, i32
  }
  func.func @transform_1(%arg0: i32) -> (i32, i32) {
    %c0_i32 = arith.constant 0 : i32
    %c0_i32_0 = arith.constant 0 : i32
    %c0_i32_1 = arith.constant 0 : i32
    return %c0_i32, %c0_i32_0 : i32, i32
  }
  func.func @transform_2(%arg0: i32) -> (i32, i32) {
    %c0_i32 = arith.constant 0 : i32
    %c0_i32_0 = arith.constant 0 : i32
    %c0_i32_1 = arith.constant 0 : i32
    return %c0_i32, %c0_i32_0 : i32, i32
  }
  func.func @transform_3(%arg0: i32) -> (i32, i32) {
    %c0_i32 = arith.constant 0 : i32
    %c0_i32_0 = arith.constant 0 : i32
    %c0_i32_1 = arith.constant 0 : i32
    return %c0_i32, %c0_i32_0 : i32, i32
  }
  func.func @transform_4(%arg0: i32) -> (i32, i32) {
    %c0_i32 = arith.constant 0 : i32
    %c0_i32_0 = arith.constant 0 : i32
    %c0_i32_1 = arith.constant 0 : i32
    return %c0_i32, %c0_i32_0 : i32, i32
  }
  func.func @transform_5(%arg0: i32) -> (i32, i32) {
    %c0_i32 = arith.constant 0 : i32
    %c0_i32_0 = arith.constant 0 : i32
    %c0_i32_1 = arith.constant 0 : i32
    return %c0_i32, %c0_i32_0 : i32, i32
  }
}

</mosaic_0001>

<llo_original>
// kernel: bert_forward.6
$region0: #{bert_forward.6}
  #allocation0 [shape = 'u32[]', space=smem, size = 0x4, offset = 0x4, fixed_abs, tag = 'smem constant byte address 0x4 - core index']
  #allocation1 [shape = 'u32[72,128]{1,0:T(1,128)}', space=vmem, size = 0x9000, scoped, tag = 'internal scratch']
  %s0 = inlined_call_operand.vmem [shape: f32[32,128], index: 0, kind: input, shape index: {}]
  %s1 = inlined_call_operand.vmem [shape: f32[1,128], index: 1, kind: input, shape index: {}]
  %s2 = inlined_call_operand.vmem [shape: f32[1,128], index: 2, kind: input, shape index: {}]
  %s3 = inlined_call_operand.vmem [shape: bf16[32,128], index: 3, kind: output, shape index: {}]
  %s4 = sld [smem:[#allocation0]]
  $region45: #{bert_forward.6} parent=0
    _
  %s6 = ssub.s32 1, %s4
  %s7 = scalar_select 0, %s6, %s4
  loop: start=0, step=1, limit=4
  $region2: #{bert_forward.6} parent=0 // loop_pre_header
    _
  $region3: #{bert_forward.6} parent=0 // loop_header
    %s9 = sphi 0, %s13
    %p10 = scmp.ge.s32.totalorder %s9, 4
    %s19 = sphi 0, %s21
    %s22 = sphi 0, %s19
    %s23 = sphi 0, %s22
    %s39 = sphi 0, %s23
    %s43 = sphi 0, %s43
    %s45 = sphi 0, %s43
    %s46 = sphi 0, %s45
    %s60 = sphi 0, %s46
    %s64 = sphi 0, %s64
    %s66 = sphi 0, %s64
    %s67 = sphi 0, %s66
    %s81 = sphi 0, %s67
    %s87 = sphi 0, %s89
    %s90 = sphi 0, %s87
    %s91 = sphi 0, %s90
    %s107 = sphi 0, %s91
  $region4: #{bert_forward.6} parent=0 // loop_header_branch
    %12 = sbr.rel (%p10) target = $region8
  $region5: #{bert_forward.6} parent=0 // loop_body
    %s14 = ssub.s32 %s9, 1
    %s15 = ssub.s32 %s9, 2
    %s16 = sadd.s32 %s9, 1
    %s17 = ssub.s32 %s9, %s16
    %p18 = scmp.eq.s32.totalorder %s17, 0
    %s20 = sadd.s32 %s19, 1
    %s21 = scalar_select %p18, %s19, %s20
    %p24 = pneg %p18
    %p25 = scmp.eq.s32.totalorder %s9, 1
    %p26 = por %p24, %p25
    %p27 = scmp.ne.s32.totalorder %s19, %s22
    %p28 = scmp.eq.s32.totalorder %s9, 0
    %p29 = por %p27, %p28
    %p30 = scmp.ne.s32.totalorder %s19, %s22
    %p31 = scmp.eq.s32.totalorder %s14, 1
    %p32 = por %p30, %p31
    %p33 = scmp.ne.s32.totalorder %s22, %s23
    %p34 = scmp.eq.s32.totalorder %s14, 0
    %p35 = por %p33, %p34
    %p36 = scmp.ne.s32.totalorder %s22, %s23
    %p37 = scmp.eq.s32.totalorder %s15, 1
    %p38 = por %p36, %p37
    %p40 = scmp.ne.s32.totalorder %s23, %s39
    %p41 = scmp.eq.s32.totalorder %s15, 0
    %p42 = por %p40, %p41
    %s44 = sadd.s32 %s43, 1
    %p47 = scmp.eq.s32.totalorder %s9, 1
    %p48 = scmp.ne.s32.totalorder %s43, %s45
    %p49 = scmp.eq.s32.totalorder %s9, 0
    %p50 = por %p48, %p49
    %p51 = scmp.ne.s32.totalorder %s43, %s45
    %p52 = scmp.eq.s32.totalorder %s14, 1
    %p53 = por %p51, %p52
    %p54 = scmp.ne.s32.totalorder %s45, %s46
    %p55 = scmp.eq.s32.totalorder %s14, 0
    %p56 = por %p54, %p55
    %p57 = scmp.ne.s32.totalorder %s45, %s46
    %p58 = scmp.eq.s32.totalorder %s15, 1
    %p59 = por %p57, %p58
    %p61 = scmp.ne.s32.totalorder %s46, %s60
    %p62 = scmp.eq.s32.totalorder %s15, 0
    %p63 = por %p61, %p62
    %s65 = sadd.s32 %s64, 1
    %p68 = scmp.eq.s32.totalorder %s9, 1
    %p69 = scmp.ne.s32.totalorder %s64, %s66
    %p70 = scmp.eq.s32.totalorder %s9, 0
    %p71 = por %p69, %p70
    %p72 = scmp.ne.s32.totalorder %s64, %s66
    %p73 = scmp.eq.s32.totalorder %s14, 1
    %p74 = por %p72, %p73
    %p75 = scmp.ne.s32.totalorder %s66, %s67
    %p76 = scmp.eq.s32.totalorder %s14, 0
    %p77 = por %p75, %p76
    %p78 = scmp.ne.s32.totalorder %s66, %s67
    %p79 = scmp.eq.s32.totalorder %s15, 1
    %p80 = por %p78, %p79
    %p82 = scmp.ne.s32.totalorder %s67, %s81
    %p83 = scmp.eq.s32.totalorder %s15, 0
    %p84 = por %p82, %p83
    %s85 = ssub.s32 %s9, %s16
    %p86 = scmp.eq.s32.totalorder %s85, 0
    %s88 = sadd.s32 %s87, 1
    %s89 = scalar_select %p86, %s87, %s88
    %p92 = pneg %p86
    %p93 = scmp.eq.s32.totalorder %s9, 1
    %p94 = por %p92, %p93
    %p95 = scmp.ne.s32.totalorder %s87, %s90
    %p96 = scmp.eq.s32.totalorder %s9, 0
    %p97 = por %p95, %p96
    %p98 = scmp.ne.s32.totalorder %s87, %s90
    %p99 = scmp.eq.s32.totalorder %s14, 1
    %p100 = por %p98, %p99
    %p101 = scmp.ne.s32.totalorder %s90, %s91
    %p102 = scmp.eq.s32.totalorder %s14, 0
    %p103 = por %p101, %p102
    %p104 = scmp.ne.s32.totalorder %s90, %s91
    %p105 = scmp.eq.s32.totalorder %s15, 1
    %p106 = por %p104, %p105
    %p108 = scmp.ne.s32.totalorder %s91, %s107
    %p109 = scmp.eq.s32.totalorder %s15, 0
    %p110 = por %p108, %p109
    %p111 = scmp.le.s32.totalorder 1, %s9
    %p112 = scmp.lt.s32.totalorder %s9, 3
    %p113 = pnand %p111, %p112
    %p114 = pneg %p113
    // Predicated region
    $region9: #{bert_forward.6} parent=5 // pred_check
      _
    $region10: #{bert_forward.6} parent=5 // pred_check_branch
      %116 = sbr.rel (%p113) target = $region12
    $region11: #{bert_forward.6} parent=5 // pred_region
      %s117 = ssub.s32 %s9, 1
      // Predicated region
      $region13: #{bert_forward.6} parent=11 // pred_check
        %p118 = pneg %p56
      $region14: #{bert_forward.6} parent=11 // pred_check_branch
        %120 = sbr.rel (%p118) target = $region16
      $region15: #{bert_forward.6} parent=11 // pred_region
        _
      $region16: #{bert_forward.6} parent=11 // pred_fallthru
        _
      // Predicated region
      $region17: #{bert_forward.6} parent=11 // pred_check
        %p121 = pneg %p77
      $region18: #{bert_forward.6} parent=11 // pred_check_branch
        %123 = sbr.rel (%p121) target = $region20
      $region19: #{bert_forward.6} parent=11 // pred_region
        _
      $region20: #{bert_forward.6} parent=11 // pred_fallthru
        _
    $region12: #{bert_forward.6} parent=5 // pred_fallthru
      _
    %p124 = scmp.lt.s32.totalorder %s9, 2
    // Predicated region
    $region21: #{bert_forward.6} parent=5 // pred_check
      %p125 = pneg %p124
    $region22: #{bert_forward.6} parent=5 // pred_check_branch
      %127 = sbr.rel (%p125) target = $region24
    $region23: #{bert_forward.6} parent=5 // pred_region
      // Predicated region
      $region25: #{bert_forward.6} parent=23 // pred_check
        %p128 = pneg %p29
      $region26: #{bert_forward.6} parent=23 // pred_check_branch
        %130 = sbr.rel (%p128) target = $region28
      $region27: #{bert_forward.6} parent=23 // pred_region
        %s131 = smul.u32 2, %s9
        %p132 = scmp.lt.s32.totalorder %s131, 3
        %s133 = scalar_select %p132, %s131, 3
        %s134 = smul.addr %s133, 8
        %s135 = scalar_lea.vmem %s0, %s134
        %s136 = smul.u32 2, %s9
      $region28: #{bert_forward.6} parent=23 // pred_fallthru
        _
    $region24: #{bert_forward.6} parent=5 // pred_fallthru
      _
    %p137 = scmp.le.s32.totalorder 1, %s9
    %p138 = scmp.lt.s32.totalorder %s9, 3
    %p139 = pnand %p137, %p138
    %p140 = pneg %p139
    // Predicated region
    $region29: #{bert_forward.6} parent=5 // pred_check
      _
    $region30: #{bert_forward.6} parent=5 // pred_check_branch
      %142 = sbr.rel (%p139) target = $region32
    $region31: #{bert_forward.6} parent=5 // pred_region
      %s143 = ssub.s32 %s9, 1
      %s144 = smul.u32 2, %s14
      %p145 = scmp.lt.s32.totalorder %s144, 3
      %s146 = scalar_select %p145, %s144, 3
      %s147 = smul.addr %s146, 8
      %s148 = scalar_lea.vmem %s0, %s147
      %p149 = pneg %p35
      %p150 = pneg %p32
      %p151 = pneg %p56
      %p152 = pneg %p53
      %p153 = pneg %p77
      %p154 = pneg %p74
      %p155 = pneg %p103
      %p156 = pneg %p100
      %s157 = smul.u32 2, %s14
      %p158 = scmp.lt.s32.totalorder %s157, 3
      %s159 = scalar_select %p158, %s157, 3
      %s160 = smul.addr %s159, 4
      %s161 = scalar_lea.vmem %s3, %s160
      %s162 = smul.u32 2, %s14
      %p163 = scmp.lt.s32.totalorder %s162, 3
      %s164 = scalar_select %p163, %s162, 3
      %s165 = smul.addr %s164, 8
      %s166 = scalar_lea.vmem %s0, %s165
      %s167 = smul.u32 2, %s14
      %s168 = smul.u32 2, %s14
      %p169 = scmp.lt.s32.totalorder %s168, 3
      %s170 = scalar_select %p169, %s168, 3
      %s171 = smul.addr %s170, 4
      %s172 = scalar_lea.vmem %s3, %s171
      %s173 = smul.u32 2, %s14
      %v174 = vld [vmem:[%s166] sm:$0xff]
      %v175 = vld [vmem:[%s166 + $0x8] sm:$0xff]
      %v176 = vld [vmem:[%s1] sm:$0x1]
      %v177 = vld [vmem:[%s2] sm:$0x1]
      %178 = vadd.xlane.f32.xlu0 %v174
      %v179 = vpop.xlane.xlu0 %178
      %180 = vadd.xlane.f32.xlu0 %v175
      %v181 = vpop.xlane.xlu0 %180
      %v182 = vrcp.pop 128.0
      %v183 = vmul.f32 128.0, %v182
      %v184 = vsub.f32 1.0, %v183
      %v185 = vmul.f32 %v182, %v184
      %v186 = vadd.f32 %v182, %v185
      %vm187 = vweird.f32 %v182
      %v188 = vsel %vm187, %v182, %v186
      %v189 = vmul.f32 %v179, %v188
      %v190 = vmul.f32 %v181, %v188
      %v191 = vmul.f32 %v174, %v174
      %v192 = vmul.f32 %v175, %v175
      %193 = vadd.xlane.f32.xlu0 %v191
      %v194 = vpop.xlane.xlu0 %193
      %195 = vadd.xlane.f32.xlu0 %v192
      %v196 = vpop.xlane.xlu0 %195
      %v197 = vmul.f32 %v194, %v188
      %v198 = vmul.f32 %v196, %v188
      %v199 = vmul.f32 %v189, %v189
      %v200 = vmul.f32 %v190, %v190
      %v201 = vsub.f32 %v197, %v199
      %v202 = vsub.f32 %v198, %v200
      %v203 = vmax.f32 %v201, 0.0
      %v204 = vmax.f32 %v202, 0.0
      %v205 = vsub.f32 %v174, %v189
      %v206 = vsub.f32 %v175, %v190
      %v207 = vadd.f32 %v203, 1e-12
      %v208 = vadd.f32 %v204, 1e-12
      %v209 = vrsqrt.pop %v207
      %v210 = vmul.f32 %v209, %v207
      %v211 = vmul.f32 %v210, %v209
      %v212 = vmul.f32 0.5, %v211
      %v213 = vsub.f32 1.5, %v212
      %v214 = vmul.f32 %v209, %v213
      %vm215 = vweird.f32 %v207
      %vm216 = vweird.f32 %v209
      %vm217 = vmor %vm215, %vm216
      %v218 = vsel %vm217, %v209, %v214
      %v219 = vrsqrt.pop %v208
      %v220 = vmul.f32 %v219, %v208
      %v221 = vmul.f32 %v220, %v219
      %v222 = vmul.f32 0.5, %v221
      %v223 = vsub.f32 1.5, %v222
      %v224 = vmul.f32 %v219, %v223
      %vm225 = vweird.f32 %v208
      %vm226 = vweird.f32 %v219
      %vm227 = vmor %vm225, %vm226
      %v228 = vsel %vm227, %v219, %v224
      %v229 = vmul.f32 %v205, %v218
      %v230 = vmul.f32 %v206, %v228
      %v232 = vperm.slane %v176, 0
      %v234 = vmul.f32 %v229, %v232
      %v235 = vmul.f32 %v230, %v232
      %v237 = vperm.slane %v177, 0
      %v239 = vadd.f32 %v234, %v237
      %v240 = vadd.f32 %v235, %v237
      %v241 = vpack.c.bf16 %v239, %v239
      %v242 = vpack.c.bf16 %v240, %v240
      %243 = vst [vmem:[%s172] sm:$0xf] %v241
      %244 = vst [vmem:[%s172 + $0x4] sm:$0xf] %v242
      %s245 = smul.u32 2, %s14
      %p246 = scmp.lt.s32.totalorder %s245, 3
      %s247 = scalar_select %p246, %s245, 3
      %s248 = smul.addr %s247, 4
      %s249 = scalar_lea.vmem %s3, %s248
      // Predicated region
      $region33: #{bert_forward.6} parent=31 // pred_check
        %p250 = pneg %p100
      $region34: #{bert_forward.6} parent=31 // pred_check_branch
        %252 = sbr.rel (%p250) target = $region36
      $region35: #{bert_forward.6} parent=31 // pred_region
        %s253 = smul.u32 2, %s14
      $region36: #{bert_forward.6} parent=31 // pred_fallthru
        _
    $region32: #{bert_forward.6} parent=5 // pred_fallthru
      _
    %p254 = scmp.le.s32.totalorder 2, %s9
    // Predicated region
    $region37: #{bert_forward.6} parent=5 // pred_check
      %p255 = pneg %p254
    $region38: #{bert_forward.6} parent=5 // pred_check_branch
      %257 = sbr.rel (%p255) target = $region40
    $region39: #{bert_forward.6} parent=5 // pred_region
      %s258 = ssub.s32 %s9, 2
      // Predicated region
      $region41: #{bert_forward.6} parent=39 // pred_check
        %p259 = pneg %p106
      $region42: #{bert_forward.6} parent=39 // pred_check_branch
        %261 = sbr.rel (%p259) target = $region44
      $region43: #{bert_forward.6} parent=39 // pred_region
        %s262 = smul.u32 2, %s15
        %p263 = scmp.lt.s32.totalorder %s262, 3
        %s264 = scalar_select %p263, %s262, 3
        %s265 = smul.addr %s264, 4
        %s266 = scalar_lea.vmem %s3, %s265
      $region44: #{bert_forward.6} parent=39 // pred_fallthru
        _
    $region40: #{bert_forward.6} parent=5 // pred_fallthru
      _
  $region6: #{bert_forward.6} parent=0 // loop_footer
    %s13 = sadd.s32 1, %s9
  $region7: #{bert_forward.6} parent=0 // loop_footer_branch
    %8 = sbr.rel target = $region3
  $region8: #{bert_forward.6} parent=0 // loop_exit
    _

// kernel: bert_forward.8
$region0: #{bert_forward.8}
  #allocation0 [shape = 'u32[]', space=smem, size = 0x4, offset = 0x4, fixed_abs, tag = 'smem constant byte address 0x4 - core index']
  #allocation1 [shape = 'u32[72,128]{1,0:T(1,128)}', space=vmem, size = 0x9000, scoped, tag = 'internal scratch']
  %s0 = inlined_call_operand.vmem [shape: bf16[32,128], index: 0, kind: input, shape index: {}]
  %s1 = inlined_call_operand.vmem [shape: bf16[128,512], index: 1, kind: input, shape index: {}]
  %s2 = inlined_call_operand.vmem [shape: f32[1,512], index: 2, kind: input, shape index: {}]
  %s3 = inlined_call_operand.vmem [shape: bf16[512,128], index: 3, kind: input, shape index: {}]
  %s4 = inlined_call_operand.vmem [shape: f32[1,128], index: 4, kind: input, shape index: {}]
  %s5 = inlined_call_operand.vmem [shape: f32[1,128], index: 5, kind: input, shape index: {}]
  %s6 = inlined_call_operand.vmem [shape: f32[1,128], index: 6, kind: input, shape index: {}]
  %s7 = inlined_call_operand.vmem [shape: bf16[32,128], index: 7, kind: output, shape index: {}]
  %s8 = sld [smem:[#allocation0]]
  $region61: #{bert_forward.8} parent=0
    _
  %s10 = ssub.s32 1, %s8
  %s11 = scalar_select 0, %s10, %s8
  loop: start=0, step=1, limit=4
  $region2: #{bert_forward.8} parent=0 // loop_pre_header
    _
  $region3: #{bert_forward.8} parent=0 // loop_header
    %s13 = sphi 0, %s17
    %p14 = scmp.ge.s32.totalorder %s13, 4
    %s23 = sphi 0, %s25
    %s26 = sphi 0, %s23
    %s27 = sphi 0, %s26
    %s43 = sphi 0, %s27
    %s47 = sphi 0, %s47
    %s49 = sphi 0, %s47
    %s50 = sphi 0, %s49
    %s64 = sphi 0, %s50
    %s68 = sphi 0, %s68
    %s70 = sphi 0, %s68
    %s71 = sphi 0, %s70
    %s85 = sphi 0, %s71
    %s89 = sphi 0, %s89
    %s91 = sphi 0, %s89
    %s92 = sphi 0, %s91
    %s106 = sphi 0, %s92
    %s110 = sphi 0, %s110
    %s112 = sphi 0, %s110
    %s113 = sphi 0, %s112
    %s127 = sphi 0, %s113
    %s131 = sphi 0, %s131
    %s133 = sphi 0, %s131
    %s134 = sphi 0, %s133
    %s148 = sphi 0, %s134
    %s152 = sphi 0, %s152
    %s154 = sphi 0, %s152
    %s155 = sphi 0, %s154
    %s169 = sphi 0, %s155
    %s175 = sphi 0, %s177
    %s178 = sphi 0, %s175
    %s179 = sphi 0, %s178
    %s195 = sphi 0, %s179
  $region4: #{bert_forward.8} parent=0 // loop_header_branch
    %16 = sbr.rel (%p14) target = $region8
  $region5: #{bert_forward.8} parent=0 // loop_body
    %s18 = ssub.s32 %s13, 1
    %s19 = ssub.s32 %s13, 2
    %s20 = sadd.s32 %s13, 1
    %s21 = ssub.s32 %s13, %s20
    %p22 = scmp.eq.s32.totalorder %s21, 0
    %s24 = sadd.s32 %s23, 1
    %s25 = scalar_select %p22, %s23, %s24
    %p28 = pneg %p22
    %p29 = scmp.eq.s32.totalorder %s13, 1
    %p30 = por %p28, %p29
    %p31 = scmp.ne.s32.totalorder %s23, %s26
    %p32 = scmp.eq.s32.totalorder %s13, 0
    %p33 = por %p31, %p32
    %p34 = scmp.ne.s32.totalorder %s23, %s26
    %p35 = scmp.eq.s32.totalorder %s18, 1
    %p36 = por %p34, %p35
    %p37 = scmp.ne.s32.totalorder %s26, %s27
    %p38 = scmp.eq.s32.totalorder %s18, 0
    %p39 = por %p37, %p38
    %p40 = scmp.ne.s32.totalorder %s26, %s27
    %p41 = scmp.eq.s32.totalorder %s19, 1
    %p42 = por %p40, %p41
    %p44 = scmp.ne.s32.totalorder %s27, %s43
    %p45 = scmp.eq.s32.totalorder %s19, 0
    %p46 = por %p44, %p45
    %s48 = sadd.s32 %s47, 1
    %p51 = scmp.eq.s32.totalorder %s13, 1
    %p52 = scmp.ne.s32.totalorder %s47, %s49
    %p53 = scmp.eq.s32.totalorder %s13, 0
    %p54 = por %p52, %p53
    %p55 = scmp.ne.s32.totalorder %s47, %s49
    %p56 = scmp.eq.s32.totalorder %s18, 1
    %p57 = por %p55, %p56
    %p58 = scmp.ne.s32.totalorder %s49, %s50
    %p59 = scmp.eq.s32.totalorder %s18, 0
    %p60 = por %p58, %p59
    %p61 = scmp.ne.s32.totalorder %s49, %s50
    %p62 = scmp.eq.s32.totalorder %s19, 1
    %p63 = por %p61, %p62
    %p65 = scmp.ne.s32.totalorder %s50, %s64
    %p66 = scmp.eq.s32.totalorder %s19, 0
    %p67 = por %p65, %p66
    %s69 = sadd.s32 %s68, 1
    %p72 = scmp.eq.s32.totalorder %s13, 1
    %p73 = scmp.ne.s32.totalorder %s68, %s70
    %p74 = scmp.eq.s32.totalorder %s13, 0
    %p75 = por %p73, %p74
    %p76 = scmp.ne.s32.totalorder %s68, %s70
    %p77 = scmp.eq.s32.totalorder %s18, 1
    %p78 = por %p76, %p77
    %p79 = scmp.ne.s32.totalorder %s70, %s71
    %p80 = scmp.eq.s32.totalorder %s18, 0
    %p81 = por %p79, %p80
    %p82 = scmp.ne.s32.totalorder %s70, %s71
    %p83 = scmp.eq.s32.totalorder %s19, 1
    %p84 = por %p82, %p83
    %p86 = scmp.ne.s32.totalorder %s71, %s85
    %p87 = scmp.eq.s32.totalorder %s19, 0
    %p88 = por %p86, %p87
    %s90 = sadd.s32 %s89, 1
    %p93 = scmp.eq.s32.totalorder %s13, 1
    %p94 = scmp.ne.s32.totalorder %s89, %s91
    %p95 = scmp.eq.s32.totalorder %s13, 0
    %p96 = por %p94, %p95
    %p97 = scmp.ne.s32.totalorder %s89, %s91
    %p98 = scmp.eq.s32.totalorder %s18, 1
    %p99 = por %p97, %p98
    %p100 = scmp.ne.s32.totalorder %s91, %s92
    %p101 = scmp.eq.s32.totalorder %s18, 0
    %p102 = por %p100, %p101
    %p103 = scmp.ne.s32.totalorder %s91, %s92
    %p104 = scmp.eq.s32.totalorder %s19, 1
    %p105 = por %p103, %p104
    %p107 = scmp.ne.s32.totalorder %s92, %s106
    %p108 = scmp.eq.s32.totalorder %s19, 0
    %p109 = por %p107, %p108
    %s111 = sadd.s32 %s110, 1
    %p114 = scmp.eq.s32.totalorder %s13, 1
    %p115 = scmp.ne.s32.totalorder %s110, %s112
    %p116 = scmp.eq.s32.totalorder %s13, 0
    %p117 = por %p115, %p116
    %p118 = scmp.ne.s32.totalorder %s110, %s112
    %p119 = scmp.eq.s32.totalorder %s18, 1
    %p120 = por %p118, %p119
    %p121 = scmp.ne.s32.totalorder %s112, %s113
    %p122 = scmp.eq.s32.totalorder %s18, 0
    %p123 = por %p121, %p122
    %p124 = scmp.ne.s32.totalorder %s112, %s113
    %p125 = scmp.eq.s32.totalorder %s19, 1
    %p126 = por %p124, %p125
    %p128 = scmp.ne.s32.totalorder %s113, %s127
    %p129 = scmp.eq.s32.totalorder %s19, 0
    %p130 = por %p128, %p129
    %s132 = sadd.s32 %s131, 1
    %p135 = scmp.eq.s32.totalorder %s13, 1
    %p136 = scmp.ne.s32.totalorder %s131, %s133
    %p137 = scmp.eq.s32.totalorder %s13, 0
    %p138 = por %p136, %p137
    %p139 = scmp.ne.s32.totalorder %s131, %s133
    %p140 = scmp.eq.s32.totalorder %s18, 1
    %p141 = por %p139, %p140
    %p142 = scmp.ne.s32.totalorder %s133, %s134
    %p143 = scmp.eq.s32.totalorder %s18, 0
    %p144 = por %p142, %p143
    %p145 = scmp.ne.s32.totalorder %s133, %s134
    %p146 = scmp.eq.s32.totalorder %s19, 1
    %p147 = por %p145, %p146
    %p149 = scmp.ne.s32.totalorder %s134, %s148
    %p150 = scmp.eq.s32.totalorder %s19, 0
    %p151 = por %p149, %p150
    %s153 = sadd.s32 %s152, 1
    %p156 = scmp.eq.s32.totalorder %s13, 1
    %p157 = scmp.ne.s32.totalorder %s152, %s154
    %p158 = scmp.eq.s32.totalorder %s13, 0
    %p159 = por %p157, %p158
    %p160 = scmp.ne.s32.totalorder %s152, %s154
    %p161 = scmp.eq.s32.totalorder %s18, 1
    %p162 = por %p160, %p161
    %p163 = scmp.ne.s32.totalorder %s154, %s155
    %p164 = scmp.eq.s32.totalorder %s18, 0
    %p165 = por %p163, %p164
    %p166 = scmp.ne.s32.totalorder %s154, %s155
    %p167 = scmp.eq.s32.totalorder %s19, 1
    %p168 = por %p166, %p167
    %p170 = scmp.ne.s32.totalorder %s155, %s169
    %p171 = scmp.eq.s32.totalorder %s19, 0
    %p172 = por %p170, %p171
    %s173 = ssub.s32 %s13, %s20
    %p174 = scmp.eq.s32.totalorder %s173, 0
    %s176 = sadd.s32 %s175, 1
    %s177 = scalar_select %p174, %s175, %s176
    %p180 = pneg %p174
    %p181 = scmp.eq.s32.totalorder %s13, 1
    %p182 = por %p180, %p181
    %p183 = scmp.ne.s32.totalorder %s175, %s178
    %p184 = scmp.eq.s32.totalorder %s13, 0
    %p185 = por %p183, %p184
    %p186 = scmp.ne.s32.totalorder %s175, %s178
    %p187 = scmp.eq.s32.totalorder %s18, 1
    %p188 = por %p186, %p187
    %p189 = scmp.ne.s32.totalorder %s178, %s179
    %p190 = scmp.eq.s32.totalorder %s18, 0
    %p191 = por %p189, %p190
    %p192 = scmp.ne.s32.totalorder %s178, %s179
    %p193 = scmp.eq.s32.totalorder %s19, 1
    %p194 = por %p192, %p193
    %p196 = scmp.ne.s32.totalorder %s179, %s195
    %p197 = scmp.eq.s32.totalorder %s19, 0
    %p198 = por %p196, %p197
    %p199 = scmp.le.s32.totalorder 1, %s13
    %p200 = scmp.lt.s32.totalorder %s13, 3
    %p201 = pnand %p199, %p200
    %p202 = pneg %p201
    // Predicated region
    $region9: #{bert_forward.8} parent=5 // pred_check
      _
    $region10: #{bert_forward.8} parent=5 // pred_check_branch
      %204 = sbr.rel (%p201) target = $region12
    $region11: #{bert_forward.8} parent=5 // pred_region
      %s205 = ssub.s32 %s13, 1
      // Predicated region
      $region13: #{bert_forward.8} parent=11 // pred_check
        %p206 = pneg %p60
      $region14: #{bert_forward.8} parent=11 // pred_check_branch
        %208 = sbr.rel (%p206) target = $region16
      $region15: #{bert_forward.8} parent=11 // pred_region
        _
      $region16: #{bert_forward.8} parent=11 // pred_fallthru
        _
      // Predicated region
      $region17: #{bert_forward.8} parent=11 // pred_check
        %p209 = pneg %p81
      $region18: #{bert_forward.8} parent=11 // pred_check_branch
        %211 = sbr.rel (%p209) target = $region20
      $region19: #{bert_forward.8} parent=11 // pred_region
        _
      $region20: #{bert_forward.8} parent=11 // pred_fallthru
        _
      // Predicated region
      $region21: #{bert_forward.8} parent=11 // pred_check
        %p212 = pneg %p102
      $region22: #{bert_forward.8} parent=11 // pred_check_branch
        %214 = sbr.rel (%p212) target = $region24
      $region23: #{bert_forward.8} parent=11 // pred_region
        _
      $region24: #{bert_forward.8} parent=11 // pred_fallthru
        _
      // Predicated region
      $region25: #{bert_forward.8} parent=11 // pred_check
        %p215 = pneg %p123
      $region26: #{bert_forward.8} parent=11 // pred_check_branch
        %217 = sbr.rel (%p215) target = $region28
      $region27: #{bert_forward.8} parent=11 // pred_region
        _
      $region28: #{bert_forward.8} parent=11 // pred_fallthru
        _
      // Predicated region
      $region29: #{bert_forward.8} parent=11 // pred_check
        %p218 = pneg %p144
      $region30: #{bert_forward.8} parent=11 // pred_check_branch
        %220 = sbr.rel (%p218) target = $region32
      $region31: #{bert_forward.8} parent=11 // pred_region
        _
      $region32: #{bert_forward.8} parent=11 // pred_fallthru
        _
      // Predicated region
      $region33: #{bert_forward.8} parent=11 // pred_check
        %p221 = pneg %p165
      $region34: #{bert_forward.8} parent=11 // pred_check_branch
        %223 = sbr.rel (%p221) target = $region36
      $region35: #{bert_forward.8} parent=11 // pred_region
        _
      $region36: #{bert_forward.8} parent=11 // pred_fallthru
        _
    $region12: #{bert_forward.8} parent=5 // pred_fallthru
      _
    %p224 = scmp.lt.s32.totalorder %s13, 2
    // Predicated region
    $region37: #{bert_forward.8} parent=5 // pred_check
      %p225 = pneg %p224
    $region38: #{bert_forward.8} parent=5 // pred_check_branch
      %227 = sbr.rel (%p225) target = $region40
    $region39: #{bert_forward.8} parent=5 // pred_region
      // Predicated region
      $region41: #{bert_forward.8} parent=39 // pred_check
        %p228 = pneg %p33
      $region42: #{bert_forward.8} parent=39 // pred_check_branch
        %230 = sbr.rel (%p228) target = $region44
      $region43: #{bert_forward.8} parent=39 // pred_region
        %s231 = smul.u32 2, %s13
        %p232 = scmp.lt.s32.totalorder %s231, 3
        %s233 = scalar_select %p232, %s231, 3
        %s234 = smul.addr %s233, 4
        %s235 = scalar_lea.vmem %s0, %s234
        %s236 = smul.u32 2, %s13
      $region44: #{bert_forward.8} parent=39 // pred_fallthru
        _
    $region40: #{bert_forward.8} parent=5 // pred_fallthru
      _
    %p237 = scmp.le.s32.totalorder 1, %s13
    %p238 = scmp.lt.s32.totalorder %s13, 3
    %p239 = pnand %p237, %p238
    %p240 = pneg %p239
    // Predicated region
    $region45: #{bert_forward.8} parent=5 // pred_check
      _
    $region46: #{bert_forward.8} parent=5 // pred_check_branch
      %242 = sbr.rel (%p239) target = $region48
    $region47: #{bert_forward.8} parent=5 // pred_region
      %s243 = ssub.s32 %s13, 1
      %s244 = smul.u32 2, %s18
      %p245 = scmp.lt.s32.totalorder %s244, 3
      %s246 = scalar_select %p245, %s244, 3
      %s247 = smul.addr %s246, 4
      %s248 = scalar_lea.vmem %s0, %s247
      %p249 = pneg %p39
      %p250 = pneg %p36
      %p251 = pneg %p60
      %p252 = pneg %p57
      %p253 = pneg %p81
      %p254 = pneg %p78
      %p255 = pneg %p102
      %p256 = pneg %p99
      %p257 = pneg %p123
      %p258 = pneg %p120
      %p259 = pneg %p144
      %p260 = pneg %p141
      %p261 = pneg %p165
      %p262 = pneg %p162
      %p263 = pneg %p191
      %p264 = pneg %p188
      %s265 = smul.u32 2, %s18
      %p266 = scmp.lt.s32.totalorder %s265, 3
      %s267 = scalar_select %p266, %s265, 3
      %s268 = smul.addr %s267, 4
      %s269 = scalar_lea.vmem %s7, %s268
      %s270 = smul.u32 2, %s18
      %p271 = scmp.lt.s32.totalorder %s270, 3
      %s272 = scalar_select %p271, %s270, 3
      %s273 = smul.addr %s272, 4
      %s274 = scalar_lea.vmem %s0, %s273
      %s275 = smul.u32 2, %s18
      %s276 = smul.u32 2, %s18
      %p277 = scmp.lt.s32.totalorder %s276, 3
      %s278 = scalar_select %p277, %s276, 3
      %s279 = smul.addr %s278, 4
      %s280 = scalar_lea.vmem %s7, %s279
      %s281 = smul.u32 2, %s18
      %v282 = vld [vmem:[%s274] sm:$0xf]
      %v283 = vld [vmem:[%s274 + $0x4] sm:$0xf]
      %v284 = vld [vmem:[%s1] sm:$0xff]
      %v285 = vld [vmem:[%s1 + $0x8] sm:$0xff]
      %v286 = vld [vmem:[%s1 + $0x10] sm:$0xff]
      %v287 = vld [vmem:[%s1 + $0x18] sm:$0xff]
      %v288 = vld [vmem:[%s1 + $0x20] sm:$0xff]
      %v289 = vld [vmem:[%s1 + $0x28] sm:$0xff]
      %v290 = vld [vmem:[%s1 + $0x30] sm:$0xff]
      %v291 = vld [vmem:[%s1 + $0x38] sm:$0xff]
      %v292 = vld [vmem:[%s1 + $0x40] sm:$0xff]
      %v293 = vld [vmem:[%s1 + $0x48] sm:$0xff]
      %v294 = vld [vmem:[%s1 + $0x50] sm:$0xff]
      %v295 = vld [vmem:[%s1 + $0x58] sm:$0xff]
      %v296 = vld [vmem:[%s1 + $0x60] sm:$0xff]
      %v297 = vld [vmem:[%s1 + $0x68] sm:$0xff]
      %v298 = vld [vmem:[%s1 + $0x70] sm:$0xff]
      %v299 = vld [vmem:[%s1 + $0x78] sm:$0xff]
      %v300 = vld [vmem:[%s1 + $0x80] sm:$0xff]
      %v301 = vld [vmem:[%s1 + $0x88] sm:$0xff]
      %v302 = vld [vmem:[%s1 + $0x90] sm:$0xff]
      %v303 = vld [vmem:[%s1 + $0x98] sm:$0xff]
      %v304 = vld [vmem:[%s1 + $0xa0] sm:$0xff]
      %v305 = vld [vmem:[%s1 + $0xa8] sm:$0xff]
      %v306 = vld [vmem:[%s1 + $0xb0] sm:$0xff]
      %v307 = vld [vmem:[%s1 + $0xb8] sm:$0xff]
      %v308 = vld [vmem:[%s1 + $0xc0] sm:$0xff]
      %v309 = vld [vmem:[%s1 + $0xc8] sm:$0xff]
      %v310 = vld [vmem:[%s1 + $0xd0] sm:$0xff]
      %v311 = vld [vmem:[%s1 + $0xd8] sm:$0xff]
      %v312 = vld [vmem:[%s1 + $0xe0] sm:$0xff]
      %v313 = vld [vmem:[%s1 + $0xe8] sm:$0xff]
      %v314 = vld [vmem:[%s1 + $0xf0] sm:$0xff]
      %v315 = vld [vmem:[%s1 + $0xf8] sm:$0xff]
      %v316 = vld [vmem:[%s2] sm:$0xf]
      %v318 = vperm.slane %v316, 0
      %v319 = vperm.slane %v316, 1
      %v320 = vperm.slane %v316, 2
      %v321 = vperm.slane %v316, 3
      %v328 = vunpack.c.l.b16 %v282
      %v329 = vunpack.c.l.b16 %v283
      %v330 = vpack.c.b16 %v329, %v328
      %v364 = vunpack.c.l.b16 %v284
      %v365 = vunpack.c.h.b16 %v284
      %v366 = vunpack.c.l.b16 %v285
      %v367 = vunpack.c.h.b16 %v285
      %v368 = vunpack.c.l.b16 %v286
      %v369 = vunpack.c.h.b16 %v286
      %v370 = vunpack.c.l.b16 %v287
      %v371 = vunpack.c.h.b16 %v287
      %v372 = vunpack.c.l.b16 %v288
      %v373 = vunpack.c.h.b16 %v288
      %v374 = vunpack.c.l.b16 %v289
      %v375 = vunpack.c.h.b16 %v289
      %v376 = vunpack.c.l.b16 %v290
      %v377 = vunpack.c.h.b16 %v290
      %v378 = vunpack.c.l.b16 %v291
      %v379 = vunpack.c.h.b16 %v291
      %v380 = vunpack.c.l.b16 %v292
      %v381 = vunpack.c.h.b16 %v292
      %v382 = vunpack.c.l.b16 %v293
      %v383 = vunpack.c.h.b16 %v293
      %v384 = vunpack.c.l.b16 %v294
      %v385 = vunpack.c.h.b16 %v294
      %v386 = vunpack.c.l.b16 %v295
      %v387 = vunpack.c.h.b16 %v295
      %v388 = vunpack.c.l.b16 %v296
      %v389 = vunpack.c.h.b16 %v296
      %v390 = vunpack.c.l.b16 %v297
      %v391 = vunpack.c.h.b16 %v297
      %v392 = vunpack.c.l.b16 %v298
      %v393 = vunpack.c.h.b16 %v298
      %v394 = vunpack.c.l.b16 %v299
      %v395 = vunpack.c.h.b16 %v299
      %v396 = vunpack.c.l.b16 %v300
      %v397 = vunpack.c.h.b16 %v300
      %v398 = vunpack.c.l.b16 %v301
      %v399 = vunpack.c.h.b16 %v301
      %v400 = vunpack.c.l.b16 %v302
      %v401 = vunpack.c.h.b16 %v302
      %v402 = vunpack.c.l.b16 %v303
      %v403 = vunpack.c.h.b16 %v303
      %v404 = vunpack.c.l.b16 %v304
      %v405 = vunpack.c.h.b16 %v304
      %v406 = vunpack.c.l.b16 %v305
      %v407 = vunpack.c.h.b16 %v305
      %v408 = vunpack.c.l.b16 %v306
      %v409 = vunpack.c.h.b16 %v306
      %v410 = vunpack.c.l.b16 %v307
      %v411 = vunpack.c.h.b16 %v307
      %v412 = vunpack.c.l.b16 %v308
      %v413 = vunpack.c.h.b16 %v308
      %v414 = vunpack.c.l.b16 %v309
      %v415 = vunpack.c.h.b16 %v309
      %v416 = vunpack.c.l.b16 %v310
      %v417 = vunpack.c.h.b16 %v310
      %v418 = vunpack.c.l.b16 %v311
      %v419 = vunpack.c.h.b16 %v311
      %v420 = vunpack.c.l.b16 %v312
      %v421 = vunpack.c.h.b16 %v312
      %v422 = vunpack.c.l.b16 %v313
      %v423 = vunpack.c.h.b16 %v313
      %v424 = vunpack.c.l.b16 %v314
      %v425 = vunpack.c.h.b16 %v314
      %v426 = vunpack.c.l.b16 %v315
      %v427 = vunpack.c.h.b16 %v315
      %v428 = vpack.c.b16 %v368, %v364
      %v429 = vpack.c.b16 %v369, %v365
      %v430 = vpack.c.b16 %v370, %v366
      %v431 = vpack.c.b16 %v371, %v367
      %v432 = vpack.c.b16 %v376, %v372
      %v433 = vpack.c.b16 %v377, %v373
      %v434 = vpack.c.b16 %v378, %v374
      %v435 = vpack.c.b16 %v379, %v375
      %v436 = vpack.c.b16 %v384, %v380
      %v437 = vpack.c.b16 %v385, %v381
      %v438 = vpack.c.b16 %v386, %v382
      %v439 = vpack.c.b16 %v387, %v383
      %v440 = vpack.c.b16 %v392, %v388
      %v441 = vpack.c.b16 %v393, %v389
      %v442 = vpack.c.b16 %v394, %v390
      %v443 = vpack.c.b16 %v395, %v391
      %v444 = vpack.c.b16 %v400, %v396
      %v445 = vpack.c.b16 %v401, %v397
      %v446 = vpack.c.b16 %v402, %v398
      %v447 = vpack.c.b16 %v403, %v399
      %v448 = vpack.c.b16 %v408, %v404
      %v449 = vpack.c.b16 %v409, %v405
      %v450 = vpack.c.b16 %v410, %v406
      %v451 = vpack.c.b16 %v411, %v407
      %v452 = vpack.c.b16 %v416, %v412
      %v453 = vpack.c.b16 %v417, %v413
      %v454 = vpack.c.b16 %v418, %v414
      %v455 = vpack.c.b16 %v419, %v415
      %v456 = vpack.c.b16 %v424, %v420
      %v457 = vpack.c.b16 %v425, %v421
      %v458 = vpack.c.b16 %v426, %v422
      %v459 = vpack.c.b16 %v427, %v423
      %492 = vmatpush.bf16.msra.mxu0 %v456
      %493 = vmatpush.bf16.msra.mxu0 %v452
      %494 = vmatpush.bf16.msra.mxu0 %v448
      %495 = vmatpush.bf16.msra.mxu0 %v444
      %496 = vmatpush.bf16.msra.mxu0 %v440
      %497 = vmatpush.bf16.msra.mxu0 %v436
      %498 = vmatpush.bf16.msra.mxu0 %v432
      %499 = vmatpush.bf16.msra.mxu0 %v428
      %500 = vmatmul.bf16.gmra.mxu0 %v330
      %v501 = vpop.f32.mrf.mxu0
      %v502 = vadd.f32 %v318, %v501
      %v503 = vpop.f32.mrf.mxu0
      %v504 = vadd.f32 %v318, %v503
      %505 = vdwg.mxu0
      %506 = vmatpush.bf16.msra.mxu0 %v457
      %507 = vmatpush.bf16.msra.mxu0 %v453
      %508 = vmatpush.bf16.msra.mxu0 %v449
      %509 = vmatpush.bf16.msra.mxu0 %v445
      %510 = vmatpush.bf16.msra.mxu0 %v441
      %511 = vmatpush.bf16.msra.mxu0 %v437
      %512 = vmatpush.bf16.msra.mxu0 %v433
      %513 = vmatpush.bf16.msra.mxu0 %v429
      %514 = vmatmul.bf16.gmra.mxu0 %v330
      %v515 = vpop.f32.mrf.mxu0
      %v516 = vadd.f32 %v319, %v515
      %v517 = vpop.f32.mrf.mxu0
      %v518 = vadd.f32 %v319, %v517
      %519 = vdwg.mxu0
      %520 = vmatpush.bf16.msra.mxu0 %v458
      %521 = vmatpush.bf16.msra.mxu0 %v454
      %522 = vmatpush.bf16.msra.mxu0 %v450
      %523 = vmatpush.bf16.msra.mxu0 %v446
      %524 = vmatpush.bf16.msra.mxu0 %v442
      %525 = vmatpush.bf16.msra.mxu0 %v438
      %526 = vmatpush.bf16.msra.mxu0 %v434
      %527 = vmatpush.bf16.msra.mxu0 %v430
      %528 = vmatmul.bf16.gmra.mxu0 %v330
      %v529 = vpop.f32.mrf.mxu0
      %v530 = vadd.f32 %v320, %v529
      %v531 = vpop.f32.mrf.mxu0
      %v532 = vadd.f32 %v320, %v531
      %533 = vdwg.mxu0
      %534 = vmatpush.bf16.msra.mxu0 %v459
      %535 = vmatpush.bf16.msra.mxu0 %v455
      %536 = vmatpush.bf16.msra.mxu0 %v451
      %537 = vmatpush.bf16.msra.mxu0 %v447
      %538 = vmatpush.bf16.msra.mxu0 %v443
      %539 = vmatpush.bf16.msra.mxu0 %v439
      %540 = vmatpush.bf16.msra.mxu0 %v435
      %541 = vmatpush.bf16.msra.mxu0 %v431
      %542 = vmatmul.bf16.gmra.mxu0 %v330
      %v543 = vpop.f32.mrf.mxu0
      %v544 = vadd.f32 %v321, %v543
      %v545 = vpop.f32.mrf.mxu0
      %v546 = vadd.f32 %v321, %v545
      %547 = vdwg.mxu0
      %v548 = vmul.f32 %v502, 0.5
      %v549 = vmul.f32 %v516, 0.5
      %v550 = vmul.f32 %v530, 0.5
      %v551 = vmul.f32 %v544, 0.5
      %v552 = vmul.f32 %v504, 0.5
      %v553 = vmul.f32 %v518, 0.5
      %v554 = vmul.f32 %v532, 0.5
      %v555 = vmul.f32 %v546, 0.5
      %v556 = vmul.f32 %v502, 0.70710677
      %v557 = vmul.f32 %v516, 0.70710677
      %v558 = vmul.f32 %v530, 0.70710677
      %v559 = vmul.f32 %v544, 0.70710677
      %v560 = vmul.f32 %v504, 0.70710677
      %v561 = vmul.f32 %v518, 0.70710677
      %v562 = vmul.f32 %v532, 0.70710677
      %v563 = vmul.f32 %v546, 0.70710677
      %vm564 = vcmp.ge.f32.partialorder %v556, 0.0
      %vm565 = vcmp.ge.f32.partialorder %v557, 0.0
      %vm566 = vcmp.ge.f32.partialorder %v558, 0.0
      %vm567 = vcmp.ge.f32.partialorder %v559, 0.0
      %vm568 = vcmp.ge.f32.partialorder %v560, 0.0
      %vm569 = vcmp.ge.f32.partialorder %v561, 0.0
      %vm570 = vcmp.ge.f32.partialorder %v562, 0.0
      %vm571 = vcmp.ge.f32.partialorder %v563, 0.0
      %v572 = vsel %vm564, 1.0, -1.0
      %v573 = vsel %vm565, 1.0, -1.0
      %v574 = vsel %vm566, 1.0, -1.0
      %v575 = vsel %vm567, 1.0, -1.0
      %v576 = vsel %vm568, 1.0, -1.0
      %v577 = vsel %vm569, 1.0, -1.0
      %v578 = vsel %vm570, 1.0, -1.0
      %v579 = vsel %vm571, 1.0, -1.0
      %v580 = vand.u32 2147483647, %v556
      %v581 = vand.u32 2147483647, %v557
      %v582 = vand.u32 2147483647, %v558
      %v583 = vand.u32 2147483647, %v559
      %v584 = vand.u32 2147483647, %v560
      %v585 = vand.u32 2147483647, %v561
      %v586 = vand.u32 2147483647, %v562
      %v587 = vand.u32 2147483647, %v563
      %v588 = vmul.f32 %v580, 0.3275911
      %v589 = vmul.f32 %v581, 0.3275911
      %v590 = vmul.f32 %v582, 0.3275911
      %v591 = vmul.f32 %v583, 0.3275911
      %v592 = vmul.f32 %v584, 0.3275911
      %v593 = vmul.f32 %v585, 0.3275911
      %v594 = vmul.f32 %v586, 0.3275911
      %v595 = vmul.f32 %v587, 0.3275911
      %v596 = vadd.f32 %v588, 1.0
      %v597 = vadd.f32 %v589, 1.0
      %v598 = vadd.f32 %v590, 1.0
      %v599 = vadd.f32 %v591, 1.0
      %v600 = vadd.f32 %v592, 1.0
      %v601 = vadd.f32 %v593, 1.0
      %v602 = vadd.f32 %v594, 1.0
      %v603 = vadd.f32 %v595, 1.0
      %v604 = vrcp.pop %v596
      %v605 = vmul.f32 %v596, %v604
      %v606 = vsub.f32 1.0, %v605
      %v607 = vmul.f32 %v604, %v606
      %v608 = vadd.f32 %v604, %v607
      %vm609 = vweird.f32 %v596
      %vm610 = vweird.f32 %v604
      %vm611 = vmor %vm609, %vm610
      %v612 = vsel %vm611, %v604, %v608
      %v613 = vand.u32 2147483647, %v596
      %vm614 = vcmp.eq.f32.partialorder %v613, 8.507059e+37
      %v615 = vand.u32 %v596, 2147483648
      %v616 = vor.u32 1.1754944e-38, %v615
      %v617 = vsel %vm614, %v616, %v612
      %v618 = vmul.f32 1.0, %v617
      %v619 = vrcp.pop %v597
      %v620 = vmul.f32 %v597, %v619
      %v621 = vsub.f32 1.0, %v620
      %v622 = vmul.f32 %v619, %v621
      %v623 = vadd.f32 %v619, %v622
      %vm624 = vweird.f32 %v597
      %vm625 = vweird.f32 %v619
      %vm626 = vmor %vm624, %vm625
      %v627 = vsel %vm626, %v619, %v623
      %v628 = vand.u32 2147483647, %v597
      %vm629 = vcmp.eq.f32.partialorder %v628, 8.507059e+37
      %v630 = vand.u32 %v597, 2147483648
      %v631 = vor.u32 1.1754944e-38, %v630
      %v632 = vsel %vm629, %v631, %v627
      %v633 = vmul.f32 1.0, %v632
      %v634 = vrcp.pop %v598
      %v635 = vmul.f32 %v598, %v634
      %v636 = vsub.f32 1.0, %v635
      %v637 = vmul.f32 %v634, %v636
      %v638 = vadd.f32 %v634, %v637
      %vm639 = vweird.f32 %v598
      %vm640 = vweird.f32 %v634
      %vm641 = vmor %vm639, %vm640
      %v642 = vsel %vm641, %v634, %v638
      %v643 = vand.u32 2147483647, %v598
      %vm644 = vcmp.eq.f32.partialorder %v643, 8.507059e+37
      %v645 = vand.u32 %v598, 2147483648
      %v646 = vor.u32 1.1754944e-38, %v645
      %v647 = vsel %vm644, %v646, %v642
      %v648 = vmul.f32 1.0, %v647
      %v649 = vrcp.pop %v599
      %v650 = vmul.f32 %v599, %v649
      %v651 = vsub.f32 1.0, %v650
      %v652 = vmul.f32 %v649, %v651
      %v653 = vadd.f32 %v649, %v652
      %vm654 = vweird.f32 %v599
      %vm655 = vweird.f32 %v649
      %vm656 = vmor %vm654, %vm655
      %v657 = vsel %vm656, %v649, %v653
      %v658 = vand.u32 2147483647, %v599
      %vm659 = vcmp.eq.f32.partialorder %v658, 8.507059e+37
      %v660 = vand.u32 %v599, 2147483648
      %v661 = vor.u32 1.1754944e-38, %v660
      %v662 = vsel %vm659, %v661, %v657
      %v663 = vmul.f32 1.0, %v662
      %v664 = vrcp.pop %v600
      %v665 = vmul.f32 %v600, %v664
      %v666 = vsub.f32 1.0, %v665
      %v667 = vmul.f32 %v664, %v666
      %v668 = vadd.f32 %v664, %v667
      %vm669 = vweird.f32 %v600
      %vm670 = vweird.f32 %v664
      %vm671 = vmor %vm669, %vm670
      %v672 = vsel %vm671, %v664, %v668
      %v673 = vand.u32 2147483647, %v600
      %vm674 = vcmp.eq.f32.partialorder %v673, 8.507059e+37
      %v675 = vand.u32 %v600, 2147483648
      %v676 = vor.u32 1.1754944e-38, %v675
      %v677 = vsel %vm674, %v676, %v672
      %v678 = vmul.f32 1.0, %v677
      %v679 = vrcp.pop %v601
      %v680 = vmul.f32 %v601, %v679
      %v681 = vsub.f32 1.0, %v680
      %v682 = vmul.f32 %v679, %v681
      %v683 = vadd.f32 %v679, %v682
      %vm684 = vweird.f32 %v601
      %vm685 = vweird.f32 %v679
      %vm686 = vmor %vm684, %vm685
      %v687 = vsel %vm686, %v679, %v683
      %v688 = vand.u32 2147483647, %v601
      %vm689 = vcmp.eq.f32.partialorder %v688, 8.507059e+37
      %v690 = vand.u32 %v601, 2147483648
      %v691 = vor.u32 1.1754944e-38, %v690
      %v692 = vsel %vm689, %v691, %v687
      %v693 = vmul.f32 1.0, %v692
      %v694 = vrcp.pop %v602
      %v695 = vmul.f32 %v602, %v694
      %v696 = vsub.f32 1.0, %v695
      %v697 = vmul.f32 %v694, %v696
      %v698 = vadd.f32 %v694, %v697
      %vm699 = vweird.f32 %v602
      %vm700 = vweird.f32 %v694
      %vm701 = vmor %vm699, %vm700
      %v702 = vsel %vm701, %v694, %v698
      %v703 = vand.u32 2147483647, %v602
      %vm704 = vcmp.eq.f32.partialorder %v703, 8.507059e+37
      %v705 = vand.u32 %v602, 2147483648
      %v706 = vor.u32 1.1754944e-38, %v705
      %v707 = vsel %vm704, %v706, %v702
      %v708 = vmul.f32 1.0, %v707
      %v709 = vrcp.pop %v603
      %v710 = vmul.f32 %v603, %v709
      %v711 = vsub.f32 1.0, %v710
      %v712 = vmul.f32 %v709, %v711
      %v713 = vadd.f32 %v709, %v712
      %vm714 = vweird.f32 %v603
      %vm715 = vweird.f32 %v709
      %vm716 = vmor %vm714, %vm715
      %v717 = vsel %vm716, %v709, %v713
      %v718 = vand.u32 2147483647, %v603
      %vm719 = vcmp.eq.f32.partialorder %v718, 8.507059e+37
      %v720 = vand.u32 %v603, 2147483648
      %v721 = vor.u32 1.1754944e-38, %v720
      %v722 = vsel %vm719, %v721, %v717
      %v723 = vmul.f32 1.0, %v722
      %v724 = vmul.f32 %v618, 1.0614054
      %v725 = vmul.f32 %v633, 1.0614054
      %v726 = vmul.f32 %v648, 1.0614054
      %v727 = vmul.f32 %v663, 1.0614054
      %v728 = vmul.f32 %v678, 1.0614054
      %v729 = vmul.f32 %v693, 1.0614054
      %v730 = vmul.f32 %v708, 1.0614054
      %v731 = vmul.f32 %v723, 1.0614054
      %v732 = vadd.f32 %v724, -1.4531521
      %v733 = vadd.f32 %v725, -1.4531521
      %v734 = vadd.f32 %v726, -1.4531521
      %v735 = vadd.f32 %v727, -1.4531521
      %v736 = vadd.f32 %v728, -1.4531521
      %v737 = vadd.f32 %v729, -1.4531521
      %v738 = vadd.f32 %v730, -1.4531521
      %v739 = vadd.f32 %v731, -1.4531521
      %v740 = vmul.f32 %v732, %v618
      %v741 = vmul.f32 %v733, %v633
      %v742 = vmul.f32 %v734, %v648
      %v743 = vmul.f32 %v735, %v663
      %v744 = vmul.f32 %v736, %v678
      %v745 = vmul.f32 %v737, %v693
      %v746 = vmul.f32 %v738, %v708
      %v747 = vmul.f32 %v739, %v723
      %v748 = vadd.f32 %v740, 1.4214138
      %v749 = vadd.f32 %v741, 1.4214138
      %v750 = vadd.f32 %v742, 1.4214138
      %v751 = vadd.f32 %v743, 1.4214138
      %v752 = vadd.f32 %v744, 1.4214138
      %v753 = vadd.f32 %v745, 1.4214138
      %v754 = vadd.f32 %v746, 1.4214138
      %v755 = vadd.f32 %v747, 1.4214138
      %v756 = vmul.f32 %v748, %v618
      %v757 = vmul.f32 %v749, %v633
      %v758 = vmul.f32 %v750, %v648
      %v759 = vmul.f32 %v751, %v663
      %v760 = vmul.f32 %v752, %v678
      %v761 = vmul.f32 %v753, %v693
      %v762 = vmul.f32 %v754, %v708
      %v763 = vmul.f32 %v755, %v723
      %v764 = vadd.f32 %v756, -0.28449672
      %v765 = vadd.f32 %v757, -0.28449672
      %v766 = vadd.f32 %v758, -0.28449672
      %v767 = vadd.f32 %v759, -0.28449672
      %v768 = vadd.f32 %v760, -0.28449672
      %v769 = vadd.f32 %v761, -0.28449672
      %v770 = vadd.f32 %v762, -0.28449672
      %v771 = vadd.f32 %v763, -0.28449672
      %v772 = vmul.f32 %v764, %v618
      %v773 = vmul.f32 %v765, %v633
      %v774 = vmul.f32 %v766, %v648
      %v775 = vmul.f32 %v767, %v663
      %v776 = vmul.f32 %v768, %v678
      %v777 = vmul.f32 %v769, %v693
      %v778 = vmul.f32 %v770, %v708
      %v779 = vmul.f32 %v771, %v723
      %v780 = vadd.f32 %v772, 0.2548296
      %v781 = vadd.f32 %v773, 0.2548296
      %v782 = vadd.f32 %v774, 0.2548296
      %v783 = vadd.f32 %v775, 0.2548296
      %v784 = vadd.f32 %v776, 0.2548296
      %v785 = vadd.f32 %v777, 0.2548296
      %v786 = vadd.f32 %v778, 0.2548296
      %v787 = vadd.f32 %v779, 0.2548296
      %v788 = vmul.f32 %v780, %v618
      %v789 = vmul.f32 %v781, %v633
      %v790 = vmul.f32 %v782, %v648
      %v791 = vmul.f32 %v783, %v663
      %v792 = vmul.f32 %v784, %v678
      %v793 = vmul.f32 %v785, %v693
      %v794 = vmul.f32 %v786, %v708
      %v795 = vmul.f32 %v787, %v723
      %v796 = vsub.f32 0.0, %v580
      %v797 = vsub.f32 0.0, %v581
      %v798 = vsub.f32 0.0, %v582
      %v799 = vsub.f32 0.0, %v583
      %v800 = vsub.f32 0.0, %v584
      %v801 = vsub.f32 0.0, %v585
      %v802 = vsub.f32 0.0, %v586
      %v803 = vsub.f32 0.0, %v587
      %v804 = vmul.f32 %v796, %v580
      %v805 = vmul.f32 %v797, %v581
      %v806 = vmul.f32 %v798, %v582
      %v807 = vmul.f32 %v799, %v583
      %v808 = vmul.f32 %v800, %v584
      %v809 = vmul.f32 %v801, %v585
      %v810 = vmul.f32 %v802, %v586
      %v811 = vmul.f32 %v803, %v587
      %v812 = vmul.f32 %v804, 1.442695
      %v813 = vpow.pop %v812
      %v814 = vmul.f32 %v805, 1.442695
      %v815 = vpow.pop %v814
      %v816 = vmul.f32 %v806, 1.442695
      %v817 = vpow.pop %v816
      %v818 = vmul.f32 %v807, 1.442695
      %v819 = vpow.pop %v818
      %v820 = vmul.f32 %v808, 1.442695
      %v821 = vpow.pop %v820
      %v822 = vmul.f32 %v809, 1.442695
      %v823 = vpow.pop %v822
      %v824 = vmul.f32 %v810, 1.442695
      %v825 = vpow.pop %v824
      %v826 = vmul.f32 %v811, 1.442695
      %v827 = vpow.pop %v826
      %v828 = vmul.f32 %v788, %v813
      %v829 = vmul.f32 %v789, %v815
      %v830 = vmul.f32 %v790, %v817
      %v831 = vmul.f32 %v791, %v819
      %v832 = vmul.f32 %v792, %v821
      %v833 = vmul.f32 %v793, %v823
      %v834 = vmul.f32 %v794, %v825
      %v835 = vmul.f32 %v795, %v827
      %v836 = vsub.f32 1.0, %v828
      %v837 = vsub.f32 1.0, %v829
      %v838 = vsub.f32 1.0, %v830
      %v839 = vsub.f32 1.0, %v831
      %v840 = vsub.f32 1.0, %v832
      %v841 = vsub.f32 1.0, %v833
      %v842 = vsub.f32 1.0, %v834
      %v843 = vsub.f32 1.0, %v835
      %v844 = vmul.f32 %v572, %v836
      %v845 = vmul.f32 %v573, %v837
      %v846 = vmul.f32 %v574, %v838
      %v847 = vmul.f32 %v575, %v839
      %v848 = vmul.f32 %v576, %v840
      %v849 = vmul.f32 %v577, %v841
      %v850 = vmul.f32 %v578, %v842
      %v851 = vmul.f32 %v579, %v843
      %v852 = vadd.f32 %v844, 1.0
      %v853 = vadd.f32 %v845, 1.0
      %v854 = vadd.f32 %v846, 1.0
      %v855 = vadd.f32 %v847, 1.0
      %v856 = vadd.f32 %v848, 1.0
      %v857 = vadd.f32 %v849, 1.0
      %v858 = vadd.f32 %v850, 1.0
      %v859 = vadd.f32 %v851, 1.0
      %v860 = vmul.f32 %v548, %v852
      %v861 = vmul.f32 %v549, %v853
      %v862 = vmul.f32 %v550, %v854
      %v863 = vmul.f32 %v551, %v855
      %v864 = vmul.f32 %v552, %v856
      %v865 = vmul.f32 %v553, %v857
      %v866 = vmul.f32 %v554, %v858
      %v867 = vmul.f32 %v555, %v859
      %v868 = vpack.c.bf16 %v864, %v860
      %v869 = vpack.c.bf16 %v865, %v861
      %v870 = vpack.c.bf16 %v866, %v862
      %v871 = vpack.c.bf16 %v867, %v863
      %v872 = vld [vmem:[%s3] sm:$0xf]
      %v873 = vld [vmem:[%s3 + $0x4] sm:$0xf]
      %v874 = vld [vmem:[%s3 + $0x8] sm:$0xf]
      %v875 = vld [vmem:[%s3 + $0xc] sm:$0xf]
      %v876 = vld [vmem:[%s3 + $0x10] sm:$0xf]
      %v877 = vld [vmem:[%s3 + $0x14] sm:$0xf]
      %v878 = vld [vmem:[%s3 + $0x18] sm:$0xf]
      %v879 = vld [vmem:[%s3 + $0x1c] sm:$0xf]
      %v880 = vld [vmem:[%s3 + $0x20] sm:$0xf]
      %v881 = vld [vmem:[%s3 + $0x24] sm:$0xf]
      %v882 = vld [vmem:[%s3 + $0x28] sm:$0xf]
      %v883 = vld [vmem:[%s3 + $0x2c] sm:$0xf]
      %v884 = vld [vmem:[%s3 + $0x30] sm:$0xf]
      %v885 = vld [vmem:[%s3 + $0x34] sm:$0xf]
      %v886 = vld [vmem:[%s3 + $0x38] sm:$0xf]
      %v887 = vld [vmem:[%s3 + $0x3c] sm:$0xf]
      %v888 = vld [vmem:[%s3 + $0x40] sm:$0xf]
      %v889 = vld [vmem:[%s3 + $0x44] sm:$0xf]
      %v890 = vld [vmem:[%s3 + $0x48] sm:$0xf]
      %v891 = vld [vmem:[%s3 + $0x4c] sm:$0xf]
      %v892 = vld [vmem:[%s3 + $0x50] sm:$0xf]
      %v893 = vld [vmem:[%s3 + $0x54] sm:$0xf]
      %v894 = vld [vmem:[%s3 + $0x58] sm:$0xf]
      %v895 = vld [vmem:[%s3 + $0x5c] sm:$0xf]
      %v896 = vld [vmem:[%s3 + $0x60] sm:$0xf]
      %v897 = vld [vmem:[%s3 + $0x64] sm:$0xf]
      %v898 = vld [vmem:[%s3 + $0x68] sm:$0xf]
      %v899 = vld [vmem:[%s3 + $0x6c] sm:$0xf]
      %v900 = vld [vmem:[%s3 + $0x70] sm:$0xf]
      %v901 = vld [vmem:[%s3 + $0x74] sm:$0xf]
      %v902 = vld [vmem:[%s3 + $0x78] sm:$0xf]
      %v903 = vld [vmem:[%s3 + $0x7c] sm:$0xf]
      %v904 = vld [vmem:[%s3 + $0x80] sm:$0xf]
      %v905 = vld [vmem:[%s3 + $0x84] sm:$0xf]
      %v906 = vld [vmem:[%s3 + $0x88] sm:$0xf]
      %v907 = vld [vmem:[%s3 + $0x8c] sm:$0xf]
      %v908 = vld [vmem:[%s3 + $0x90] sm:$0xf]
      %v909 = vld [vmem:[%s3 + $0x94] sm:$0xf]
      %v910 = vld [vmem:[%s3 + $0x98] sm:$0xf]
      %v911 = vld [vmem:[%s3 + $0x9c] sm:$0xf]
      %v912 = vld [vmem:[%s3 + $0xa0] sm:$0xf]
      %v913 = vld [vmem:[%s3 + $0xa4] sm:$0xf]
      %v914 = vld [vmem:[%s3 + $0xa8] sm:$0xf]
      %v915 = vld [vmem:[%s3 + $0xac] sm:$0xf]
      %v916 = vld [vmem:[%s3 + $0xb0] sm:$0xf]
      %v917 = vld [vmem:[%s3 + $0xb4] sm:$0xf]
      %v918 = vld [vmem:[%s3 + $0xb8] sm:$0xf]
      %v919 = vld [vmem:[%s3 + $0xbc] sm:$0xf]
      %v920 = vld [vmem:[%s3 + $0xc0] sm:$0xf]
      %v921 = vld [vmem:[%s3 + $0xc4] sm:$0xf]
      %v922 = vld [vmem:[%s3 + $0xc8] sm:$0xf]
      %v923 = vld [vmem:[%s3 + $0xcc] sm:$0xf]
      %v924 = vld [vmem:[%s3 + $0xd0] sm:$0xf]
      %v925 = vld [vmem:[%s3 + $0xd4] sm:$0xf]
      %v926 = vld [vmem:[%s3 + $0xd8] sm:$0xf]
      %v927 = vld [vmem:[%s3 + $0xdc] sm:$0xf]
      %v928 = vld [vmem:[%s3 + $0xe0] sm:$0xf]
      %v929 = vld [vmem:[%s3 + $0xe4] sm:$0xf]
      %v930 = vld [vmem:[%s3 + $0xe8] sm:$0xf]
      %v931 = vld [vmem:[%s3 + $0xec] sm:$0xf]
      %v932 = vld [vmem:[%s3 + $0xf0] sm:$0xf]
      %v933 = vld [vmem:[%s3 + $0xf4] sm:$0xf]
      %v934 = vld [vmem:[%s3 + $0xf8] sm:$0xf]
      %v935 = vld [vmem:[%s3 + $0xfc] sm:$0xf]
      %v936 = vld [vmem:[%s4] sm:$0x1]
      %v938 = vperm.slane %v936, 0
      %v1004 = vunpack.c.l.b16 %v872
      %v1005 = vunpack.c.l.b16 %v873
      %v1006 = vunpack.c.l.b16 %v874
      %v1007 = vunpack.c.l.b16 %v875
      %v1008 = vunpack.c.l.b16 %v876
      %v1009 = vunpack.c.l.b16 %v877
      %v1010 = vunpack.c.l.b16 %v878
      %v1011 = vunpack.c.l.b16 %v879
      %v1012 = vunpack.c.l.b16 %v880
      %v1013 = vunpack.c.l.b16 %v881
      %v1014 = vunpack.c.l.b16 %v882
      %v1015 = vunpack.c.l.b16 %v883
      %v1016 = vunpack.c.l.b16 %v884
      %v1017 = vunpack.c.l.b16 %v885
      %v1018 = vunpack.c.l.b16 %v886
      %v1019 = vunpack.c.l.b16 %v887
      %v1020 = vunpack.c.l.b16 %v888
      %v1021 = vunpack.c.l.b16 %v889
      %v1022 = vunpack.c.l.b16 %v890
      %v1023 = vunpack.c.l.b16 %v891
      %v1024 = vunpack.c.l.b16 %v892
      %v1025 = vunpack.c.l.b16 %v893
      %v1026 = vunpack.c.l.b16 %v894
      %v1027 = vunpack.c.l.b16 %v895
      %v1028 = vunpack.c.l.b16 %v896
      %v1029 = vunpack.c.l.b16 %v897
      %v1030 = vunpack.c.l.b16 %v898
      %v1031 = vunpack.c.l.b16 %v899
      %v1032 = vunpack.c.l.b16 %v900
      %v1033 = vunpack.c.l.b16 %v901
      %v1034 = vunpack.c.l.b16 %v902
      %v1035 = vunpack.c.l.b16 %v903
      %v1036 = vunpack.c.l.b16 %v904
      %v1037 = vunpack.c.l.b16 %v905
      %v1038 = vunpack.c.l.b16 %v906
      %v1039 = vunpack.c.l.b16 %v907
      %v1040 = vunpack.c.l.b16 %v908
      %v1041 = vunpack.c.l.b16 %v909
      %v1042 = vunpack.c.l.b16 %v910
      %v1043 = vunpack.c.l.b16 %v911
      %v1044 = vunpack.c.l.b16 %v912
      %v1045 = vunpack.c.l.b16 %v913
      %v1046 = vunpack.c.l.b16 %v914
      %v1047 = vunpack.c.l.b16 %v915
      %v1048 = vunpack.c.l.b16 %v916
      %v1049 = vunpack.c.l.b16 %v917
      %v1050 = vunpack.c.l.b16 %v918
      %v1051 = vunpack.c.l.b16 %v919
      %v1052 = vunpack.c.l.b16 %v920
      %v1053 = vunpack.c.l.b16 %v921
      %v1054 = vunpack.c.l.b16 %v922
      %v1055 = vunpack.c.l.b16 %v923
      %v1056 = vunpack.c.l.b16 %v924
      %v1057 = vunpack.c.l.b16 %v925
      %v1058 = vunpack.c.l.b16 %v926
      %v1059 = vunpack.c.l.b16 %v927
      %v1060 = vunpack.c.l.b16 %v928
      %v1061 = vunpack.c.l.b16 %v929
      %v1062 = vunpack.c.l.b16 %v930
      %v1063 = vunpack.c.l.b16 %v931
      %v1064 = vunpack.c.l.b16 %v932
      %v1065 = vunpack.c.l.b16 %v933
      %v1066 = vunpack.c.l.b16 %v934
      %v1067 = vunpack.c.l.b16 %v935
      %v1068 = vpack.c.b16 %v1005, %v1004
      %v1069 = vpack.c.b16 %v1007, %v1006
      %v1070 = vpack.c.b16 %v1009, %v1008
      %v1071 = vpack.c.b16 %v1011, %v1010
      %v1072 = vpack.c.b16 %v1013, %v1012
      %v1073 = vpack.c.b16 %v1015, %v1014
      %v1074 = vpack.c.b16 %v1017, %v1016
      %v1075 = vpack.c.b16 %v1019, %v1018
      %v1076 = vpack.c.b16 %v1021, %v1020
      %v1077 = vpack.c.b16 %v1023, %v1022
      %v1078 = vpack.c.b16 %v1025, %v1024
      %v1079 = vpack.c.b16 %v1027, %v1026
      %v1080 = vpack.c.b16 %v1029, %v1028
      %v1081 = vpack.c.b16 %v1031, %v1030
      %v1082 = vpack.c.b16 %v1033, %v1032
      %v1083 = vpack.c.b16 %v1035, %v1034
      %v1084 = vpack.c.b16 %v1037, %v1036
      %v1085 = vpack.c.b16 %v1039, %v1038
      %v1086 = vpack.c.b16 %v1041, %v1040
      %v1087 = vpack.c.b16 %v1043, %v1042
      %v1088 = vpack.c.b16 %v1045, %v1044
      %v1089 = vpack.c.b16 %v1047, %v1046
      %v1090 = vpack.c.b16 %v1049, %v1048
      %v1091 = vpack.c.b16 %v1051, %v1050
      %v1092 = vpack.c.b16 %v1053, %v1052
      %v1093 = vpack.c.b16 %v1055, %v1054
      %v1094 = vpack.c.b16 %v1057, %v1056
      %v1095 = vpack.c.b16 %v1059, %v1058
      %v1096 = vpack.c.b16 %v1061, %v1060
      %v1097 = vpack.c.b16 %v1063, %v1062
      %v1098 = vpack.c.b16 %v1065, %v1064
      %v1099 = vpack.c.b16 %v1067, %v1066
      %1132 = vmatpush.bf16.msra.mxu0 %v1075
      %1133 = vmatpush.bf16.msra.mxu0 %v1074
      %1134 = vmatpush.bf16.msra.mxu0 %v1073
      %1135 = vmatpush.bf16.msra.mxu0 %v1072
      %1136 = vmatpush.bf16.msra.mxu0 %v1071
      %1137 = vmatpush.bf16.msra.mxu0 %v1070
      %1138 = vmatpush.bf16.msra.mxu0 %v1069
      %1139 = vmatpush.bf16.msra.mxu0 %v1068
      %1140 = vmatmul.bf16.gmra.mxu0 %v868
      %v1141 = vpop.f32.mrf.mxu0
      %v1142 = vadd.f32 %v938, %v1141
      %v1143 = vpop.f32.mrf.mxu0
      %v1144 = vadd.f32 %v938, %v1143
      %1145 = vdwg.mxu0
      %1146 = vmatpush.bf16.msra.mxu0 %v1083
      %1147 = vmatpush.bf16.msra.mxu0 %v1082
      %1148 = vmatpush.bf16.msra.mxu0 %v1081
      %1149 = vmatpush.bf16.msra.mxu0 %v1080
      %1150 = vmatpush.bf16.msra.mxu0 %v1079
      %1151 = vmatpush.bf16.msra.mxu0 %v1078
      %1152 = vmatpush.bf16.msra.mxu0 %v1077
      %1153 = vmatpush.bf16.msra.mxu0 %v1076
      %1154 = vmatmul.bf16.gmra.mxu0 %v869
      %v1155 = vpop.f32.mrf.mxu0
      %v1156 = vadd.f32 %v1142, %v1155
      %v1157 = vpop.f32.mrf.mxu0
      %v1158 = vadd.f32 %v1144, %v1157
      %1159 = vdwg.mxu0
      %1160 = vmatpush.bf16.msra.mxu0 %v1091
      %1161 = vmatpush.bf16.msra.mxu0 %v1090
      %1162 = vmatpush.bf16.msra.mxu0 %v1089
      %1163 = vmatpush.bf16.msra.mxu0 %v1088
      %1164 = vmatpush.bf16.msra.mxu0 %v1087
      %1165 = vmatpush.bf16.msra.mxu0 %v1086
      %1166 = vmatpush.bf16.msra.mxu0 %v1085
      %1167 = vmatpush.bf16.msra.mxu0 %v1084
      %1168 = vmatmul.bf16.gmra.mxu0 %v870
      %v1169 = vpop.f32.mrf.mxu0
      %v1170 = vadd.f32 %v1156, %v1169
      %v1171 = vpop.f32.mrf.mxu0
      %v1172 = vadd.f32 %v1158, %v1171
      %1173 = vdwg.mxu0
      %1174 = vmatpush.bf16.msra.mxu0 %v1099
      %1175 = vmatpush.bf16.msra.mxu0 %v1098
      %1176 = vmatpush.bf16.msra.mxu0 %v1097
      %1177 = vmatpush.bf16.msra.mxu0 %v1096
      %1178 = vmatpush.bf16.msra.mxu0 %v1095
      %1179 = vmatpush.bf16.msra.mxu0 %v1094
      %1180 = vmatpush.bf16.msra.mxu0 %v1093
      %1181 = vmatpush.bf16.msra.mxu0 %v1092
      %1182 = vmatmul.bf16.gmra.mxu0 %v871
      %v1183 = vpop.f32.mrf.mxu0
      %v1184 = vadd.f32 %v1170, %v1183
      %v1185 = vpop.f32.mrf.mxu0
      %v1186 = vadd.f32 %v1172, %v1185
      %1187 = vdwg.mxu0
      %v1188 = vunpack.c.l.bf16 %v282
      %v1189 = vunpack.c.l.bf16 %v283
      %v1190 = vadd.f32 %v1184, %v1188
      %v1191 = vadd.f32 %v1186, %v1189
      %v1192 = vld [vmem:[%s5] sm:$0x1]
      %v1193 = vld [vmem:[%s6] sm:$0x1]
      %1194 = vadd.xlane.f32.xlu0 %v1190
      %v1195 = vpop.xlane.xlu0 %1194
      %1196 = vadd.xlane.f32.xlu0 %v1191
      %v1197 = vpop.xlane.xlu0 %1196
      %v1198 = vrcp.pop 128.0
      %v1199 = vmul.f32 128.0, %v1198
      %v1200 = vsub.f32 1.0, %v1199
      %v1201 = vmul.f32 %v1198, %v1200
      %v1202 = vadd.f32 %v1198, %v1201
      %vm1203 = vweird.f32 %v1198
      %v1204 = vsel %vm1203, %v1198, %v1202
      %v1205 = vmul.f32 %v1195, %v1204
      %v1206 = vmul.f32 %v1197, %v1204
      %v1207 = vmul.f32 %v1190, %v1190
      %v1208 = vmul.f32 %v1191, %v1191
      %1209 = vadd.xlane.f32.xlu0 %v1207
      %v1210 = vpop.xlane.xlu0 %1209
      %1211 = vadd.xlane.f32.xlu0 %v1208
      %v1212 = vpop.xlane.xlu0 %1211
      %v1213 = vmul.f32 %v1210, %v1204
      %v1214 = vmul.f32 %v1212, %v1204
      %v1215 = vmul.f32 %v1205, %v1205
      %v1216 = vmul.f32 %v1206, %v1206
      %v1217 = vsub.f32 %v1213, %v1215
      %v1218 = vsub.f32 %v1214, %v1216
      %v1219 = vmax.f32 %v1217, 0.0
      %v1220 = vmax.f32 %v1218, 0.0
      %v1221 = vsub.f32 %v1190, %v1205
      %v1222 = vsub.f32 %v1191, %v1206
      %v1223 = vadd.f32 %v1219, 1e-12
      %v1224 = vadd.f32 %v1220, 1e-12
      %v1225 = vrsqrt.pop %v1223
      %v1226 = vmul.f32 %v1225, %v1223
      %v1227 = vmul.f32 %v1226, %v1225
      %v1228 = vmul.f32 0.5, %v1227
      %v1229 = vsub.f32 1.5, %v1228
      %v1230 = vmul.f32 %v1225, %v1229
      %vm1231 = vweird.f32 %v1223
      %vm1232 = vweird.f32 %v1225
      %vm1233 = vmor %vm1231, %vm1232
      %v1234 = vsel %vm1233, %v1225, %v1230
      %v1235 = vrsqrt.pop %v1224
      %v1236 = vmul.f32 %v1235, %v1224
      %v1237 = vmul.f32 %v1236, %v1235
      %v1238 = vmul.f32 0.5, %v1237
      %v1239 = vsub.f32 1.5, %v1238
      %v1240 = vmul.f32 %v1235, %v1239
      %vm1241 = vweird.f32 %v1224
      %vm1242 = vweird.f32 %v1235
      %vm1243 = vmor %vm1241, %vm1242
      %v1244 = vsel %vm1243, %v1235, %v1240
      %v1245 = vmul.f32 %v1221, %v1234
      %v1246 = vmul.f32 %v1222, %v1244
      %v1248 = vperm.slane %v1192, 0
      %v1250 = vmul.f32 %v1245, %v1248
      %v1251 = vmul.f32 %v1246, %v1248
      %v1253 = vperm.slane %v1193, 0
      %v1255 = vadd.f32 %v1250, %v1253
      %v1256 = vadd.f32 %v1251, %v1253
      %v1257 = vpack.c.bf16 %v1255, %v1255
      %v1258 = vpack.c.bf16 %v1256, %v1256
      %1259 = vst [vmem:[%s280] sm:$0xf] %v1257
      %1260 = vst [vmem:[%s280 + $0x4] sm:$0xf] %v1258
      %s1261 = smul.u32 2, %s18
      %p1262 = scmp.lt.s32.totalorder %s1261, 3
      %s1263 = scalar_select %p1262, %s1261, 3
      %s1264 = smul.addr %s1263, 4
      %s1265 = scalar_lea.vmem %s7, %s1264
      // Predicated region
      $region49: #{bert_forward.8} parent=47 // pred_check
        %p1266 = pneg %p188
      $region50: #{bert_forward.8} parent=47 // pred_check_branch
        %1268 = sbr.rel (%p1266) target = $region52
      $region51: #{bert_forward.8} parent=47 // pred_region
        %s1269 = smul.u32 2, %s18
      $region52: #{bert_forward.8} parent=47 // pred_fallthru
        _
    $region48: #{bert_forward.8} parent=5 // pred_fallthru
      _
    %p1270 = scmp.le.s32.totalorder 2, %s13
    // Predicated region
    $region53: #{bert_forward.8} parent=5 // pred_check
      %p1271 = pneg %p1270
    $region54: #{bert_forward.8} parent=5 // pred_check_branch
      %1273 = sbr.rel (%p1271) target = $region56
    $region55: #{bert_forward.8} parent=5 // pred_region
      %s1274 = ssub.s32 %s13, 2
      // Predicated region
      $region57: #{bert_forward.8} parent=55 // pred_check
        %p1275 = pneg %p194
      $region58: #{bert_forward.8} parent=55 // pred_check_branch
        %1277 = sbr.rel (%p1275) target = $region60
      $region59: #{bert_forward.8} parent=55 // pred_region
        %s1278 = smul.u32 2, %s19
        %p1279 = scmp.lt.s32.totalorder %s1278, 3
        %s1280 = scalar_select %p1279, %s1278, 3
        %s1281 = smul.addr %s1280, 4
        %s1282 = scalar_lea.vmem %s7, %s1281
      $region60: #{bert_forward.8} parent=55 // pred_fallthru
        _
    $region56: #{bert_forward.8} parent=5 // pred_fallthru
      _
  $region6: #{bert_forward.8} parent=0 // loop_footer
    %s17 = sadd.s32 1, %s13
  $region7: #{bert_forward.8} parent=0 // loop_footer_branch
    %12 = sbr.rel target = $region3
  $region8: #{bert_forward.8} parent=0 // loop_exit
    _

// kernel: bert_forward.7
$region0: #{bert_forward.7}
  #allocation0 [shape = 'u32[]', space=smem, size = 0x4, offset = 0x4, fixed_abs, tag = 'smem constant byte address 0x4 - core index']
  #allocation1 [shape = 'u32[72,128]{1,0:T(1,128)}', space=vmem, size = 0x9000, scoped, tag = 'internal scratch']
  %s0 = inlined_call_operand.vmem [shape: bf16[2,16,128], index: 0, kind: input, shape index: {}]
  %s1 = inlined_call_operand.vmem [shape: f32[2,1,16], index: 1, kind: input, shape index: {}]
  %s2 = inlined_call_operand.vmem [shape: bf16[128,384], index: 2, kind: input, shape index: {}]
  %s3 = inlined_call_operand.vmem [shape: f32[1,384], index: 3, kind: input, shape index: {}]
  %s4 = inlined_call_operand.hbm [shape: bf16[128,128], index: 4, kind: input, shape index: {}]
  %s5 = inlined_call_operand.vmem [shape: f32[1,128], index: 5, kind: input, shape index: {}]
  %s6 = inlined_call_operand.vmem [shape: f32[1,128], index: 6, kind: input, shape index: {}]
  %s7 = inlined_call_operand.vmem [shape: f32[1,128], index: 7, kind: input, shape index: {}]
  %s8 = inlined_call_operand.vmem [shape: bf16[2,16,128], index: 8, kind: output, shape index: {}]
  %s9 = sld [smem:[#allocation0]]
  $region69: #{bert_forward.7} parent=0
    _
  %s11 = ssub.s32 1, %s9
  %s12 = scalar_select 0, %s11, %s9
  $region1: #{bert_forward.7} parent=0
    #allocation2 [shape = 'u8[32768]{0}', space=vmem, size = 0x8000, scoped, tag = 'input window, operand 4, single buffered']
    #allocation3 [shape = 's32[2]{0}', space=sflag, size = 0x8, scoped, tag = 'scoped memory for bert_forward.7']
    %13 = vsyncpa [#allocation3], 0
    loop: start=0, step=1, limit=4
    $region2: #{bert_forward.7} parent=1 // loop_pre_header
      _
    $region3: #{bert_forward.7} parent=1 // loop_header
      %s15 = sphi 0, %s19
      %p16 = scmp.ge.s32.totalorder %s15, 4
      %s25 = sphi 0, %s27
      %s28 = sphi 0, %s25
      %s29 = sphi 0, %s28
      %s45 = sphi 0, %s29
      %s51 = sphi 0, %s53
      %s54 = sphi 0, %s51
      %s55 = sphi 0, %s54
      %s71 = sphi 0, %s55
      %s75 = sphi 0, %s75
      %s77 = sphi 0, %s75
      %s78 = sphi 0, %s77
      %s92 = sphi 0, %s78
      %s96 = sphi 0, %s96
      %s98 = sphi 0, %s96
      %s99 = sphi 0, %s98
      %s113 = sphi 0, %s99
      %s117 = sphi 0, %s117
      %s119 = sphi 0, %s117
      %s120 = sphi 0, %s119
      %s134 = sphi 0, %s120
      %s138 = sphi 0, %s138
      %s140 = sphi 0, %s138
      %s141 = sphi 0, %s140
      %s155 = sphi 0, %s141
      %s159 = sphi 0, %s159
      %s161 = sphi 0, %s159
      %s162 = sphi 0, %s161
      %s176 = sphi 0, %s162
      %s180 = sphi 0, %s180
      %s182 = sphi 0, %s180
      %s183 = sphi 0, %s182
      %s197 = sphi 0, %s183
      %s203 = sphi 0, %s205
      %s206 = sphi 0, %s203
      %s207 = sphi 0, %s206
      %s223 = sphi 0, %s207
    $region4: #{bert_forward.7} parent=1 // loop_header_branch
      %18 = sbr.rel (%p16) target = $region8
    $region5: #{bert_forward.7} parent=1 // loop_body
      %s20 = ssub.s32 %s15, 1
      %s21 = ssub.s32 %s15, 2
      %s22 = sadd.s32 %s15, 1
      %s23 = ssub.s32 %s15, %s22
      %p24 = scmp.eq.s32.totalorder %s23, 0
      %s26 = sadd.s32 %s25, 1
      %s27 = scalar_select %p24, %s25, %s26
      %p30 = pneg %p24
      %p31 = scmp.eq.s32.totalorder %s15, 1
      %p32 = por %p30, %p31
      %p33 = scmp.ne.s32.totalorder %s25, %s28
      %p34 = scmp.eq.s32.totalorder %s15, 0
      %p35 = por %p33, %p34
      %p36 = scmp.ne.s32.totalorder %s25, %s28
      %p37 = scmp.eq.s32.totalorder %s20, 1
      %p38 = por %p36, %p37
      %p39 = scmp.ne.s32.totalorder %s28, %s29
      %p40 = scmp.eq.s32.totalorder %s20, 0
      %p41 = por %p39, %p40
      %p42 = scmp.ne.s32.totalorder %s28, %s29
      %p43 = scmp.eq.s32.totalorder %s21, 1
      %p44 = por %p42, %p43
      %p46 = scmp.ne.s32.totalorder %s29, %s45
      %p47 = scmp.eq.s32.totalorder %s21, 0
      %p48 = por %p46, %p47
      %s49 = ssub.s32 %s15, %s22
      %p50 = scmp.eq.s32.totalorder %s49, 0
      %s52 = sadd.s32 %s51, 1
      %s53 = scalar_select %p50, %s51, %s52
      %p56 = pneg %p50
      %p57 = scmp.eq.s32.totalorder %s15, 1
      %p58 = por %p56, %p57
      %p59 = scmp.ne.s32.totalorder %s51, %s54
      %p60 = scmp.eq.s32.totalorder %s15, 0
      %p61 = por %p59, %p60
      %p62 = scmp.ne.s32.totalorder %s51, %s54
      %p63 = scmp.eq.s32.totalorder %s20, 1
      %p64 = por %p62, %p63
      %p65 = scmp.ne.s32.totalorder %s54, %s55
      %p66 = scmp.eq.s32.totalorder %s20, 0
      %p67 = por %p65, %p66
      %p68 = scmp.ne.s32.totalorder %s54, %s55
      %p69 = scmp.eq.s32.totalorder %s21, 1
      %p70 = por %p68, %p69
      %p72 = scmp.ne.s32.totalorder %s55, %s71
      %p73 = scmp.eq.s32.totalorder %s21, 0
      %p74 = por %p72, %p73
      %s76 = sadd.s32 %s75, 1
      %p79 = scmp.eq.s32.totalorder %s15, 1
      %p80 = scmp.ne.s32.totalorder %s75, %s77
      %p81 = scmp.eq.s32.totalorder %s15, 0
      %p82 = por %p80, %p81
      %p83 = scmp.ne.s32.totalorder %s75, %s77
      %p84 = scmp.eq.s32.totalorder %s20, 1
      %p85 = por %p83, %p84
      %p86 = scmp.ne.s32.totalorder %s77, %s78
      %p87 = scmp.eq.s32.totalorder %s20, 0
      %p88 = por %p86, %p87
      %p89 = scmp.ne.s32.totalorder %s77, %s78
      %p90 = scmp.eq.s32.totalorder %s21, 1
      %p91 = por %p89, %p90
      %p93 = scmp.ne.s32.totalorder %s78, %s92
      %p94 = scmp.eq.s32.totalorder %s21, 0
      %p95 = por %p93, %p94
      %s97 = sadd.s32 %s96, 1
      %p100 = scmp.eq.s32.totalorder %s15, 1
      %p101 = scmp.ne.s32.totalorder %s96, %s98
      %p102 = scmp.eq.s32.totalorder %s15, 0
      %p103 = por %p101, %p102
      %p104 = scmp.ne.s32.totalorder %s96, %s98
      %p105 = scmp.eq.s32.totalorder %s20, 1
      %p106 = por %p104, %p105
      %p107 = scmp.ne.s32.totalorder %s98, %s99
      %p108 = scmp.eq.s32.totalorder %s20, 0
      %p109 = por %p107, %p108
      %p110 = scmp.ne.s32.totalorder %s98, %s99
      %p111 = scmp.eq.s32.totalorder %s21, 1
      %p112 = por %p110, %p111
      %p114 = scmp.ne.s32.totalorder %s99, %s113
      %p115 = scmp.eq.s32.totalorder %s21, 0
      %p116 = por %p114, %p115
      %s118 = sadd.s32 %s117, 1
      %p121 = scmp.eq.s32.totalorder %s15, 1
      %p122 = scmp.ne.s32.totalorder %s117, %s119
      %p123 = scmp.eq.s32.totalorder %s15, 0
      %p124 = por %p122, %p123
      %p125 = scmp.ne.s32.totalorder %s117, %s119
      %p126 = scmp.eq.s32.totalorder %s20, 1
      %p127 = por %p125, %p126
      %p128 = scmp.ne.s32.totalorder %s119, %s120
      %p129 = scmp.eq.s32.totalorder %s20, 0
      %p130 = por %p128, %p129
      %p131 = scmp.ne.s32.totalorder %s119, %s120
      %p132 = scmp.eq.s32.totalorder %s21, 1
      %p133 = por %p131, %p132
      %p135 = scmp.ne.s32.totalorder %s120, %s134
      %p136 = scmp.eq.s32.totalorder %s21, 0
      %p137 = por %p135, %p136
      %s139 = sadd.s32 %s138, 1
      %p142 = scmp.eq.s32.totalorder %s15, 1
      %p143 = scmp.ne.s32.totalorder %s138, %s140
      %p144 = scmp.eq.s32.totalorder %s15, 0
      %p145 = por %p143, %p144
      %p146 = scmp.ne.s32.totalorder %s138, %s140
      %p147 = scmp.eq.s32.totalorder %s20, 1
      %p148 = por %p146, %p147
      %p149 = scmp.ne.s32.totalorder %s140, %s141
      %p150 = scmp.eq.s32.totalorder %s20, 0
      %p151 = por %p149, %p150
      %p152 = scmp.ne.s32.totalorder %s140, %s141
      %p153 = scmp.eq.s32.totalorder %s21, 1
      %p154 = por %p152, %p153
      %p156 = scmp.ne.s32.totalorder %s141, %s155
      %p157 = scmp.eq.s32.totalorder %s21, 0
      %p158 = por %p156, %p157
      %s160 = sadd.s32 %s159, 1
      %p163 = scmp.eq.s32.totalorder %s15, 1
      %p164 = scmp.ne.s32.totalorder %s159, %s161
      %p165 = scmp.eq.s32.totalorder %s15, 0
      %p166 = por %p164, %p165
      %p167 = scmp.ne.s32.totalorder %s159, %s161
      %p168 = scmp.eq.s32.totalorder %s20, 1
      %p169 = por %p167, %p168
      %p170 = scmp.ne.s32.totalorder %s161, %s162
      %p171 = scmp.eq.s32.totalorder %s20, 0
      %p172 = por %p170, %p171
      %p173 = scmp.ne.s32.totalorder %s161, %s162
      %p174 = scmp.eq.s32.totalorder %s21, 1
      %p175 = por %p173, %p174
      %p177 = scmp.ne.s32.totalorder %s162, %s176
      %p178 = scmp.eq.s32.totalorder %s21, 0
      %p179 = por %p177, %p178
      %s181 = sadd.s32 %s180, 1
      %p184 = scmp.eq.s32.totalorder %s15, 1
      %p185 = scmp.ne.s32.totalorder %s180, %s182
      %p186 = scmp.eq.s32.totalorder %s15, 0
      %p187 = por %p185, %p186
      %p188 = scmp.ne.s32.totalorder %s180, %s182
      %p189 = scmp.eq.s32.totalorder %s20, 1
      %p190 = por %p188, %p189
      %p191 = scmp.ne.s32.totalorder %s182, %s183
      %p192 = scmp.eq.s32.totalorder %s20, 0
      %p193 = por %p191, %p192
      %p194 = scmp.ne.s32.totalorder %s182, %s183
      %p195 = scmp.eq.s32.totalorder %s21, 1
      %p196 = por %p194, %p195
      %p198 = scmp.ne.s32.totalorder %s183, %s197
      %p199 = scmp.eq.s32.totalorder %s21, 0
      %p200 = por %p198, %p199
      %s201 = ssub.s32 %s15, %s22
      %p202 = scmp.eq.s32.totalorder %s201, 0
      %s204 = sadd.s32 %s203, 1
      %s205 = scalar_select %p202, %s203, %s204
      %p208 = pneg %p202
      %p209 = scmp.eq.s32.totalorder %s15, 1
      %p210 = por %p208, %p209
      %p211 = scmp.ne.s32.totalorder %s203, %s206
      %p212 = scmp.eq.s32.totalorder %s15, 0
      %p213 = por %p211, %p212
      %p214 = scmp.ne.s32.totalorder %s203, %s206
      %p215 = scmp.eq.s32.totalorder %s20, 1
      %p216 = por %p214, %p215
      %p217 = scmp.ne.s32.totalorder %s206, %s207
      %p218 = scmp.eq.s32.totalorder %s20, 0
      %p219 = por %p217, %p218
      %p220 = scmp.ne.s32.totalorder %s206, %s207
      %p221 = scmp.eq.s32.totalorder %s21, 1
      %p222 = por %p220, %p221
      %p224 = scmp.ne.s32.totalorder %s207, %s223
      %p225 = scmp.eq.s32.totalorder %s21, 0
      %p226 = por %p224, %p225
      %p227 = scmp.le.s32.totalorder 1, %s15
      %p228 = scmp.lt.s32.totalorder %s15, 3
      %p229 = pnand %p227, %p228
      %p230 = pneg %p229
      // Predicated region
      $region9: #{bert_forward.7} parent=5 // pred_check
        _
      $region10: #{bert_forward.7} parent=5 // pred_check_branch
        %232 = sbr.rel (%p229) target = $region12
      $region11: #{bert_forward.7} parent=5 // pred_region
        %s233 = ssub.s32 %s15, 1
        // Predicated region
        $region13: #{bert_forward.7} parent=11 // pred_check
          %p234 = pneg %p88
        $region14: #{bert_forward.7} parent=11 // pred_check_branch
          %236 = sbr.rel (%p234) target = $region16
        $region15: #{bert_forward.7} parent=11 // pred_region
          _
        $region16: #{bert_forward.7} parent=11 // pred_fallthru
          _
        // Predicated region
        $region17: #{bert_forward.7} parent=11 // pred_check
          %p237 = pneg %p109
        $region18: #{bert_forward.7} parent=11 // pred_check_branch
          %239 = sbr.rel (%p237) target = $region20
        $region19: #{bert_forward.7} parent=11 // pred_region
          _
        $region20: #{bert_forward.7} parent=11 // pred_fallthru
          _
        // Predicated region
        $region21: #{bert_forward.7} parent=11 // pred_check
          %p240 = pneg %p130
        $region22: #{bert_forward.7} parent=11 // pred_check_branch
          %242 = sbr.rel (%p240) target = $region24
        $region23: #{bert_forward.7} parent=11 // pred_region
          %244 = vsyncadd [#allocation3], 0
          %s245 = sshll.u32 %s4, 4
          %s246 = int_to_ptr.hbm [resolvable:$true] %s245
          %s247 = sshll.u32 [#allocation2], 4
          %s248 = int_to_ptr.vmem [resolvable:$true] %s247
          %253 = dma.hbm_to_vmem [thread:$0]  %s246, 1024, %s248, [#allocation3], 64, 64, 4
        $region24: #{bert_forward.7} parent=11 // pred_fallthru
          _
        // Predicated region
        $region25: #{bert_forward.7} parent=11 // pred_check
          %p254 = pneg %p151
        $region26: #{bert_forward.7} parent=11 // pred_check_branch
          %256 = sbr.rel (%p254) target = $region28
        $region27: #{bert_forward.7} parent=11 // pred_region
          _
        $region28: #{bert_forward.7} parent=11 // pred_fallthru
          _
        // Predicated region
        $region29: #{bert_forward.7} parent=11 // pred_check
          %p257 = pneg %p172
        $region30: #{bert_forward.7} parent=11 // pred_check_branch
          %259 = sbr.rel (%p257) target = $region32
        $region31: #{bert_forward.7} parent=11 // pred_region
          _
        $region32: #{bert_forward.7} parent=11 // pred_fallthru
          _
        // Predicated region
        $region33: #{bert_forward.7} parent=11 // pred_check
          %p260 = pneg %p193
        $region34: #{bert_forward.7} parent=11 // pred_check_branch
          %262 = sbr.rel (%p260) target = $region36
        $region35: #{bert_forward.7} parent=11 // pred_region
          _
        $region36: #{bert_forward.7} parent=11 // pred_fallthru
          _
      $region12: #{bert_forward.7} parent=5 // pred_fallthru
        _
      %p263 = scmp.lt.s32.totalorder %s15, 2
      // Predicated region
      $region37: #{bert_forward.7} parent=5 // pred_check
        %p264 = pneg %p263
      $region38: #{bert_forward.7} parent=5 // pred_check_branch
        %266 = sbr.rel (%p264) target = $region40
      $region39: #{bert_forward.7} parent=5 // pred_region
        // Predicated region
        $region41: #{bert_forward.7} parent=39 // pred_check
          %p267 = pneg %p35
        $region42: #{bert_forward.7} parent=39 // pred_check_branch
          %269 = sbr.rel (%p267) target = $region44
        $region43: #{bert_forward.7} parent=39 // pred_region
          %p270 = scmp.lt.s32.totalorder %s15, 1
          %s271 = scalar_select %p270, %s15, 1
          %s272 = smul.addr %s271, 2
          %s273 = smul.addr %s272, 4
          %s274 = scalar_lea.vmem %s0, %s273
        $region44: #{bert_forward.7} parent=39 // pred_fallthru
          _
        // Predicated region
        $region45: #{bert_forward.7} parent=39 // pred_check
          %p275 = pneg %p61
        $region46: #{bert_forward.7} parent=39 // pred_check_branch
          %277 = sbr.rel (%p275) target = $region48
        $region47: #{bert_forward.7} parent=39 // pred_region
          %p278 = scmp.lt.s32.totalorder %s15, 1
          %s279 = scalar_select %p278, %s15, 1
          %s280 = scalar_lea.vmem %s1, %s279
        $region48: #{bert_forward.7} parent=39 // pred_fallthru
          _
      $region40: #{bert_forward.7} parent=5 // pred_fallthru
        _
      %p281 = scmp.le.s32.totalorder 1, %s15
      %p282 = scmp.lt.s32.totalorder %s15, 3
      %p283 = pnand %p281, %p282
      %p284 = pneg %p283
      // Predicated region
      $region49: #{bert_forward.7} parent=5 // pred_check
        _
      $region50: #{bert_forward.7} parent=5 // pred_check_branch
        %286 = sbr.rel (%p283) target = $region52
      $region51: #{bert_forward.7} parent=5 // pred_region
        %s287 = ssub.s32 %s15, 1
        // Predicated region
        $region53: #{bert_forward.7} parent=51 // pred_check
          %p288 = pneg %p130
        $region54: #{bert_forward.7} parent=51 // pred_check_branch
          %290 = sbr.rel (%p288) target = $region56
        $region55: #{bert_forward.7} parent=51 // pred_region
          %292 = dma.done [#allocation3], 1024
        $region56: #{bert_forward.7} parent=51 // pred_fallthru
          _
        %p293 = scmp.lt.s32.totalorder %s20, 1
        %s294 = scalar_select %p293, %s20, 1
        %s295 = smul.addr %s294, 2
        %s296 = smul.addr %s295, 4
        %s297 = scalar_lea.vmem %s0, %s296
        %p298 = pneg %p41
        %p299 = pneg %p38
        %p300 = scmp.lt.s32.totalorder %s20, 1
        %s301 = scalar_select %p300, %s20, 1
        %s302 = scalar_lea.vmem %s1, %s301
        %p303 = pneg %p67
        %p304 = pneg %p64
        %p305 = pneg %p88
        %p306 = pneg %p85
        %p307 = pneg %p109
        %p308 = pneg %p106
        %p309 = pneg %p130
        %p310 = pneg %p127
        %p311 = pneg %p151
        %p312 = pneg %p148
        %p313 = pneg %p172
        %p314 = pneg %p169
        %p315 = pneg %p193
        %p316 = pneg %p190
        %p317 = pneg %p219
        %p318 = pneg %p216
        %p319 = scmp.lt.s32.totalorder %s20, 1
        %s320 = scalar_select %p319, %s20, 1
        %s321 = smul.addr %s320, 2
        %s322 = smul.addr %s321, 4
        %s323 = scalar_lea.vmem %s8, %s322
        %p324 = scmp.lt.s32.totalorder %s20, 1
        %s325 = scalar_select %p324, %s20, 1
        %s326 = smul.addr %s325, 2
        %s327 = smul.addr %s326, 4
        %s328 = scalar_lea.vmem %s0, %s327
        %p329 = scmp.lt.s32.totalorder %s20, 1
        %s330 = scalar_select %p329, %s20, 1
        %s331 = scalar_lea.vmem %s1, %s330
        %p332 = scmp.lt.s32.totalorder %s20, 1
        %s333 = scalar_select %p332, %s20, 1
        %s334 = smul.addr %s333, 2
        %s335 = smul.addr %s334, 4
        %s336 = scalar_lea.vmem %s8, %s335
        %v338 = vld [vmem:[%s328] sm:$0xf]
        %v339 = vld [vmem:[%s328 + $0x4] sm:$0xf]
        %v340 = vld [vmem:[%s331] sm:$0x1]
        %v341 = vld [vmem:[%s2] sm:$0xff]
        %v342 = vld [vmem:[%s2 + $0x8] sm:$0xf]
        %v343 = vld [vmem:[%s2 + $0xc] sm:$0xff]
        %v344 = vld [vmem:[%s2 + $0x14] sm:$0xf]
        %v345 = vld [vmem:[%s2 + $0x18] sm:$0xff]
        %v346 = vld [vmem:[%s2 + $0x20] sm:$0xf]
        %v347 = vld [vmem:[%s2 + $0x24] sm:$0xff]
        %v348 = vld [vmem:[%s2 + $0x2c] sm:$0xf]
        %v349 = vld [vmem:[%s2 + $0x30] sm:$0xff]
        %v350 = vld [vmem:[%s2 + $0x38] sm:$0xf]
        %v351 = vld [vmem:[%s2 + $0x3c] sm:$0xff]
        %v352 = vld [vmem:[%s2 + $0x44] sm:$0xf]
        %v353 = vld [vmem:[%s2 + $0x48] sm:$0xff]
        %v354 = vld [vmem:[%s2 + $0x50] sm:$0xf]
        %v355 = vld [vmem:[%s2 + $0x54] sm:$0xff]
        %v356 = vld [vmem:[%s2 + $0x5c] sm:$0xf]
        %v357 = vld [vmem:[%s2 + $0x60] sm:$0xff]
        %v358 = vld [vmem:[%s2 + $0x68] sm:$0xf]
        %v359 = vld [vmem:[%s2 + $0x6c] sm:$0xff]
        %v360 = vld [vmem:[%s2 + $0x74] sm:$0xf]
        %v361 = vld [vmem:[%s2 + $0x78] sm:$0xff]
        %v362 = vld [vmem:[%s2 + $0x80] sm:$0xf]
        %v363 = vld [vmem:[%s2 + $0x84] sm:$0xff]
        %v364 = vld [vmem:[%s2 + $0x8c] sm:$0xf]
        %v365 = vld [vmem:[%s2 + $0x90] sm:$0xff]
        %v366 = vld [vmem:[%s2 + $0x98] sm:$0xf]
        %v367 = vld [vmem:[%s2 + $0x9c] sm:$0xff]
        %v368 = vld [vmem:[%s2 + $0xa4] sm:$0xf]
        %v369 = vld [vmem:[%s2 + $0xa8] sm:$0xff]
        %v370 = vld [vmem:[%s2 + $0xb0] sm:$0xf]
        %v371 = vld [vmem:[%s2 + $0xb4] sm:$0xff]
        %v372 = vld [vmem:[%s2 + $0xbc] sm:$0xf]
        %v373 = vld [vmem:[%s3] sm:$0x7]
        %v375 = vperm.slane %v373, 0
        %v376 = vperm.slane %v373, 1
        %v377 = vperm.slane %v373, 2
        %v383 = vunpack.c.l.b16 %v338
        %v384 = vunpack.c.l.b16 %v339
        %v385 = vpack.c.b16 %v384, %v383
        %v419 = vunpack.c.l.b16 %v341
        %v420 = vunpack.c.h.b16 %v341
        %v421 = vunpack.c.l.b16 %v342
        %v422 = vunpack.c.l.b16 %v343
        %v423 = vunpack.c.h.b16 %v343
        %v424 = vunpack.c.l.b16 %v344
        %v425 = vunpack.c.l.b16 %v345
        %v426 = vunpack.c.h.b16 %v345
        %v427 = vunpack.c.l.b16 %v346
        %v428 = vunpack.c.l.b16 %v347
        %v429 = vunpack.c.h.b16 %v347
        %v430 = vunpack.c.l.b16 %v348
        %v431 = vunpack.c.l.b16 %v349
        %v432 = vunpack.c.h.b16 %v349
        %v433 = vunpack.c.l.b16 %v350
        %v434 = vunpack.c.l.b16 %v351
        %v435 = vunpack.c.h.b16 %v351
        %v436 = vunpack.c.l.b16 %v352
        %v437 = vunpack.c.l.b16 %v353
        %v438 = vunpack.c.h.b16 %v353
        %v439 = vunpack.c.l.b16 %v354
        %v440 = vunpack.c.l.b16 %v355
        %v441 = vunpack.c.h.b16 %v355
        %v442 = vunpack.c.l.b16 %v356
        %v443 = vunpack.c.l.b16 %v357
        %v444 = vunpack.c.h.b16 %v357
        %v445 = vunpack.c.l.b16 %v358
        %v446 = vunpack.c.l.b16 %v359
        %v447 = vunpack.c.h.b16 %v359
        %v448 = vunpack.c.l.b16 %v360
        %v449 = vunpack.c.l.b16 %v361
        %v450 = vunpack.c.h.b16 %v361
        %v451 = vunpack.c.l.b16 %v362
        %v452 = vunpack.c.l.b16 %v363
        %v453 = vunpack.c.h.b16 %v363
        %v454 = vunpack.c.l.b16 %v364
        %v455 = vunpack.c.l.b16 %v365
        %v456 = vunpack.c.h.b16 %v365
        %v457 = vunpack.c.l.b16 %v366
        %v458 = vunpack.c.l.b16 %v367
        %v459 = vunpack.c.h.b16 %v367
        %v460 = vunpack.c.l.b16 %v368
        %v461 = vunpack.c.l.b16 %v369
        %v462 = vunpack.c.h.b16 %v369
        %v463 = vunpack.c.l.b16 %v370
        %v464 = vunpack.c.l.b16 %v371
        %v465 = vunpack.c.h.b16 %v371
        %v466 = vunpack.c.l.b16 %v372
        %v467 = vpack.c.b16 %v422, %v419
        %v468 = vpack.c.b16 %v423, %v420
        %v469 = vpack.c.b16 %v424, %v421
        %v470 = vpack.c.b16 %v428, %v425
        %v471 = vpack.c.b16 %v429, %v426
        %v472 = vpack.c.b16 %v430, %v427
        %v473 = vpack.c.b16 %v434, %v431
        %v474 = vpack.c.b16 %v435, %v432
        %v475 = vpack.c.b16 %v436, %v433
        %v476 = vpack.c.b16 %v440, %v437
        %v477 = vpack.c.b16 %v441, %v438
        %v478 = vpack.c.b16 %v442, %v439
        %v479 = vpack.c.b16 %v446, %v443
        %v480 = vpack.c.b16 %v447, %v444
        %v481 = vpack.c.b16 %v448, %v445
        %v482 = vpack.c.b16 %v452, %v449
        %v483 = vpack.c.b16 %v453, %v450
        %v484 = vpack.c.b16 %v454, %v451
        %v485 = vpack.c.b16 %v458, %v455
        %v486 = vpack.c.b16 %v459, %v456
        %v487 = vpack.c.b16 %v460, %v457
        %v488 = vpack.c.b16 %v464, %v461
        %v489 = vpack.c.b16 %v465, %v462
        %v490 = vpack.c.b16 %v466, %v463
        %515 = vmatpush.bf16.msra.mxu0 %v488
        %516 = vmatpush.bf16.msra.mxu0 %v485
        %517 = vmatpush.bf16.msra.mxu0 %v482
        %518 = vmatpush.bf16.msra.mxu0 %v479
        %519 = vmatpush.bf16.msra.mxu0 %v476
        %520 = vmatpush.bf16.msra.mxu0 %v473
        %521 = vmatpush.bf16.msra.mxu0 %v470
        %522 = vmatpush.bf16.msra.mxu0 %v467
        %523 = vmatmul.bf16.gmra.mxu0 %v385
        %v524 = vpop.f32.mrf.mxu0
        %v525 = vadd.f32 %v375, %v524
        %v526 = vpop.f32.mrf.mxu0
        %v527 = vadd.f32 %v375, %v526
        %528 = vdwg.mxu0
        %529 = vmatpush.bf16.msra.mxu0 %v489
        %530 = vmatpush.bf16.msra.mxu0 %v486
        %531 = vmatpush.bf16.msra.mxu0 %v483
        %532 = vmatpush.bf16.msra.mxu0 %v480
        %533 = vmatpush.bf16.msra.mxu0 %v477
        %534 = vmatpush.bf16.msra.mxu0 %v474
        %535 = vmatpush.bf16.msra.mxu0 %v471
        %536 = vmatpush.bf16.msra.mxu0 %v468
        %537 = vmatmul.bf16.gmra.mxu0 %v385
        %v538 = vpop.f32.mrf.mxu0
        %v539 = vadd.f32 %v376, %v538
        %v540 = vpop.f32.mrf.mxu0
        %v541 = vadd.f32 %v376, %v540
        %542 = vdwg.mxu0
        %543 = vmatpush.bf16.msra.mxu0 %v490
        %544 = vmatpush.bf16.msra.mxu0 %v487
        %545 = vmatpush.bf16.msra.mxu0 %v484
        %546 = vmatpush.bf16.msra.mxu0 %v481
        %547 = vmatpush.bf16.msra.mxu0 %v478
        %548 = vmatpush.bf16.msra.mxu0 %v475
        %549 = vmatpush.bf16.msra.mxu0 %v472
        %550 = vmatpush.bf16.msra.mxu0 %v469
        %551 = vmatmul.bf16.gmra.mxu0 %v385
        %v552 = vpop.f32.mrf.mxu0
        %v553 = vadd.f32 %v377, %v552
        %v554 = vpop.f32.mrf.mxu0
        %v555 = vadd.f32 %v377, %v554
        %556 = vdwg.mxu0
        %v557 = vpack.c.bf16 %v539, %v525
        %v558 = vpack.c.bf16 %v553, %v553
        %v559 = vpack.c.bf16 %v541, %v527
        %v560 = vpack.c.bf16 %v555, %v555
        %563 = vrot.lane.b32.xlu0 %v557, 96
        %v564 = vpop.permute.xlu0 %563
        %565 = vrot.lane.b32.xlu0 %v559, 96
        %v566 = vpop.permute.xlu0 %565
        %567 = vrot.lane.b32.xlu0 %v557, 64
        %v568 = vpop.permute.xlu0 %567
        %569 = vrot.lane.b32.xlu0 %v559, 64
        %v570 = vpop.permute.xlu0 %569
        %571 = vrot.lane.b32.xlu0 %v557, 32
        %v572 = vpop.permute.xlu0 %571
        %573 = vrot.lane.b32.xlu0 %v559, 32
        %v574 = vpop.permute.xlu0 %573
        %v575 = vrot.slane %v557, 4
        %v576 = vrot.slane %v559, 4
        %v577 = vrot.slane %v564, 4
        %v578 = vrot.slane %v566, 4
        %v579 = vrot.slane %v568, 4
        %v580 = vrot.slane %v570, 4
        %v581 = vrot.slane %v572, 4
        %v582 = vrot.slane %v574, 4
        %585 = vrot.lane.b32.xlu0 %v558, 96
        %v586 = vpop.permute.xlu0 %585
        %587 = vrot.lane.b32.xlu0 %v560, 96
        %v588 = vpop.permute.xlu0 %587
        %589 = vrot.lane.b32.xlu0 %v558, 64
        %v590 = vpop.permute.xlu0 %589
        %591 = vrot.lane.b32.xlu0 %v560, 64
        %v592 = vpop.permute.xlu0 %591
        %593 = vrot.lane.b32.xlu0 %v558, 32
        %v594 = vpop.permute.xlu0 %593
        %595 = vrot.lane.b32.xlu0 %v560, 32
        %v596 = vpop.permute.xlu0 %595
        %v597 = vunpack.c.l.b16 %v557
        %v598 = vunpack.c.l.b16 %v559
        %v599 = vpack.c.b16 %v598, %v597
        %v600 = vunpack.c.l.b16 %v575
        %v601 = vunpack.c.l.b16 %v576
        %v602 = vpack.c.b16 %v601, %v600
        %vm603 = vcmask 261120
        %v605 = vsel %vm603, %v599, 0
        %v608 = vsel %vm603, %v602, 0
        %610 = vmatpush.bf16.xpose.msra.mxu0 0
        %611 = vmatpush.bf16.xpose.msra.mxu0 0
        %612 = vmatpush.bf16.xpose.msra.mxu0 0
        %613 = vmatpush.bf16.xpose.msra.mxu0 0
        %614 = vmatpush.bf16.xpose.msra.mxu0 0
        %615 = vmatpush.bf16.xpose.msra.mxu0 0
        %616 = vmatpush.bf16.xpose.msra.mxu0 0
        %617 = vmatpush.bf16.xpose.msra.mxu0 %v608
        %618 = vmatmul.bf16.gmra.mxu0 %v605
        %v619 = vpop.f32.mrf.mxu0
        %v620 = vadd.f32 0.0, %v619
        %v621 = vpop.f32.mrf.mxu0
        %v622 = vadd.f32 0.0, %v621
        %623 = vdwg.mxu0
        %v624 = vunpack.c.l.b16 %v564
        %v625 = vunpack.c.l.b16 %v566
        %v626 = vpack.c.b16 %v625, %v624
        %v627 = vunpack.c.l.b16 %v577
        %v628 = vunpack.c.l.b16 %v578
        %v629 = vpack.c.b16 %v628, %v627
        %v631 = vsel %vm603, %v626, 0
        %v634 = vsel %vm603, %v629, 0
        %636 = vmatpush.bf16.xpose.msra.mxu0 0
        %637 = vmatpush.bf16.xpose.msra.mxu0 0
        %638 = vmatpush.bf16.xpose.msra.mxu0 0
        %639 = vmatpush.bf16.xpose.msra.mxu0 0
        %640 = vmatpush.bf16.xpose.msra.mxu0 0
        %641 = vmatpush.bf16.xpose.msra.mxu0 0
        %642 = vmatpush.bf16.xpose.msra.mxu0 0
        %643 = vmatpush.bf16.xpose.msra.mxu0 %v634
        %644 = vmatmul.bf16.gmra.mxu0 %v631
        %v645 = vpop.f32.mrf.mxu0
        %v646 = vadd.f32 0.0, %v645
        %v647 = vpop.f32.mrf.mxu0
        %v648 = vadd.f32 0.0, %v647
        %649 = vdwg.mxu0
        %v650 = vunpack.c.l.b16 %v568
        %v651 = vunpack.c.l.b16 %v570
        %v652 = vpack.c.b16 %v651, %v650
        %v653 = vunpack.c.l.b16 %v579
        %v654 = vunpack.c.l.b16 %v580
        %v655 = vpack.c.b16 %v654, %v653
        %v657 = vsel %vm603, %v652, 0
        %v660 = vsel %vm603, %v655, 0
        %662 = vmatpush.bf16.xpose.msra.mxu0 0
        %663 = vmatpush.bf16.xpose.msra.mxu0 0
        %664 = vmatpush.bf16.xpose.msra.mxu0 0
        %665 = vmatpush.bf16.xpose.msra.mxu0 0
        %666 = vmatpush.bf16.xpose.msra.mxu0 0
        %667 = vmatpush.bf16.xpose.msra.mxu0 0
        %668 = vmatpush.bf16.xpose.msra.mxu0 0
        %669 = vmatpush.bf16.xpose.msra.mxu0 %v660
        %670 = vmatmul.bf16.gmra.mxu0 %v657
        %v671 = vpop.f32.mrf.mxu0
        %v672 = vadd.f32 0.0, %v671
        %v673 = vpop.f32.mrf.mxu0
        %v674 = vadd.f32 0.0, %v673
        %675 = vdwg.mxu0
        %v676 = vunpack.c.l.b16 %v572
        %v677 = vunpack.c.l.b16 %v574
        %v678 = vpack.c.b16 %v677, %v676
        %v679 = vunpack.c.l.b16 %v581
        %v680 = vunpack.c.l.b16 %v582
        %v681 = vpack.c.b16 %v680, %v679
        %v683 = vsel %vm603, %v678, 0
        %v686 = vsel %vm603, %v681, 0
        %688 = vmatpush.bf16.xpose.msra.mxu0 0
        %689 = vmatpush.bf16.xpose.msra.mxu0 0
        %690 = vmatpush.bf16.xpose.msra.mxu0 0
        %691 = vmatpush.bf16.xpose.msra.mxu0 0
        %692 = vmatpush.bf16.xpose.msra.mxu0 0
        %693 = vmatpush.bf16.xpose.msra.mxu0 0
        %694 = vmatpush.bf16.xpose.msra.mxu0 0
        %695 = vmatpush.bf16.xpose.msra.mxu0 %v686
        %696 = vmatmul.bf16.gmra.mxu0 %v683
        %v697 = vpop.f32.mrf.mxu0
        %v698 = vadd.f32 0.0, %v697
        %v699 = vpop.f32.mrf.mxu0
        %v700 = vadd.f32 0.0, %v699
        %701 = vdwg.mxu0
        %v702 = vmul.f32 %v620, 0.17677669
        %v703 = vmul.f32 %v622, 0.17677669
        %v704 = vmul.f32 %v646, 0.17677669
        %v705 = vmul.f32 %v648, 0.17677669
        %v706 = vmul.f32 %v672, 0.17677669
        %v707 = vmul.f32 %v674, 0.17677669
        %v708 = vmul.f32 %v698, 0.17677669
        %v709 = vmul.f32 %v700, 0.17677669
        %v711 = vperm.slane %v340, 0
        %v713 = vadd.f32 %v702, %v711
        %v714 = vadd.f32 %v703, %v711
        %v715 = vadd.f32 %v704, %v711
        %v716 = vadd.f32 %v705, %v711
        %v717 = vadd.f32 %v706, %v711
        %v718 = vadd.f32 %v707, %v711
        %v719 = vadd.f32 %v708, %v711
        %v720 = vadd.f32 %v709, %v711
        %vm721 = vcmask 130048
        %v722 = vsel %vm721, %v713, -inf
        %723 = vmax.xlane.f32.xlu0 %v722
        %v724 = vpop.xlane.xlu0 %723
        %v725 = vsel %vm721, %v714, -inf
        %726 = vmax.xlane.f32.xlu0 %v725
        %v727 = vpop.xlane.xlu0 %726
        %v728 = vsel %vm721, %v715, -inf
        %729 = vmax.xlane.f32.xlu0 %v728
        %v730 = vpop.xlane.xlu0 %729
        %v731 = vsel %vm721, %v716, -inf
        %732 = vmax.xlane.f32.xlu0 %v731
        %v733 = vpop.xlane.xlu0 %732
        %v734 = vsel %vm721, %v717, -inf
        %735 = vmax.xlane.f32.xlu0 %v734
        %v736 = vpop.xlane.xlu0 %735
        %v737 = vsel %vm721, %v718, -inf
        %738 = vmax.xlane.f32.xlu0 %v737
        %v739 = vpop.xlane.xlu0 %738
        %v740 = vsel %vm721, %v719, -inf
        %741 = vmax.xlane.f32.xlu0 %v740
        %v742 = vpop.xlane.xlu0 %741
        %v743 = vsel %vm721, %v720, -inf
        %744 = vmax.xlane.f32.xlu0 %v743
        %v745 = vpop.xlane.xlu0 %744
        %v746 = vsub.f32 %v713, %v724
        %v747 = vsub.f32 %v714, %v727
        %v748 = vsub.f32 %v715, %v730
        %v749 = vsub.f32 %v716, %v733
        %v750 = vsub.f32 %v717, %v736
        %v751 = vsub.f32 %v718, %v739
        %v752 = vsub.f32 %v719, %v742
        %v753 = vsub.f32 %v720, %v745
        %v754 = vmul.f32 %v746, 1.442695
        %v755 = vpow.pop %v754
        %v756 = vmul.f32 %v747, 1.442695
        %v757 = vpow.pop %v756
        %v758 = vmul.f32 %v748, 1.442695
        %v759 = vpow.pop %v758
        %v760 = vmul.f32 %v749, 1.442695
        %v761 = vpow.pop %v760
        %v762 = vmul.f32 %v750, 1.442695
        %v763 = vpow.pop %v762
        %v764 = vmul.f32 %v751, 1.442695
        %v765 = vpow.pop %v764
        %v766 = vmul.f32 %v752, 1.442695
        %v767 = vpow.pop %v766
        %v768 = vmul.f32 %v753, 1.442695
        %v769 = vpow.pop %v768
        %v770 = vsel %vm721, %v755, 0.0
        %771 = vadd.xlane.f32.xlu0 %v770
        %v772 = vpop.xlane.xlu0 %771
        %v773 = vsel %vm721, %v757, 0.0
        %774 = vadd.xlane.f32.xlu0 %v773
        %v775 = vpop.xlane.xlu0 %774
        %v776 = vsel %vm721, %v759, 0.0
        %777 = vadd.xlane.f32.xlu0 %v776
        %v778 = vpop.xlane.xlu0 %777
        %v779 = vsel %vm721, %v761, 0.0
        %780 = vadd.xlane.f32.xlu0 %v779
        %v781 = vpop.xlane.xlu0 %780
        %v782 = vsel %vm721, %v763, 0.0
        %783 = vadd.xlane.f32.xlu0 %v782
        %v784 = vpop.xlane.xlu0 %783
        %v785 = vsel %vm721, %v765, 0.0
        %786 = vadd.xlane.f32.xlu0 %v785
        %v787 = vpop.xlane.xlu0 %786
        %v788 = vsel %vm721, %v767, 0.0
        %789 = vadd.xlane.f32.xlu0 %v788
        %v790 = vpop.xlane.xlu0 %789
        %v791 = vsel %vm721, %v769, 0.0
        %792 = vadd.xlane.f32.xlu0 %v791
        %v793 = vpop.xlane.xlu0 %792
        %v794 = vrcp.pop %v772
        %v795 = vrcp.pop %v775
        %v796 = vrcp.pop %v778
        %v797 = vrcp.pop %v781
        %v798 = vrcp.pop %v784
        %v799 = vrcp.pop %v787
        %v800 = vrcp.pop %v790
        %v801 = vrcp.pop %v793
        %v802 = vmul.f32 %v755, %v794
        %v803 = vmul.f32 %v757, %v795
        %v804 = vmul.f32 %v759, %v796
        %v805 = vmul.f32 %v761, %v797
        %v806 = vmul.f32 %v763, %v798
        %v807 = vmul.f32 %v765, %v799
        %v808 = vmul.f32 %v767, %v800
        %v809 = vmul.f32 %v769, %v801
        %v810 = vpack.c.bf16 %v802, %v802
        %v811 = vpack.c.bf16 %v803, %v803
        %v812 = vpack.c.bf16 %v804, %v804
        %v813 = vpack.c.bf16 %v805, %v805
        %v814 = vpack.c.bf16 %v806, %v806
        %v815 = vpack.c.bf16 %v807, %v807
        %v816 = vpack.c.bf16 %v808, %v808
        %v817 = vpack.c.bf16 %v809, %v809
        %v820 = vunpack.c.l.b16 %v810
        %v821 = vunpack.c.l.b16 %v811
        %v822 = vpack.c.b16 %v821, %v820
        %v823 = vunpack.c.l.b16 %v558
        %v824 = vunpack.c.l.b16 %v560
        %v825 = vpack.c.b16 %v824, %v823
        %v828 = vsel %vm721, %v822, 0
        %830 = vmatpush.bf16.msra.mxu0 0
        %831 = vmatpush.bf16.msra.mxu0 0
        %832 = vmatpush.bf16.msra.mxu0 0
        %833 = vmatpush.bf16.msra.mxu0 0
        %834 = vmatpush.bf16.msra.mxu0 0
        %835 = vmatpush.bf16.msra.mxu0 0
        %836 = vmatpush.bf16.msra.mxu0 0
        %837 = vmatpush.bf16.msra.mxu0 %v825
        %838 = vmatmul.bf16.gmra.mxu0 %v828
        %v839 = vpop.f32.mrf.mxu0
        %v840 = vadd.f32 0.0, %v839
        %v841 = vpop.f32.mrf.mxu0
        %v842 = vadd.f32 0.0, %v841
        %843 = vdwg.mxu0
        %v846 = vunpack.c.l.b16 %v812
        %v847 = vunpack.c.l.b16 %v813
        %v848 = vpack.c.b16 %v847, %v846
        %v849 = vunpack.c.l.b16 %v586
        %v850 = vunpack.c.l.b16 %v588
        %v851 = vpack.c.b16 %v850, %v849
        %v854 = vsel %vm721, %v848, 0
        %856 = vmatpush.bf16.msra.mxu0 0
        %857 = vmatpush.bf16.msra.mxu0 0
        %858 = vmatpush.bf16.msra.mxu0 0
        %859 = vmatpush.bf16.msra.mxu0 0
        %860 = vmatpush.bf16.msra.mxu0 0
        %861 = vmatpush.bf16.msra.mxu0 0
        %862 = vmatpush.bf16.msra.mxu0 0
        %863 = vmatpush.bf16.msra.mxu0 %v851
        %864 = vmatmul.bf16.gmra.mxu0 %v854
        %v865 = vpop.f32.mrf.mxu0
        %v866 = vadd.f32 0.0, %v865
        %v867 = vpop.f32.mrf.mxu0
        %v868 = vadd.f32 0.0, %v867
        %869 = vdwg.mxu0
        %v872 = vunpack.c.l.b16 %v814
        %v873 = vunpack.c.l.b16 %v815
        %v874 = vpack.c.b16 %v873, %v872
        %v875 = vunpack.c.l.b16 %v590
        %v876 = vunpack.c.l.b16 %v592
        %v877 = vpack.c.b16 %v876, %v875
        %v880 = vsel %vm721, %v874, 0
        %882 = vmatpush.bf16.msra.mxu0 0
        %883 = vmatpush.bf16.msra.mxu0 0
        %884 = vmatpush.bf16.msra.mxu0 0
        %885 = vmatpush.bf16.msra.mxu0 0
        %886 = vmatpush.bf16.msra.mxu0 0
        %887 = vmatpush.bf16.msra.mxu0 0
        %888 = vmatpush.bf16.msra.mxu0 0
        %889 = vmatpush.bf16.msra.mxu0 %v877
        %890 = vmatmul.bf16.gmra.mxu0 %v880
        %v891 = vpop.f32.mrf.mxu0
        %v892 = vadd.f32 0.0, %v891
        %v893 = vpop.f32.mrf.mxu0
        %v894 = vadd.f32 0.0, %v893
        %895 = vdwg.mxu0
        %v898 = vunpack.c.l.b16 %v816
        %v899 = vunpack.c.l.b16 %v817
        %v900 = vpack.c.b16 %v899, %v898
        %v901 = vunpack.c.l.b16 %v594
        %v902 = vunpack.c.l.b16 %v596
        %v903 = vpack.c.b16 %v902, %v901
        %v906 = vsel %vm721, %v900, 0
        %908 = vmatpush.bf16.msra.mxu0 0
        %909 = vmatpush.bf16.msra.mxu0 0
        %910 = vmatpush.bf16.msra.mxu0 0
        %911 = vmatpush.bf16.msra.mxu0 0
        %912 = vmatpush.bf16.msra.mxu0 0
        %913 = vmatpush.bf16.msra.mxu0 0
        %914 = vmatpush.bf16.msra.mxu0 0
        %915 = vmatpush.bf16.msra.mxu0 %v903
        %916 = vmatmul.bf16.gmra.mxu0 %v906
        %v917 = vpop.f32.mrf.mxu0
        %v918 = vadd.f32 0.0, %v917
        %v919 = vpop.f32.mrf.mxu0
        %v920 = vadd.f32 0.0, %v919
        %921 = vdwg.mxu0
        %v922 = vld [vmem:[#allocation2] sm:$0xf]
        %v923 = vld [vmem:[#allocation2 + $0x4] sm:$0xf]
        %v924 = vld [vmem:[#allocation2 + $0x8] sm:$0xf]
        %v925 = vld [vmem:[#allocation2 + $0xc] sm:$0xf]
        %v926 = vld [vmem:[#allocation2 + $0x10] sm:$0xf]
        %v927 = vld [vmem:[#allocation2 + $0x14] sm:$0xf]
        %v928 = vld [vmem:[#allocation2 + $0x18] sm:$0xf]
        %v929 = vld [vmem:[#allocation2 + $0x1c] sm:$0xf]
        %v930 = vld [vmem:[#allocation2 + $0x20] sm:$0xf]
        %v931 = vld [vmem:[#allocation2 + $0x24] sm:$0xf]
        %v932 = vld [vmem:[#allocation2 + $0x28] sm:$0xf]
        %v933 = vld [vmem:[#allocation2 + $0x2c] sm:$0xf]
        %v934 = vld [vmem:[#allocation2 + $0x30] sm:$0xf]
        %v935 = vld [vmem:[#allocation2 + $0x34] sm:$0xf]
        %v936 = vld [vmem:[#allocation2 + $0x38] sm:$0xf]
        %v937 = vld [vmem:[#allocation2 + $0x3c] sm:$0xf]
        %v938 = vpack.c.bf16 %v842, %v840
        %v939 = vpack.c.bf16 %v868, %v866
        %v944 = vunpack.c.l.b16 %v926
        %v945 = vunpack.c.l.b16 %v927
        %v946 = vunpack.c.l.b16 %v928
        %v947 = vunpack.c.l.b16 %v929
        %v948 = vpack.c.b16 %v945, %v944
        %v949 = vpack.c.b16 %v947, %v946
        %v953 = vsel %vm603, %v939, 0
        %955 = vmatpush.bf16.msra.mxu0 0
        %956 = vmatpush.bf16.msra.mxu0 0
        %957 = vmatpush.bf16.msra.mxu0 0
        %958 = vmatpush.bf16.msra.mxu0 0
        %959 = vmatpush.bf16.msra.mxu0 0
        %960 = vmatpush.bf16.msra.mxu0 0
        %961 = vmatpush.bf16.msra.mxu0 %v949
        %962 = vmatpush.bf16.msra.mxu0 %v948
        %963 = vmatmul.bf16.gmra.mxu0 %v953
        %v964 = vpop.f32.mrf.mxu0
        %v965 = vadd.f32 0.0, %v964
        %v966 = vpop.f32.mrf.mxu0
        %v967 = vadd.f32 0.0, %v966
        %968 = vdwg.mxu0
        %v973 = vunpack.c.l.b16 %v922
        %v974 = vunpack.c.l.b16 %v923
        %v975 = vunpack.c.l.b16 %v924
        %v976 = vunpack.c.l.b16 %v925
        %v977 = vpack.c.b16 %v974, %v973
        %v978 = vpack.c.b16 %v976, %v975
        %v982 = vsel %vm603, %v938, 0
        %984 = vmatpush.bf16.msra.mxu0 0
        %985 = vmatpush.bf16.msra.mxu0 0
        %986 = vmatpush.bf16.msra.mxu0 0
        %987 = vmatpush.bf16.msra.mxu0 0
        %988 = vmatpush.bf16.msra.mxu0 0
        %989 = vmatpush.bf16.msra.mxu0 0
        %990 = vmatpush.bf16.msra.mxu0 %v978
        %991 = vmatpush.bf16.msra.mxu0 %v977
        %992 = vmatmul.bf16.gmra.mxu0 %v982
        %v993 = vpop.f32.mrf.mxu0
        %v994 = vadd.f32 %v965, %v993
        %v995 = vpop.f32.mrf.mxu0
        %v996 = vadd.f32 %v967, %v995
        %997 = vdwg.mxu0
        %v998 = vpack.c.bf16 %v894, %v892
        %v1003 = vunpack.c.l.b16 %v930
        %v1004 = vunpack.c.l.b16 %v931
        %v1005 = vunpack.c.l.b16 %v932
        %v1006 = vunpack.c.l.b16 %v933
        %v1007 = vpack.c.b16 %v1004, %v1003
        %v1008 = vpack.c.b16 %v1006, %v1005
        %v1012 = vsel %vm603, %v998, 0
        %1014 = vmatpush.bf16.msra.mxu0 0
        %1015 = vmatpush.bf16.msra.mxu0 0
        %1016 = vmatpush.bf16.msra.mxu0 0
        %1017 = vmatpush.bf16.msra.mxu0 0
        %1018 = vmatpush.bf16.msra.mxu0 0
        %1019 = vmatpush.bf16.msra.mxu0 0
        %1020 = vmatpush.bf16.msra.mxu0 %v1008
        %1021 = vmatpush.bf16.msra.mxu0 %v1007
        %1022 = vmatmul.bf16.gmra.mxu0 %v1012
        %v1023 = vpop.f32.mrf.mxu0
        %v1024 = vadd.f32 0.0, %v1023
        %v1025 = vpop.f32.mrf.mxu0
        %v1026 = vadd.f32 0.0, %v1025
        %1027 = vdwg.mxu0
        %v1028 = vadd.f32 %v994, %v1024
        %v1029 = vadd.f32 %v996, %v1026
        %v1030 = vpack.c.bf16 %v920, %v918
        %v1035 = vunpack.c.l.b16 %v934
        %v1036 = vunpack.c.l.b16 %v935
        %v1037 = vunpack.c.l.b16 %v936
        %v1038 = vunpack.c.l.b16 %v937
        %v1039 = vpack.c.b16 %v1036, %v1035
        %v1040 = vpack.c.b16 %v1038, %v1037
        %v1044 = vsel %vm603, %v1030, 0
        %1046 = vmatpush.bf16.msra.mxu0 0
        %1047 = vmatpush.bf16.msra.mxu0 0
        %1048 = vmatpush.bf16.msra.mxu0 0
        %1049 = vmatpush.bf16.msra.mxu0 0
        %1050 = vmatpush.bf16.msra.mxu0 0
        %1051 = vmatpush.bf16.msra.mxu0 0
        %1052 = vmatpush.bf16.msra.mxu0 %v1040
        %1053 = vmatpush.bf16.msra.mxu0 %v1039
        %1054 = vmatmul.bf16.gmra.mxu0 %v1044
        %v1055 = vpop.f32.mrf.mxu0
        %v1056 = vadd.f32 0.0, %v1055
        %v1057 = vpop.f32.mrf.mxu0
        %v1058 = vadd.f32 0.0, %v1057
        %1059 = vdwg.mxu0
        %v1060 = vadd.f32 %v1028, %v1056
        %v1061 = vadd.f32 %v1029, %v1058
        %v1062 = vld [vmem:[%s5] sm:$0x1]
        %v1064 = vperm.slane %v1062, 0
        %v1066 = vadd.f32 %v1060, %v1064
        %v1067 = vadd.f32 %v1061, %v1064
        %v1068 = vunpack.c.l.bf16 %v338
        %v1069 = vunpack.c.l.bf16 %v339
        %v1070 = vadd.f32 %v1066, %v1068
        %v1071 = vadd.f32 %v1067, %v1069
        %v1072 = vld [vmem:[%s6] sm:$0x1]
        %v1073 = vld [vmem:[%s7] sm:$0x1]
        %1074 = vadd.xlane.f32.xlu0 %v1070
        %v1075 = vpop.xlane.xlu0 %1074
        %1076 = vadd.xlane.f32.xlu0 %v1071
        %v1077 = vpop.xlane.xlu0 %1076
        %v1078 = vrcp.pop 128.0
        %v1079 = vmul.f32 128.0, %v1078
        %v1080 = vsub.f32 1.0, %v1079
        %v1081 = vmul.f32 %v1078, %v1080
        %v1082 = vadd.f32 %v1078, %v1081
        %vm1083 = vweird.f32 %v1078
        %v1084 = vsel %vm1083, %v1078, %v1082
        %v1085 = vmul.f32 %v1075, %v1084
        %v1086 = vmul.f32 %v1077, %v1084
        %v1087 = vmul.f32 %v1070, %v1070
        %v1088 = vmul.f32 %v1071, %v1071
        %1089 = vadd.xlane.f32.xlu0 %v1087
        %v1090 = vpop.xlane.xlu0 %1089
        %1091 = vadd.xlane.f32.xlu0 %v1088
        %v1092 = vpop.xlane.xlu0 %1091
        %v1093 = vmul.f32 %v1090, %v1084
        %v1094 = vmul.f32 %v1092, %v1084
        %v1095 = vmul.f32 %v1085, %v1085
        %v1096 = vmul.f32 %v1086, %v1086
        %v1097 = vsub.f32 %v1093, %v1095
        %v1098 = vsub.f32 %v1094, %v1096
        %v1099 = vmax.f32 %v1097, 0.0
        %v1100 = vmax.f32 %v1098, 0.0
        %v1101 = vsub.f32 %v1070, %v1085
        %v1102 = vsub.f32 %v1071, %v1086
        %v1103 = vadd.f32 %v1099, 1e-12
        %v1104 = vadd.f32 %v1100, 1e-12
        %v1105 = vrsqrt.pop %v1103
        %v1106 = vmul.f32 %v1105, %v1103
        %v1107 = vmul.f32 %v1106, %v1105
        %v1108 = vmul.f32 0.5, %v1107
        %v1109 = vsub.f32 1.5, %v1108
        %v1110 = vmul.f32 %v1105, %v1109
        %vm1111 = vweird.f32 %v1103
        %vm1112 = vweird.f32 %v1105
        %vm1113 = vmor %vm1111, %vm1112
        %v1114 = vsel %vm1113, %v1105, %v1110
        %v1115 = vrsqrt.pop %v1104
        %v1116 = vmul.f32 %v1115, %v1104
        %v1117 = vmul.f32 %v1116, %v1115
        %v1118 = vmul.f32 0.5, %v1117
        %v1119 = vsub.f32 1.5, %v1118
        %v1120 = vmul.f32 %v1115, %v1119
        %vm1121 = vweird.f32 %v1104
        %vm1122 = vweird.f32 %v1115
        %vm1123 = vmor %vm1121, %vm1122
        %v1124 = vsel %vm1123, %v1115, %v1120
        %v1125 = vmul.f32 %v1101, %v1114
        %v1126 = vmul.f32 %v1102, %v1124
        %v1128 = vperm.slane %v1072, 0
        %v1130 = vmul.f32 %v1125, %v1128
        %v1131 = vmul.f32 %v1126, %v1128
        %v1133 = vperm.slane %v1073, 0
        %v1135 = vadd.f32 %v1130, %v1133
        %v1136 = vadd.f32 %v1131, %v1133
        %v1137 = vpack.c.bf16 %v1135, %v1135
        %v1138 = vpack.c.bf16 %v1136, %v1136
        %1139 = vst [vmem:[%s336] sm:$0xf] %v1137
        %1140 = vst [vmem:[%s336 + $0x4] sm:$0xf] %v1138
        %p1141 = scmp.lt.s32.totalorder %s20, 1
        %s1142 = scalar_select %p1141, %s20, 1
        %s1143 = smul.addr %s1142, 2
        %s1144 = smul.addr %s1143, 4
        %s1145 = scalar_lea.vmem %s8, %s1144
        // Predicated region
        $region57: #{bert_forward.7} parent=51 // pred_check
          %p1146 = pneg %p216
        $region58: #{bert_forward.7} parent=51 // pred_check_branch
          %1148 = sbr.rel (%p1146) target = $region60
        $region59: #{bert_forward.7} parent=51 // pred_region
          _
        $region60: #{bert_forward.7} parent=51 // pred_fallthru
          _
      $region52: #{bert_forward.7} parent=5 // pred_fallthru
        _
      %p1149 = scmp.le.s32.totalorder 2, %s15
      // Predicated region
      $region61: #{bert_forward.7} parent=5 // pred_check
        %p1150 = pneg %p1149
      $region62: #{bert_forward.7} parent=5 // pred_check_branch
        %1152 = sbr.rel (%p1150) target = $region64
      $region63: #{bert_forward.7} parent=5 // pred_region
        %s1153 = ssub.s32 %s15, 2
        // Predicated region
        $region65: #{bert_forward.7} parent=63 // pred_check
          %p1154 = pneg %p222
        $region66: #{bert_forward.7} parent=63 // pred_check_branch
          %1156 = sbr.rel (%p1154) target = $region68
        $region67: #{bert_forward.7} parent=63 // pred_region
          %p1157 = scmp.lt.s32.totalorder %s21, 1
          %s1158 = scalar_select %p1157, %s21, 1
          %s1159 = smul.addr %s1158, 2
          %s1160 = smul.addr %s1159, 4
          %s1161 = scalar_lea.vmem %s8, %s1160
        $region68: #{bert_forward.7} parent=63 // pred_fallthru
          _
      $region64: #{bert_forward.7} parent=5 // pred_fallthru
        _
    $region6: #{bert_forward.7} parent=1 // loop_footer
      %s19 = sadd.s32 1, %s15
    $region7: #{bert_forward.7} parent=1 // loop_footer_branch
      %14 = sbr.rel target = $region3
    $region8: #{bert_forward.7} parent=1 // loop_exit
      _
    %1162 = vsyncpa [#allocation3], 1
    %s1163 = scalar_lea.sflag [#allocation3], 1
    %1164 = vsyncpa %s1163, 1

// kernel: bert_forward.9
$region0: #{bert_forward.9}
  #allocation0 [shape = 'u32[]', space=smem, size = 0x4, offset = 0x4, fixed_abs, tag = 'smem constant byte address 0x4 - core index']
  #allocation1 [shape = 'u32[72,128]{1,0:T(1,128)}', space=vmem, size = 0x9000, scoped, tag = 'internal scratch']
  %s0 = inlined_call_operand.vmem [shape: bf16[2,16,128], index: 0, kind: input, shape index: {}]
  %s1 = inlined_call_operand.vmem [shape: f32[2,1,16], index: 1, kind: input, shape index: {}]
  %s2 = inlined_call_operand.hbm [shape: bf16[128,384], index: 2, kind: input, shape index: {}]
  %s3 = inlined_call_operand.vmem [shape: f32[1,384], index: 3, kind: input, shape index: {}]
  %s4 = inlined_call_operand.hbm [shape: bf16[128,128], index: 4, kind: input, shape index: {}]
  %s5 = inlined_call_operand.vmem [shape: f32[1,128], index: 5, kind: input, shape index: {}]
  %s6 = inlined_call_operand.vmem [shape: f32[1,128], index: 6, kind: input, shape index: {}]
  %s7 = inlined_call_operand.vmem [shape: f32[1,128], index: 7, kind: input, shape index: {}]
  %s8 = inlined_call_operand.vmem [shape: bf16[2,16,128], index: 8, kind: output, shape index: {}]
  %s9 = sld [smem:[#allocation0]]
  $region73: #{bert_forward.9} parent=0
    _
  %s11 = ssub.s32 1, %s9
  %s12 = scalar_select 0, %s11, %s9
  $region1: #{bert_forward.9} parent=0
    #allocation2 [shape = 'u8[98304]{0}', space=vmem, size = 0x18000, scoped, tag = 'input window, operand 2, single buffered']
    #allocation3 [shape = 's32[2]{0}', space=sflag, size = 0x8, scoped, tag = 'scoped memory for bert_forward.9']
    #allocation4 [shape = 'u8[32768]{0}', space=vmem, size = 0x8000, scoped, tag = 'input window, operand 4, single buffered']
    #allocation5 [shape = 's32[1]{0}', space=sflag, size = 0x4, scoped, tag = 'scoped memory for bert_forward.9']
    %13 = vsyncpa [#allocation3], 0
    %14 = vsyncpa [#allocation5], 0
    loop: start=0, step=1, limit=4
    $region2: #{bert_forward.9} parent=1 // loop_pre_header
      _
    $region3: #{bert_forward.9} parent=1 // loop_header
      %s16 = sphi 0, %s20
      %p17 = scmp.ge.s32.totalorder %s16, 4
      %s26 = sphi 0, %s28
      %s29 = sphi 0, %s26
      %s30 = sphi 0, %s29
      %s46 = sphi 0, %s30
      %s52 = sphi 0, %s54
      %s55 = sphi 0, %s52
      %s56 = sphi 0, %s55
      %s72 = sphi 0, %s56
      %s76 = sphi 0, %s76
      %s78 = sphi 0, %s76
      %s79 = sphi 0, %s78
      %s93 = sphi 0, %s79
      %s97 = sphi 0, %s97
      %s99 = sphi 0, %s97
      %s100 = sphi 0, %s99
      %s114 = sphi 0, %s100
      %s118 = sphi 0, %s118
      %s120 = sphi 0, %s118
      %s121 = sphi 0, %s120
      %s135 = sphi 0, %s121
      %s139 = sphi 0, %s139
      %s141 = sphi 0, %s139
      %s142 = sphi 0, %s141
      %s156 = sphi 0, %s142
      %s160 = sphi 0, %s160
      %s162 = sphi 0, %s160
      %s163 = sphi 0, %s162
      %s177 = sphi 0, %s163
      %s181 = sphi 0, %s181
      %s183 = sphi 0, %s181
      %s184 = sphi 0, %s183
      %s198 = sphi 0, %s184
      %s204 = sphi 0, %s206
      %s207 = sphi 0, %s204
      %s208 = sphi 0, %s207
      %s224 = sphi 0, %s208
    $region4: #{bert_forward.9} parent=1 // loop_header_branch
      %19 = sbr.rel (%p17) target = $region8
    $region5: #{bert_forward.9} parent=1 // loop_body
      %s21 = ssub.s32 %s16, 1
      %s22 = ssub.s32 %s16, 2
      %s23 = sadd.s32 %s16, 1
      %s24 = ssub.s32 %s16, %s23
      %p25 = scmp.eq.s32.totalorder %s24, 0
      %s27 = sadd.s32 %s26, 1
      %s28 = scalar_select %p25, %s26, %s27
      %p31 = pneg %p25
      %p32 = scmp.eq.s32.totalorder %s16, 1
      %p33 = por %p31, %p32
      %p34 = scmp.ne.s32.totalorder %s26, %s29
      %p35 = scmp.eq.s32.totalorder %s16, 0
      %p36 = por %p34, %p35
      %p37 = scmp.ne.s32.totalorder %s26, %s29
      %p38 = scmp.eq.s32.totalorder %s21, 1
      %p39 = por %p37, %p38
      %p40 = scmp.ne.s32.totalorder %s29, %s30
      %p41 = scmp.eq.s32.totalorder %s21, 0
      %p42 = por %p40, %p41
      %p43 = scmp.ne.s32.totalorder %s29, %s30
      %p44 = scmp.eq.s32.totalorder %s22, 1
      %p45 = por %p43, %p44
      %p47 = scmp.ne.s32.totalorder %s30, %s46
      %p48 = scmp.eq.s32.totalorder %s22, 0
      %p49 = por %p47, %p48
      %s50 = ssub.s32 %s16, %s23
      %p51 = scmp.eq.s32.totalorder %s50, 0
      %s53 = sadd.s32 %s52, 1
      %s54 = scalar_select %p51, %s52, %s53
      %p57 = pneg %p51
      %p58 = scmp.eq.s32.totalorder %s16, 1
      %p59 = por %p57, %p58
      %p60 = scmp.ne.s32.totalorder %s52, %s55
      %p61 = scmp.eq.s32.totalorder %s16, 0
      %p62 = por %p60, %p61
      %p63 = scmp.ne.s32.totalorder %s52, %s55
      %p64 = scmp.eq.s32.totalorder %s21, 1
      %p65 = por %p63, %p64
      %p66 = scmp.ne.s32.totalorder %s55, %s56
      %p67 = scmp.eq.s32.totalorder %s21, 0
      %p68 = por %p66, %p67
      %p69 = scmp.ne.s32.totalorder %s55, %s56
      %p70 = scmp.eq.s32.totalorder %s22, 1
      %p71 = por %p69, %p70
      %p73 = scmp.ne.s32.totalorder %s56, %s72
      %p74 = scmp.eq.s32.totalorder %s22, 0
      %p75 = por %p73, %p74
      %s77 = sadd.s32 %s76, 1
      %p80 = scmp.eq.s32.totalorder %s16, 1
      %p81 = scmp.ne.s32.totalorder %s76, %s78
      %p82 = scmp.eq.s32.totalorder %s16, 0
      %p83 = por %p81, %p82
      %p84 = scmp.ne.s32.totalorder %s76, %s78
      %p85 = scmp.eq.s32.totalorder %s21, 1
      %p86 = por %p84, %p85
      %p87 = scmp.ne.s32.totalorder %s78, %s79
      %p88 = scmp.eq.s32.totalorder %s21, 0
      %p89 = por %p87, %p88
      %p90 = scmp.ne.s32.totalorder %s78, %s79
      %p91 = scmp.eq.s32.totalorder %s22, 1
      %p92 = por %p90, %p91
      %p94 = scmp.ne.s32.totalorder %s79, %s93
      %p95 = scmp.eq.s32.totalorder %s22, 0
      %p96 = por %p94, %p95
      %s98 = sadd.s32 %s97, 1
      %p101 = scmp.eq.s32.totalorder %s16, 1
      %p102 = scmp.ne.s32.totalorder %s97, %s99
      %p103 = scmp.eq.s32.totalorder %s16, 0
      %p104 = por %p102, %p103
      %p105 = scmp.ne.s32.totalorder %s97, %s99
      %p106 = scmp.eq.s32.totalorder %s21, 1
      %p107 = por %p105, %p106
      %p108 = scmp.ne.s32.totalorder %s99, %s100
      %p109 = scmp.eq.s32.totalorder %s21, 0
      %p110 = por %p108, %p109
      %p111 = scmp.ne.s32.totalorder %s99, %s100
      %p112 = scmp.eq.s32.totalorder %s22, 1
      %p113 = por %p111, %p112
      %p115 = scmp.ne.s32.totalorder %s100, %s114
      %p116 = scmp.eq.s32.totalorder %s22, 0
      %p117 = por %p115, %p116
      %s119 = sadd.s32 %s118, 1
      %p122 = scmp.eq.s32.totalorder %s16, 1
      %p123 = scmp.ne.s32.totalorder %s118, %s120
      %p124 = scmp.eq.s32.totalorder %s16, 0
      %p125 = por %p123, %p124
      %p126 = scmp.ne.s32.totalorder %s118, %s120
      %p127 = scmp.eq.s32.totalorder %s21, 1
      %p128 = por %p126, %p127
      %p129 = scmp.ne.s32.totalorder %s120, %s121
      %p130 = scmp.eq.s32.totalorder %s21, 0
      %p131 = por %p129, %p130
      %p132 = scmp.ne.s32.totalorder %s120, %s121
      %p133 = scmp.eq.s32.totalorder %s22, 1
      %p134 = por %p132, %p133
      %p136 = scmp.ne.s32.totalorder %s121, %s135
      %p137 = scmp.eq.s32.totalorder %s22, 0
      %p138 = por %p136, %p137
      %s140 = sadd.s32 %s139, 1
      %p143 = scmp.eq.s32.totalorder %s16, 1
      %p144 = scmp.ne.s32.totalorder %s139, %s141
      %p145 = scmp.eq.s32.totalorder %s16, 0
      %p146 = por %p144, %p145
      %p147 = scmp.ne.s32.totalorder %s139, %s141
      %p148 = scmp.eq.s32.totalorder %s21, 1
      %p149 = por %p147, %p148
      %p150 = scmp.ne.s32.totalorder %s141, %s142
      %p151 = scmp.eq.s32.totalorder %s21, 0
      %p152 = por %p150, %p151
      %p153 = scmp.ne.s32.totalorder %s141, %s142
      %p154 = scmp.eq.s32.totalorder %s22, 1
      %p155 = por %p153, %p154
      %p157 = scmp.ne.s32.totalorder %s142, %s156
      %p158 = scmp.eq.s32.totalorder %s22, 0
      %p159 = por %p157, %p158
      %s161 = sadd.s32 %s160, 1
      %p164 = scmp.eq.s32.totalorder %s16, 1
      %p165 = scmp.ne.s32.totalorder %s160, %s162
      %p166 = scmp.eq.s32.totalorder %s16, 0
      %p167 = por %p165, %p166
      %p168 = scmp.ne.s32.totalorder %s160, %s162
      %p169 = scmp.eq.s32.totalorder %s21, 1
      %p170 = por %p168, %p169
      %p171 = scmp.ne.s32.totalorder %s162, %s163
      %p172 = scmp.eq.s32.totalorder %s21, 0
      %p173 = por %p171, %p172
      %p174 = scmp.ne.s32.totalorder %s162, %s163
      %p175 = scmp.eq.s32.totalorder %s22, 1
      %p176 = por %p174, %p175
      %p178 = scmp.ne.s32.totalorder %s163, %s177
      %p179 = scmp.eq.s32.totalorder %s22, 0
      %p180 = por %p178, %p179
      %s182 = sadd.s32 %s181, 1
      %p185 = scmp.eq.s32.totalorder %s16, 1
      %p186 = scmp.ne.s32.totalorder %s181, %s183
      %p187 = scmp.eq.s32.totalorder %s16, 0
      %p188 = por %p186, %p187
      %p189 = scmp.ne.s32.totalorder %s181, %s183
      %p190 = scmp.eq.s32.totalorder %s21, 1
      %p191 = por %p189, %p190
      %p192 = scmp.ne.s32.totalorder %s183, %s184
      %p193 = scmp.eq.s32.totalorder %s21, 0
      %p194 = por %p192, %p193
      %p195 = scmp.ne.s32.totalorder %s183, %s184
      %p196 = scmp.eq.s32.totalorder %s22, 1
      %p197 = por %p195, %p196
      %p199 = scmp.ne.s32.totalorder %s184, %s198
      %p200 = scmp.eq.s32.totalorder %s22, 0
      %p201 = por %p199, %p200
      %s202 = ssub.s32 %s16, %s23
      %p203 = scmp.eq.s32.totalorder %s202, 0
      %s205 = sadd.s32 %s204, 1
      %s206 = scalar_select %p203, %s204, %s205
      %p209 = pneg %p203
      %p210 = scmp.eq.s32.totalorder %s16, 1
      %p211 = por %p209, %p210
      %p212 = scmp.ne.s32.totalorder %s204, %s207
      %p213 = scmp.eq.s32.totalorder %s16, 0
      %p214 = por %p212, %p213
      %p215 = scmp.ne.s32.totalorder %s204, %s207
      %p216 = scmp.eq.s32.totalorder %s21, 1
      %p217 = por %p215, %p216
      %p218 = scmp.ne.s32.totalorder %s207, %s208
      %p219 = scmp.eq.s32.totalorder %s21, 0
      %p220 = por %p218, %p219
      %p221 = scmp.ne.s32.totalorder %s207, %s208
      %p222 = scmp.eq.s32.totalorder %s22, 1
      %p223 = por %p221, %p222
      %p225 = scmp.ne.s32.totalorder %s208, %s224
      %p226 = scmp.eq.s32.totalorder %s22, 0
      %p227 = por %p225, %p226
      %p228 = scmp.le.s32.totalorder 1, %s16
      %p229 = scmp.lt.s32.totalorder %s16, 3
      %p230 = pnand %p228, %p229
      %p231 = pneg %p230
      // Predicated region
      $region9: #{bert_forward.9} parent=5 // pred_check
        _
      $region10: #{bert_forward.9} parent=5 // pred_check_branch
        %233 = sbr.rel (%p230) target = $region12
      $region11: #{bert_forward.9} parent=5 // pred_region
        %s234 = ssub.s32 %s16, 1
        // Predicated region
        $region13: #{bert_forward.9} parent=11 // pred_check
          %p235 = pneg %p89
        $region14: #{bert_forward.9} parent=11 // pred_check_branch
          %237 = sbr.rel (%p235) target = $region16
        $region15: #{bert_forward.9} parent=11 // pred_region
          %239 = vsyncadd [#allocation3], 0
          %s240 = sshll.u32 %s2, 4
          %s241 = int_to_ptr.hbm [resolvable:$true] %s240
          %s242 = sshll.u32 [#allocation2], 4
          %s243 = int_to_ptr.vmem [resolvable:$true] %s242
          %248 = dma.hbm_to_vmem [thread:$0]  %s241, 3072, %s243, [#allocation3], 192, 192, 12
        $region16: #{bert_forward.9} parent=11 // pred_fallthru
          _
        // Predicated region
        $region17: #{bert_forward.9} parent=11 // pred_check
          %p249 = pneg %p110
        $region18: #{bert_forward.9} parent=11 // pred_check_branch
          %251 = sbr.rel (%p249) target = $region20
        $region19: #{bert_forward.9} parent=11 // pred_region
          _
        $region20: #{bert_forward.9} parent=11 // pred_fallthru
          _
        // Predicated region
        $region21: #{bert_forward.9} parent=11 // pred_check
          %p252 = pneg %p131
        $region22: #{bert_forward.9} parent=11 // pred_check_branch
          %254 = sbr.rel (%p252) target = $region24
        $region23: #{bert_forward.9} parent=11 // pred_region
          %256 = vsyncadd [#allocation5], 0
          %s257 = sshll.u32 %s4, 4
          %s258 = int_to_ptr.hbm [resolvable:$true] %s257
          %s259 = sshll.u32 [#allocation4], 4
          %s260 = int_to_ptr.vmem [resolvable:$true] %s259
          %265 = dma.hbm_to_vmem [thread:$0]  %s258, 1024, %s260, [#allocation5], 64, 64, 4
        $region24: #{bert_forward.9} parent=11 // pred_fallthru
          _
        // Predicated region
        $region25: #{bert_forward.9} parent=11 // pred_check
          %p266 = pneg %p152
        $region26: #{bert_forward.9} parent=11 // pred_check_branch
          %268 = sbr.rel (%p266) target = $region28
        $region27: #{bert_forward.9} parent=11 // pred_region
          _
        $region28: #{bert_forward.9} parent=11 // pred_fallthru
          _
        // Predicated region
        $region29: #{bert_forward.9} parent=11 // pred_check
          %p269 = pneg %p173
        $region30: #{bert_forward.9} parent=11 // pred_check_branch
          %271 = sbr.rel (%p269) target = $region32
        $region31: #{bert_forward.9} parent=11 // pred_region
          _
        $region32: #{bert_forward.9} parent=11 // pred_fallthru
          _
        // Predicated region
        $region33: #{bert_forward.9} parent=11 // pred_check
          %p272 = pneg %p194
        $region34: #{bert_forward.9} parent=11 // pred_check_branch
          %274 = sbr.rel (%p272) target = $region36
        $region35: #{bert_forward.9} parent=11 // pred_region
          _
        $region36: #{bert_forward.9} parent=11 // pred_fallthru
          _
      $region12: #{bert_forward.9} parent=5 // pred_fallthru
        _
      %p275 = scmp.lt.s32.totalorder %s16, 2
      // Predicated region
      $region37: #{bert_forward.9} parent=5 // pred_check
        %p276 = pneg %p275
      $region38: #{bert_forward.9} parent=5 // pred_check_branch
        %278 = sbr.rel (%p276) target = $region40
      $region39: #{bert_forward.9} parent=5 // pred_region
        // Predicated region
        $region41: #{bert_forward.9} parent=39 // pred_check
          %p279 = pneg %p36
        $region42: #{bert_forward.9} parent=39 // pred_check_branch
          %281 = sbr.rel (%p279) target = $region44
        $region43: #{bert_forward.9} parent=39 // pred_region
          %p282 = scmp.lt.s32.totalorder %s16, 1
          %s283 = scalar_select %p282, %s16, 1
          %s284 = smul.addr %s283, 2
          %s285 = smul.addr %s284, 4
          %s286 = scalar_lea.vmem %s0, %s285
        $region44: #{bert_forward.9} parent=39 // pred_fallthru
          _
        // Predicated region
        $region45: #{bert_forward.9} parent=39 // pred_check
          %p287 = pneg %p62
        $region46: #{bert_forward.9} parent=39 // pred_check_branch
          %289 = sbr.rel (%p287) target = $region48
        $region47: #{bert_forward.9} parent=39 // pred_region
          %p290 = scmp.lt.s32.totalorder %s16, 1
          %s291 = scalar_select %p290, %s16, 1
          %s292 = scalar_lea.vmem %s1, %s291
        $region48: #{bert_forward.9} parent=39 // pred_fallthru
          _
      $region40: #{bert_forward.9} parent=5 // pred_fallthru
        _
      %p293 = scmp.le.s32.totalorder 1, %s16
      %p294 = scmp.lt.s32.totalorder %s16, 3
      %p295 = pnand %p293, %p294
      %p296 = pneg %p295
      // Predicated region
      $region49: #{bert_forward.9} parent=5 // pred_check
        _
      $region50: #{bert_forward.9} parent=5 // pred_check_branch
        %298 = sbr.rel (%p295) target = $region52
      $region51: #{bert_forward.9} parent=5 // pred_region
        %s299 = ssub.s32 %s16, 1
        // Predicated region
        $region53: #{bert_forward.9} parent=51 // pred_check
          %p300 = pneg %p89
        $region54: #{bert_forward.9} parent=51 // pred_check_branch
          %302 = sbr.rel (%p300) target = $region56
        $region55: #{bert_forward.9} parent=51 // pred_region
          %304 = dma.done [#allocation3], 3072
        $region56: #{bert_forward.9} parent=51 // pred_fallthru
          _
        // Predicated region
        $region57: #{bert_forward.9} parent=51 // pred_check
          %p305 = pneg %p131
        $region58: #{bert_forward.9} parent=51 // pred_check_branch
          %307 = sbr.rel (%p305) target = $region60
        $region59: #{bert_forward.9} parent=51 // pred_region
          %309 = dma.done [#allocation5], 1024
        $region60: #{bert_forward.9} parent=51 // pred_fallthru
          _
        %p310 = scmp.lt.s32.totalorder %s21, 1
        %s311 = scalar_select %p310, %s21, 1
        %s312 = smul.addr %s311, 2
        %s313 = smul.addr %s312, 4
        %s314 = scalar_lea.vmem %s0, %s313
        %p315 = pneg %p42
        %p316 = pneg %p39
        %p317 = scmp.lt.s32.totalorder %s21, 1
        %s318 = scalar_select %p317, %s21, 1
        %s319 = scalar_lea.vmem %s1, %s318
        %p320 = pneg %p68
        %p321 = pneg %p65
        %p322 = pneg %p89
        %p323 = pneg %p86
        %p324 = pneg %p110
        %p325 = pneg %p107
        %p326 = pneg %p131
        %p327 = pneg %p128
        %p328 = pneg %p152
        %p329 = pneg %p149
        %p330 = pneg %p173
        %p331 = pneg %p170
        %p332 = pneg %p194
        %p333 = pneg %p191
        %p334 = pneg %p220
        %p335 = pneg %p217
        %p336 = scmp.lt.s32.totalorder %s21, 1
        %s337 = scalar_select %p336, %s21, 1
        %s338 = smul.addr %s337, 2
        %s339 = smul.addr %s338, 4
        %s340 = scalar_lea.vmem %s8, %s339
        %p341 = scmp.lt.s32.totalorder %s21, 1
        %s342 = scalar_select %p341, %s21, 1
        %s343 = smul.addr %s342, 2
        %s344 = smul.addr %s343, 4
        %s345 = scalar_lea.vmem %s0, %s344
        %p346 = scmp.lt.s32.totalorder %s21, 1
        %s347 = scalar_select %p346, %s21, 1
        %s348 = scalar_lea.vmem %s1, %s347
        %p349 = scmp.lt.s32.totalorder %s21, 1
        %s350 = scalar_select %p349, %s21, 1
        %s351 = smul.addr %s350, 2
        %s352 = smul.addr %s351, 4
        %s353 = scalar_lea.vmem %s8, %s352
        %v355 = vld [vmem:[%s345] sm:$0xf]
        %v356 = vld [vmem:[%s345 + $0x4] sm:$0xf]
        %v357 = vld [vmem:[%s348] sm:$0x1]
        %v358 = vld [vmem:[#allocation2] sm:$0xff]
        %v359 = vld [vmem:[#allocation2 + $0x8] sm:$0xf]
        %v360 = vld [vmem:[#allocation2 + $0xc] sm:$0xff]
        %v361 = vld [vmem:[#allocation2 + $0x14] sm:$0xf]
        %v362 = vld [vmem:[#allocation2 + $0x18] sm:$0xff]
        %v363 = vld [vmem:[#allocation2 + $0x20] sm:$0xf]
        %v364 = vld [vmem:[#allocation2 + $0x24] sm:$0xff]
        %v365 = vld [vmem:[#allocation2 + $0x2c] sm:$0xf]
        %v366 = vld [vmem:[#allocation2 + $0x30] sm:$0xff]
        %v367 = vld [vmem:[#allocation2 + $0x38] sm:$0xf]
        %v368 = vld [vmem:[#allocation2 + $0x3c] sm:$0xff]
        %v369 = vld [vmem:[#allocation2 + $0x44] sm:$0xf]
        %v370 = vld [vmem:[#allocation2 + $0x48] sm:$0xff]
        %v371 = vld [vmem:[#allocation2 + $0x50] sm:$0xf]
        %v372 = vld [vmem:[#allocation2 + $0x54] sm:$0xff]
        %v373 = vld [vmem:[#allocation2 + $0x5c] sm:$0xf]
        %v374 = vld [vmem:[#allocation2 + $0x60] sm:$0xff]
        %v375 = vld [vmem:[#allocation2 + $0x68] sm:$0xf]
        %v376 = vld [vmem:[#allocation2 + $0x6c] sm:$0xff]
        %v377 = vld [vmem:[#allocation2 + $0x74] sm:$0xf]
        %v378 = vld [vmem:[#allocation2 + $0x78] sm:$0xff]
        %v379 = vld [vmem:[#allocation2 + $0x80] sm:$0xf]
        %v380 = vld [vmem:[#allocation2 + $0x84] sm:$0xff]
        %v381 = vld [vmem:[#allocation2 + $0x8c] sm:$0xf]
        %v382 = vld [vmem:[#allocation2 + $0x90] sm:$0xff]
        %v383 = vld [vmem:[#allocation2 + $0x98] sm:$0xf]
        %v384 = vld [vmem:[#allocation2 + $0x9c] sm:$0xff]
        %v385 = vld [vmem:[#allocation2 + $0xa4] sm:$0xf]
        %v386 = vld [vmem:[#allocation2 + $0xa8] sm:$0xff]
        %v387 = vld [vmem:[#allocation2 + $0xb0] sm:$0xf]
        %v388 = vld [vmem:[#allocation2 + $0xb4] sm:$0xff]
        %v389 = vld [vmem:[#allocation2 + $0xbc] sm:$0xf]
        %v390 = vld [vmem:[%s3] sm:$0x7]
        %v392 = vperm.slane %v390, 0
        %v393 = vperm.slane %v390, 1
        %v394 = vperm.slane %v390, 2
        %v400 = vunpack.c.l.b16 %v355
        %v401 = vunpack.c.l.b16 %v356
        %v402 = vpack.c.b16 %v401, %v400
        %v436 = vunpack.c.l.b16 %v358
        %v437 = vunpack.c.h.b16 %v358
        %v438 = vunpack.c.l.b16 %v359
        %v439 = vunpack.c.l.b16 %v360
        %v440 = vunpack.c.h.b16 %v360
        %v441 = vunpack.c.l.b16 %v361
        %v442 = vunpack.c.l.b16 %v362
        %v443 = vunpack.c.h.b16 %v362
        %v444 = vunpack.c.l.b16 %v363
        %v445 = vunpack.c.l.b16 %v364
        %v446 = vunpack.c.h.b16 %v364
        %v447 = vunpack.c.l.b16 %v365
        %v448 = vunpack.c.l.b16 %v366
        %v449 = vunpack.c.h.b16 %v366
        %v450 = vunpack.c.l.b16 %v367
        %v451 = vunpack.c.l.b16 %v368
        %v452 = vunpack.c.h.b16 %v368
        %v453 = vunpack.c.l.b16 %v369
        %v454 = vunpack.c.l.b16 %v370
        %v455 = vunpack.c.h.b16 %v370
        %v456 = vunpack.c.l.b16 %v371
        %v457 = vunpack.c.l.b16 %v372
        %v458 = vunpack.c.h.b16 %v372
        %v459 = vunpack.c.l.b16 %v373
        %v460 = vunpack.c.l.b16 %v374
        %v461 = vunpack.c.h.b16 %v374
        %v462 = vunpack.c.l.b16 %v375
        %v463 = vunpack.c.l.b16 %v376
        %v464 = vunpack.c.h.b16 %v376
        %v465 = vunpack.c.l.b16 %v377
        %v466 = vunpack.c.l.b16 %v378
        %v467 = vunpack.c.h.b16 %v378
        %v468 = vunpack.c.l.b16 %v379
        %v469 = vunpack.c.l.b16 %v380
        %v470 = vunpack.c.h.b16 %v380
        %v471 = vunpack.c.l.b16 %v381
        %v472 = vunpack.c.l.b16 %v382
        %v473 = vunpack.c.h.b16 %v382
        %v474 = vunpack.c.l.b16 %v383
        %v475 = vunpack.c.l.b16 %v384
        %v476 = vunpack.c.h.b16 %v384
        %v477 = vunpack.c.l.b16 %v385
        %v478 = vunpack.c.l.b16 %v386
        %v479 = vunpack.c.h.b16 %v386
        %v480 = vunpack.c.l.b16 %v387
        %v481 = vunpack.c.l.b16 %v388
        %v482 = vunpack.c.h.b16 %v388
        %v483 = vunpack.c.l.b16 %v389
        %v484 = vpack.c.b16 %v439, %v436
        %v485 = vpack.c.b16 %v440, %v437
        %v486 = vpack.c.b16 %v441, %v438
        %v487 = vpack.c.b16 %v445, %v442
        %v488 = vpack.c.b16 %v446, %v443
        %v489 = vpack.c.b16 %v447, %v444
        %v490 = vpack.c.b16 %v451, %v448
        %v491 = vpack.c.b16 %v452, %v449
        %v492 = vpack.c.b16 %v453, %v450
        %v493 = vpack.c.b16 %v457, %v454
        %v494 = vpack.c.b16 %v458, %v455
        %v495 = vpack.c.b16 %v459, %v456
        %v496 = vpack.c.b16 %v463, %v460
        %v497 = vpack.c.b16 %v464, %v461
        %v498 = vpack.c.b16 %v465, %v462
        %v499 = vpack.c.b16 %v469, %v466
        %v500 = vpack.c.b16 %v470, %v467
        %v501 = vpack.c.b16 %v471, %v468
        %v502 = vpack.c.b16 %v475, %v472
        %v503 = vpack.c.b16 %v476, %v473
        %v504 = vpack.c.b16 %v477, %v474
        %v505 = vpack.c.b16 %v481, %v478
        %v506 = vpack.c.b16 %v482, %v479
        %v507 = vpack.c.b16 %v483, %v480
        %532 = vmatpush.bf16.msra.mxu0 %v505
        %533 = vmatpush.bf16.msra.mxu0 %v502
        %534 = vmatpush.bf16.msra.mxu0 %v499
        %535 = vmatpush.bf16.msra.mxu0 %v496
        %536 = vmatpush.bf16.msra.mxu0 %v493
        %537 = vmatpush.bf16.msra.mxu0 %v490
        %538 = vmatpush.bf16.msra.mxu0 %v487
        %539 = vmatpush.bf16.msra.mxu0 %v484
        %540 = vmatmul.bf16.gmra.mxu0 %v402
        %v541 = vpop.f32.mrf.mxu0
        %v542 = vadd.f32 %v392, %v541
        %v543 = vpop.f32.mrf.mxu0
        %v544 = vadd.f32 %v392, %v543
        %545 = vdwg.mxu0
        %546 = vmatpush.bf16.msra.mxu0 %v506
        %547 = vmatpush.bf16.msra.mxu0 %v503
        %548 = vmatpush.bf16.msra.mxu0 %v500
        %549 = vmatpush.bf16.msra.mxu0 %v497
        %550 = vmatpush.bf16.msra.mxu0 %v494
        %551 = vmatpush.bf16.msra.mxu0 %v491
        %552 = vmatpush.bf16.msra.mxu0 %v488
        %553 = vmatpush.bf16.msra.mxu0 %v485
        %554 = vmatmul.bf16.gmra.mxu0 %v402
        %v555 = vpop.f32.mrf.mxu0
        %v556 = vadd.f32 %v393, %v555
        %v557 = vpop.f32.mrf.mxu0
        %v558 = vadd.f32 %v393, %v557
        %559 = vdwg.mxu0
        %560 = vmatpush.bf16.msra.mxu0 %v507
        %561 = vmatpush.bf16.msra.mxu0 %v504
        %562 = vmatpush.bf16.msra.mxu0 %v501
        %563 = vmatpush.bf16.msra.mxu0 %v498
        %564 = vmatpush.bf16.msra.mxu0 %v495
        %565 = vmatpush.bf16.msra.mxu0 %v492
        %566 = vmatpush.bf16.msra.mxu0 %v489
        %567 = vmatpush.bf16.msra.mxu0 %v486
        %568 = vmatmul.bf16.gmra.mxu0 %v402
        %v569 = vpop.f32.mrf.mxu0
        %v570 = vadd.f32 %v394, %v569
        %v571 = vpop.f32.mrf.mxu0
        %v572 = vadd.f32 %v394, %v571
        %573 = vdwg.mxu0
        %v574 = vpack.c.bf16 %v556, %v542
        %v575 = vpack.c.bf16 %v570, %v570
        %v576 = vpack.c.bf16 %v558, %v544
        %v577 = vpack.c.bf16 %v572, %v572
        %580 = vrot.lane.b32.xlu0 %v574, 96
        %v581 = vpop.permute.xlu0 %580
        %582 = vrot.lane.b32.xlu0 %v576, 96
        %v583 = vpop.permute.xlu0 %582
        %584 = vrot.lane.b32.xlu0 %v574, 64
        %v585 = vpop.permute.xlu0 %584
        %586 = vrot.lane.b32.xlu0 %v576, 64
        %v587 = vpop.permute.xlu0 %586
        %588 = vrot.lane.b32.xlu0 %v574, 32
        %v589 = vpop.permute.xlu0 %588
        %590 = vrot.lane.b32.xlu0 %v576, 32
        %v591 = vpop.permute.xlu0 %590
        %v592 = vrot.slane %v574, 4
        %v593 = vrot.slane %v576, 4
        %v594 = vrot.slane %v581, 4
        %v595 = vrot.slane %v583, 4
        %v596 = vrot.slane %v585, 4
        %v597 = vrot.slane %v587, 4
        %v598 = vrot.slane %v589, 4
        %v599 = vrot.slane %v591, 4
        %602 = vrot.lane.b32.xlu0 %v575, 96
        %v603 = vpop.permute.xlu0 %602
        %604 = vrot.lane.b32.xlu0 %v577, 96
        %v605 = vpop.permute.xlu0 %604
        %606 = vrot.lane.b32.xlu0 %v575, 64
        %v607 = vpop.permute.xlu0 %606
        %608 = vrot.lane.b32.xlu0 %v577, 64
        %v609 = vpop.permute.xlu0 %608
        %610 = vrot.lane.b32.xlu0 %v575, 32
        %v611 = vpop.permute.xlu0 %610
        %612 = vrot.lane.b32.xlu0 %v577, 32
        %v613 = vpop.permute.xlu0 %612
        %v614 = vunpack.c.l.b16 %v574
        %v615 = vunpack.c.l.b16 %v576
        %v616 = vpack.c.b16 %v615, %v614
        %v617 = vunpack.c.l.b16 %v592
        %v618 = vunpack.c.l.b16 %v593
        %v619 = vpack.c.b16 %v618, %v617
        %vm620 = vcmask 261120
        %v622 = vsel %vm620, %v616, 0
        %v625 = vsel %vm620, %v619, 0
        %627 = vmatpush.bf16.xpose.msra.mxu0 0
        %628 = vmatpush.bf16.xpose.msra.mxu0 0
        %629 = vmatpush.bf16.xpose.msra.mxu0 0
        %630 = vmatpush.bf16.xpose.msra.mxu0 0
        %631 = vmatpush.bf16.xpose.msra.mxu0 0
        %632 = vmatpush.bf16.xpose.msra.mxu0 0
        %633 = vmatpush.bf16.xpose.msra.mxu0 0
        %634 = vmatpush.bf16.xpose.msra.mxu0 %v625
        %635 = vmatmul.bf16.gmra.mxu0 %v622
        %v636 = vpop.f32.mrf.mxu0
        %v637 = vadd.f32 0.0, %v636
        %v638 = vpop.f32.mrf.mxu0
        %v639 = vadd.f32 0.0, %v638
        %640 = vdwg.mxu0
        %v641 = vunpack.c.l.b16 %v581
        %v642 = vunpack.c.l.b16 %v583
        %v643 = vpack.c.b16 %v642, %v641
        %v644 = vunpack.c.l.b16 %v594
        %v645 = vunpack.c.l.b16 %v595
        %v646 = vpack.c.b16 %v645, %v644
        %v648 = vsel %vm620, %v643, 0
        %v651 = vsel %vm620, %v646, 0
        %653 = vmatpush.bf16.xpose.msra.mxu0 0
        %654 = vmatpush.bf16.xpose.msra.mxu0 0
        %655 = vmatpush.bf16.xpose.msra.mxu0 0
        %656 = vmatpush.bf16.xpose.msra.mxu0 0
        %657 = vmatpush.bf16.xpose.msra.mxu0 0
        %658 = vmatpush.bf16.xpose.msra.mxu0 0
        %659 = vmatpush.bf16.xpose.msra.mxu0 0
        %660 = vmatpush.bf16.xpose.msra.mxu0 %v651
        %661 = vmatmul.bf16.gmra.mxu0 %v648
        %v662 = vpop.f32.mrf.mxu0
        %v663 = vadd.f32 0.0, %v662
        %v664 = vpop.f32.mrf.mxu0
        %v665 = vadd.f32 0.0, %v664
        %666 = vdwg.mxu0
        %v667 = vunpack.c.l.b16 %v585
        %v668 = vunpack.c.l.b16 %v587
        %v669 = vpack.c.b16 %v668, %v667
        %v670 = vunpack.c.l.b16 %v596
        %v671 = vunpack.c.l.b16 %v597
        %v672 = vpack.c.b16 %v671, %v670
        %v674 = vsel %vm620, %v669, 0
        %v677 = vsel %vm620, %v672, 0
        %679 = vmatpush.bf16.xpose.msra.mxu0 0
        %680 = vmatpush.bf16.xpose.msra.mxu0 0
        %681 = vmatpush.bf16.xpose.msra.mxu0 0
        %682 = vmatpush.bf16.xpose.msra.mxu0 0
        %683 = vmatpush.bf16.xpose.msra.mxu0 0
        %684 = vmatpush.bf16.xpose.msra.mxu0 0
        %685 = vmatpush.bf16.xpose.msra.mxu0 0
        %686 = vmatpush.bf16.xpose.msra.mxu0 %v677
        %687 = vmatmul.bf16.gmra.mxu0 %v674
        %v688 = vpop.f32.mrf.mxu0
        %v689 = vadd.f32 0.0, %v688
        %v690 = vpop.f32.mrf.mxu0
        %v691 = vadd.f32 0.0, %v690
        %692 = vdwg.mxu0
        %v693 = vunpack.c.l.b16 %v589
        %v694 = vunpack.c.l.b16 %v591
        %v695 = vpack.c.b16 %v694, %v693
        %v696 = vunpack.c.l.b16 %v598
        %v697 = vunpack.c.l.b16 %v599
        %v698 = vpack.c.b16 %v697, %v696
        %v700 = vsel %vm620, %v695, 0
        %v703 = vsel %vm620, %v698, 0
        %705 = vmatpush.bf16.xpose.msra.mxu0 0
        %706 = vmatpush.bf16.xpose.msra.mxu0 0
        %707 = vmatpush.bf16.xpose.msra.mxu0 0
        %708 = vmatpush.bf16.xpose.msra.mxu0 0
        %709 = vmatpush.bf16.xpose.msra.mxu0 0
        %710 = vmatpush.bf16.xpose.msra.mxu0 0
        %711 = vmatpush.bf16.xpose.msra.mxu0 0
        %712 = vmatpush.bf16.xpose.msra.mxu0 %v703
        %713 = vmatmul.bf16.gmra.mxu0 %v700
        %v714 = vpop.f32.mrf.mxu0
        %v715 = vadd.f32 0.0, %v714
        %v716 = vpop.f32.mrf.mxu0
        %v717 = vadd.f32 0.0, %v716
        %718 = vdwg.mxu0
        %v719 = vmul.f32 %v637, 0.17677669
        %v720 = vmul.f32 %v639, 0.17677669
        %v721 = vmul.f32 %v663, 0.17677669
        %v722 = vmul.f32 %v665, 0.17677669
        %v723 = vmul.f32 %v689, 0.17677669
        %v724 = vmul.f32 %v691, 0.17677669
        %v725 = vmul.f32 %v715, 0.17677669
        %v726 = vmul.f32 %v717, 0.17677669
        %v728 = vperm.slane %v357, 0
        %v730 = vadd.f32 %v719, %v728
        %v731 = vadd.f32 %v720, %v728
        %v732 = vadd.f32 %v721, %v728
        %v733 = vadd.f32 %v722, %v728
        %v734 = vadd.f32 %v723, %v728
        %v735 = vadd.f32 %v724, %v728
        %v736 = vadd.f32 %v725, %v728
        %v737 = vadd.f32 %v726, %v728
        %vm738 = vcmask 130048
        %v739 = vsel %vm738, %v730, -inf
        %740 = vmax.xlane.f32.xlu0 %v739
        %v741 = vpop.xlane.xlu0 %740
        %v742 = vsel %vm738, %v731, -inf
        %743 = vmax.xlane.f32.xlu0 %v742
        %v744 = vpop.xlane.xlu0 %743
        %v745 = vsel %vm738, %v732, -inf
        %746 = vmax.xlane.f32.xlu0 %v745
        %v747 = vpop.xlane.xlu0 %746
        %v748 = vsel %vm738, %v733, -inf
        %749 = vmax.xlane.f32.xlu0 %v748
        %v750 = vpop.xlane.xlu0 %749
        %v751 = vsel %vm738, %v734, -inf
        %752 = vmax.xlane.f32.xlu0 %v751
        %v753 = vpop.xlane.xlu0 %752
        %v754 = vsel %vm738, %v735, -inf
        %755 = vmax.xlane.f32.xlu0 %v754
        %v756 = vpop.xlane.xlu0 %755
        %v757 = vsel %vm738, %v736, -inf
        %758 = vmax.xlane.f32.xlu0 %v757
        %v759 = vpop.xlane.xlu0 %758
        %v760 = vsel %vm738, %v737, -inf
        %761 = vmax.xlane.f32.xlu0 %v760
        %v762 = vpop.xlane.xlu0 %761
        %v763 = vsub.f32 %v730, %v741
        %v764 = vsub.f32 %v731, %v744
        %v765 = vsub.f32 %v732, %v747
        %v766 = vsub.f32 %v733, %v750
        %v767 = vsub.f32 %v734, %v753
        %v768 = vsub.f32 %v735, %v756
        %v769 = vsub.f32 %v736, %v759
        %v770 = vsub.f32 %v737, %v762
        %v771 = vmul.f32 %v763, 1.442695
        %v772 = vpow.pop %v771
        %v773 = vmul.f32 %v764, 1.442695
        %v774 = vpow.pop %v773
        %v775 = vmul.f32 %v765, 1.442695
        %v776 = vpow.pop %v775
        %v777 = vmul.f32 %v766, 1.442695
        %v778 = vpow.pop %v777
        %v779 = vmul.f32 %v767, 1.442695
        %v780 = vpow.pop %v779
        %v781 = vmul.f32 %v768, 1.442695
        %v782 = vpow.pop %v781
        %v783 = vmul.f32 %v769, 1.442695
        %v784 = vpow.pop %v783
        %v785 = vmul.f32 %v770, 1.442695
        %v786 = vpow.pop %v785
        %v787 = vsel %vm738, %v772, 0.0
        %788 = vadd.xlane.f32.xlu0 %v787
        %v789 = vpop.xlane.xlu0 %788
        %v790 = vsel %vm738, %v774, 0.0
        %791 = vadd.xlane.f32.xlu0 %v790
        %v792 = vpop.xlane.xlu0 %791
        %v793 = vsel %vm738, %v776, 0.0
        %794 = vadd.xlane.f32.xlu0 %v793
        %v795 = vpop.xlane.xlu0 %794
        %v796 = vsel %vm738, %v778, 0.0
        %797 = vadd.xlane.f32.xlu0 %v796
        %v798 = vpop.xlane.xlu0 %797
        %v799 = vsel %vm738, %v780, 0.0
        %800 = vadd.xlane.f32.xlu0 %v799
        %v801 = vpop.xlane.xlu0 %800
        %v802 = vsel %vm738, %v782, 0.0
        %803 = vadd.xlane.f32.xlu0 %v802
        %v804 = vpop.xlane.xlu0 %803
        %v805 = vsel %vm738, %v784, 0.0
        %806 = vadd.xlane.f32.xlu0 %v805
        %v807 = vpop.xlane.xlu0 %806
        %v808 = vsel %vm738, %v786, 0.0
        %809 = vadd.xlane.f32.xlu0 %v808
        %v810 = vpop.xlane.xlu0 %809
        %v811 = vrcp.pop %v789
        %v812 = vrcp.pop %v792
        %v813 = vrcp.pop %v795
        %v814 = vrcp.pop %v798
        %v815 = vrcp.pop %v801
        %v816 = vrcp.pop %v804
        %v817 = vrcp.pop %v807
        %v818 = vrcp.pop %v810
        %v819 = vmul.f32 %v772, %v811
        %v820 = vmul.f32 %v774, %v812
        %v821 = vmul.f32 %v776, %v813
        %v822 = vmul.f32 %v778, %v814
        %v823 = vmul.f32 %v780, %v815
        %v824 = vmul.f32 %v782, %v816
        %v825 = vmul.f32 %v784, %v817
        %v826 = vmul.f32 %v786, %v818
        %v827 = vpack.c.bf16 %v819, %v819
        %v828 = vpack.c.bf16 %v820, %v820
        %v829 = vpack.c.bf16 %v821, %v821
        %v830 = vpack.c.bf16 %v822, %v822
        %v831 = vpack.c.bf16 %v823, %v823
        %v832 = vpack.c.bf16 %v824, %v824
        %v833 = vpack.c.bf16 %v825, %v825
        %v834 = vpack.c.bf16 %v826, %v826
        %v837 = vunpack.c.l.b16 %v827
        %v838 = vunpack.c.l.b16 %v828
        %v839 = vpack.c.b16 %v838, %v837
        %v840 = vunpack.c.l.b16 %v575
        %v841 = vunpack.c.l.b16 %v577
        %v842 = vpack.c.b16 %v841, %v840
        %v845 = vsel %vm738, %v839, 0
        %847 = vmatpush.bf16.msra.mxu0 0
        %848 = vmatpush.bf16.msra.mxu0 0
        %849 = vmatpush.bf16.msra.mxu0 0
        %850 = vmatpush.bf16.msra.mxu0 0
        %851 = vmatpush.bf16.msra.mxu0 0
        %852 = vmatpush.bf16.msra.mxu0 0
        %853 = vmatpush.bf16.msra.mxu0 0
        %854 = vmatpush.bf16.msra.mxu0 %v842
        %855 = vmatmul.bf16.gmra.mxu0 %v845
        %v856 = vpop.f32.mrf.mxu0
        %v857 = vadd.f32 0.0, %v856
        %v858 = vpop.f32.mrf.mxu0
        %v859 = vadd.f32 0.0, %v858
        %860 = vdwg.mxu0
        %v863 = vunpack.c.l.b16 %v829
        %v864 = vunpack.c.l.b16 %v830
        %v865 = vpack.c.b16 %v864, %v863
        %v866 = vunpack.c.l.b16 %v603
        %v867 = vunpack.c.l.b16 %v605
        %v868 = vpack.c.b16 %v867, %v866
        %v871 = vsel %vm738, %v865, 0
        %873 = vmatpush.bf16.msra.mxu0 0
        %874 = vmatpush.bf16.msra.mxu0 0
        %875 = vmatpush.bf16.msra.mxu0 0
        %876 = vmatpush.bf16.msra.mxu0 0
        %877 = vmatpush.bf16.msra.mxu0 0
        %878 = vmatpush.bf16.msra.mxu0 0
        %879 = vmatpush.bf16.msra.mxu0 0
        %880 = vmatpush.bf16.msra.mxu0 %v868
        %881 = vmatmul.bf16.gmra.mxu0 %v871
        %v882 = vpop.f32.mrf.mxu0
        %v883 = vadd.f32 0.0, %v882
        %v884 = vpop.f32.mrf.mxu0
        %v885 = vadd.f32 0.0, %v884
        %886 = vdwg.mxu0
        %v889 = vunpack.c.l.b16 %v831
        %v890 = vunpack.c.l.b16 %v832
        %v891 = vpack.c.b16 %v890, %v889
        %v892 = vunpack.c.l.b16 %v607
        %v893 = vunpack.c.l.b16 %v609
        %v894 = vpack.c.b16 %v893, %v892
        %v897 = vsel %vm738, %v891, 0
        %899 = vmatpush.bf16.msra.mxu0 0
        %900 = vmatpush.bf16.msra.mxu0 0
        %901 = vmatpush.bf16.msra.mxu0 0
        %902 = vmatpush.bf16.msra.mxu0 0
        %903 = vmatpush.bf16.msra.mxu0 0
        %904 = vmatpush.bf16.msra.mxu0 0
        %905 = vmatpush.bf16.msra.mxu0 0
        %906 = vmatpush.bf16.msra.mxu0 %v894
        %907 = vmatmul.bf16.gmra.mxu0 %v897
        %v908 = vpop.f32.mrf.mxu0
        %v909 = vadd.f32 0.0, %v908
        %v910 = vpop.f32.mrf.mxu0
        %v911 = vadd.f32 0.0, %v910
        %912 = vdwg.mxu0
        %v915 = vunpack.c.l.b16 %v833
        %v916 = vunpack.c.l.b16 %v834
        %v917 = vpack.c.b16 %v916, %v915
        %v918 = vunpack.c.l.b16 %v611
        %v919 = vunpack.c.l.b16 %v613
        %v920 = vpack.c.b16 %v919, %v918
        %v923 = vsel %vm738, %v917, 0
        %925 = vmatpush.bf16.msra.mxu0 0
        %926 = vmatpush.bf16.msra.mxu0 0
        %927 = vmatpush.bf16.msra.mxu0 0
        %928 = vmatpush.bf16.msra.mxu0 0
        %929 = vmatpush.bf16.msra.mxu0 0
        %930 = vmatpush.bf16.msra.mxu0 0
        %931 = vmatpush.bf16.msra.mxu0 0
        %932 = vmatpush.bf16.msra.mxu0 %v920
        %933 = vmatmul.bf16.gmra.mxu0 %v923
        %v934 = vpop.f32.mrf.mxu0
        %v935 = vadd.f32 0.0, %v934
        %v936 = vpop.f32.mrf.mxu0
        %v937 = vadd.f32 0.0, %v936
        %938 = vdwg.mxu0
        %v939 = vld [vmem:[#allocation4] sm:$0xf]
        %v940 = vld [vmem:[#allocation4 + $0x4] sm:$0xf]
        %v941 = vld [vmem:[#allocation4 + $0x8] sm:$0xf]
        %v942 = vld [vmem:[#allocation4 + $0xc] sm:$0xf]
        %v943 = vld [vmem:[#allocation4 + $0x10] sm:$0xf]
        %v944 = vld [vmem:[#allocation4 + $0x14] sm:$0xf]
        %v945 = vld [vmem:[#allocation4 + $0x18] sm:$0xf]
        %v946 = vld [vmem:[#allocation4 + $0x1c] sm:$0xf]
        %v947 = vld [vmem:[#allocation4 + $0x20] sm:$0xf]
        %v948 = vld [vmem:[#allocation4 + $0x24] sm:$0xf]
        %v949 = vld [vmem:[#allocation4 + $0x28] sm:$0xf]
        %v950 = vld [vmem:[#allocation4 + $0x2c] sm:$0xf]
        %v951 = vld [vmem:[#allocation4 + $0x30] sm:$0xf]
        %v952 = vld [vmem:[#allocation4 + $0x34] sm:$0xf]
        %v953 = vld [vmem:[#allocation4 + $0x38] sm:$0xf]
        %v954 = vld [vmem:[#allocation4 + $0x3c] sm:$0xf]
        %v955 = vpack.c.bf16 %v859, %v857
        %v956 = vpack.c.bf16 %v885, %v883
        %v961 = vunpack.c.l.b16 %v943
        %v962 = vunpack.c.l.b16 %v944
        %v963 = vunpack.c.l.b16 %v945
        %v964 = vunpack.c.l.b16 %v946
        %v965 = vpack.c.b16 %v962, %v961
        %v966 = vpack.c.b16 %v964, %v963
        %v970 = vsel %vm620, %v956, 0
        %972 = vmatpush.bf16.msra.mxu0 0
        %973 = vmatpush.bf16.msra.mxu0 0
        %974 = vmatpush.bf16.msra.mxu0 0
        %975 = vmatpush.bf16.msra.mxu0 0
        %976 = vmatpush.bf16.msra.mxu0 0
        %977 = vmatpush.bf16.msra.mxu0 0
        %978 = vmatpush.bf16.msra.mxu0 %v966
        %979 = vmatpush.bf16.msra.mxu0 %v965
        %980 = vmatmul.bf16.gmra.mxu0 %v970
        %v981 = vpop.f32.mrf.mxu0
        %v982 = vadd.f32 0.0, %v981
        %v983 = vpop.f32.mrf.mxu0
        %v984 = vadd.f32 0.0, %v983
        %985 = vdwg.mxu0
        %v990 = vunpack.c.l.b16 %v939
        %v991 = vunpack.c.l.b16 %v940
        %v992 = vunpack.c.l.b16 %v941
        %v993 = vunpack.c.l.b16 %v942
        %v994 = vpack.c.b16 %v991, %v990
        %v995 = vpack.c.b16 %v993, %v992
        %v999 = vsel %vm620, %v955, 0
        %1001 = vmatpush.bf16.msra.mxu0 0
        %1002 = vmatpush.bf16.msra.mxu0 0
        %1003 = vmatpush.bf16.msra.mxu0 0
        %1004 = vmatpush.bf16.msra.mxu0 0
        %1005 = vmatpush.bf16.msra.mxu0 0
        %1006 = vmatpush.bf16.msra.mxu0 0
        %1007 = vmatpush.bf16.msra.mxu0 %v995
        %1008 = vmatpush.bf16.msra.mxu0 %v994
        %1009 = vmatmul.bf16.gmra.mxu0 %v999
        %v1010 = vpop.f32.mrf.mxu0
        %v1011 = vadd.f32 %v982, %v1010
        %v1012 = vpop.f32.mrf.mxu0
        %v1013 = vadd.f32 %v984, %v1012
        %1014 = vdwg.mxu0
        %v1015 = vpack.c.bf16 %v911, %v909
        %v1020 = vunpack.c.l.b16 %v947
        %v1021 = vunpack.c.l.b16 %v948
        %v1022 = vunpack.c.l.b16 %v949
        %v1023 = vunpack.c.l.b16 %v950
        %v1024 = vpack.c.b16 %v1021, %v1020
        %v1025 = vpack.c.b16 %v1023, %v1022
        %v1029 = vsel %vm620, %v1015, 0
        %1031 = vmatpush.bf16.msra.mxu0 0
        %1032 = vmatpush.bf16.msra.mxu0 0
        %1033 = vmatpush.bf16.msra.mxu0 0
        %1034 = vmatpush.bf16.msra.mxu0 0
        %1035 = vmatpush.bf16.msra.mxu0 0
        %1036 = vmatpush.bf16.msra.mxu0 0
        %1037 = vmatpush.bf16.msra.mxu0 %v1025
        %1038 = vmatpush.bf16.msra.mxu0 %v1024
        %1039 = vmatmul.bf16.gmra.mxu0 %v1029
        %v1040 = vpop.f32.mrf.mxu0
        %v1041 = vadd.f32 0.0, %v1040
        %v1042 = vpop.f32.mrf.mxu0
        %v1043 = vadd.f32 0.0, %v1042
        %1044 = vdwg.mxu0
        %v1045 = vadd.f32 %v1011, %v1041
        %v1046 = vadd.f32 %v1013, %v1043
        %v1047 = vpack.c.bf16 %v937, %v935
        %v1052 = vunpack.c.l.b16 %v951
        %v1053 = vunpack.c.l.b16 %v952
        %v1054 = vunpack.c.l.b16 %v953
        %v1055 = vunpack.c.l.b16 %v954
        %v1056 = vpack.c.b16 %v1053, %v1052
        %v1057 = vpack.c.b16 %v1055, %v1054
        %v1061 = vsel %vm620, %v1047, 0
        %1063 = vmatpush.bf16.msra.mxu0 0
        %1064 = vmatpush.bf16.msra.mxu0 0
        %1065 = vmatpush.bf16.msra.mxu0 0
        %1066 = vmatpush.bf16.msra.mxu0 0
        %1067 = vmatpush.bf16.msra.mxu0 0
        %1068 = vmatpush.bf16.msra.mxu0 0
        %1069 = vmatpush.bf16.msra.mxu0 %v1057
        %1070 = vmatpush.bf16.msra.mxu0 %v1056
        %1071 = vmatmul.bf16.gmra.mxu0 %v1061
        %v1072 = vpop.f32.mrf.mxu0
        %v1073 = vadd.f32 0.0, %v1072
        %v1074 = vpop.f32.mrf.mxu0
        %v1075 = vadd.f32 0.0, %v1074
        %1076 = vdwg.mxu0
        %v1077 = vadd.f32 %v1045, %v1073
        %v1078 = vadd.f32 %v1046, %v1075
        %v1079 = vld [vmem:[%s5] sm:$0x1]
        %v1081 = vperm.slane %v1079, 0
        %v1083 = vadd.f32 %v1077, %v1081
        %v1084 = vadd.f32 %v1078, %v1081
        %v1085 = vunpack.c.l.bf16 %v355
        %v1086 = vunpack.c.l.bf16 %v356
        %v1087 = vadd.f32 %v1083, %v1085
        %v1088 = vadd.f32 %v1084, %v1086
        %v1089 = vld [vmem:[%s6] sm:$0x1]
        %v1090 = vld [vmem:[%s7] sm:$0x1]
        %1091 = vadd.xlane.f32.xlu0 %v1087
        %v1092 = vpop.xlane.xlu0 %1091
        %1093 = vadd.xlane.f32.xlu0 %v1088
        %v1094 = vpop.xlane.xlu0 %1093
        %v1095 = vrcp.pop 128.0
        %v1096 = vmul.f32 128.0, %v1095
        %v1097 = vsub.f32 1.0, %v1096
        %v1098 = vmul.f32 %v1095, %v1097
        %v1099 = vadd.f32 %v1095, %v1098
        %vm1100 = vweird.f32 %v1095
        %v1101 = vsel %vm1100, %v1095, %v1099
        %v1102 = vmul.f32 %v1092, %v1101
        %v1103 = vmul.f32 %v1094, %v1101
        %v1104 = vmul.f32 %v1087, %v1087
        %v1105 = vmul.f32 %v1088, %v1088
        %1106 = vadd.xlane.f32.xlu0 %v1104
        %v1107 = vpop.xlane.xlu0 %1106
        %1108 = vadd.xlane.f32.xlu0 %v1105
        %v1109 = vpop.xlane.xlu0 %1108
        %v1110 = vmul.f32 %v1107, %v1101
        %v1111 = vmul.f32 %v1109, %v1101
        %v1112 = vmul.f32 %v1102, %v1102
        %v1113 = vmul.f32 %v1103, %v1103
        %v1114 = vsub.f32 %v1110, %v1112
        %v1115 = vsub.f32 %v1111, %v1113
        %v1116 = vmax.f32 %v1114, 0.0
        %v1117 = vmax.f32 %v1115, 0.0
        %v1118 = vsub.f32 %v1087, %v1102
        %v1119 = vsub.f32 %v1088, %v1103
        %v1120 = vadd.f32 %v1116, 1e-12
        %v1121 = vadd.f32 %v1117, 1e-12
        %v1122 = vrsqrt.pop %v1120
        %v1123 = vmul.f32 %v1122, %v1120
        %v1124 = vmul.f32 %v1123, %v1122
        %v1125 = vmul.f32 0.5, %v1124
        %v1126 = vsub.f32 1.5, %v1125
        %v1127 = vmul.f32 %v1122, %v1126
        %vm1128 = vweird.f32 %v1120
        %vm1129 = vweird.f32 %v1122
        %vm1130 = vmor %vm1128, %vm1129
        %v1131 = vsel %vm1130, %v1122, %v1127
        %v1132 = vrsqrt.pop %v1121
        %v1133 = vmul.f32 %v1132, %v1121
        %v1134 = vmul.f32 %v1133, %v1132
        %v1135 = vmul.f32 0.5, %v1134
        %v1136 = vsub.f32 1.5, %v1135
        %v1137 = vmul.f32 %v1132, %v1136
        %vm1138 = vweird.f32 %v1121
        %vm1139 = vweird.f32 %v1132
        %vm1140 = vmor %vm1138, %vm1139
        %v1141 = vsel %vm1140, %v1132, %v1137
        %v1142 = vmul.f32 %v1118, %v1131
        %v1143 = vmul.f32 %v1119, %v1141
        %v1145 = vperm.slane %v1089, 0
        %v1147 = vmul.f32 %v1142, %v1145
        %v1148 = vmul.f32 %v1143, %v1145
        %v1150 = vperm.slane %v1090, 0
        %v1152 = vadd.f32 %v1147, %v1150
        %v1153 = vadd.f32 %v1148, %v1150
        %v1154 = vpack.c.bf16 %v1152, %v1152
        %v1155 = vpack.c.bf16 %v1153, %v1153
        %1156 = vst [vmem:[%s353] sm:$0xf] %v1154
        %1157 = vst [vmem:[%s353 + $0x4] sm:$0xf] %v1155
        %p1158 = scmp.lt.s32.totalorder %s21, 1
        %s1159 = scalar_select %p1158, %s21, 1
        %s1160 = smul.addr %s1159, 2
        %s1161 = smul.addr %s1160, 4
        %s1162 = scalar_lea.vmem %s8, %s1161
        // Predicated region
        $region61: #{bert_forward.9} parent=51 // pred_check
          %p1163 = pneg %p217
        $region62: #{bert_forward.9} parent=51 // pred_check_branch
          %1165 = sbr.rel (%p1163) target = $region64
        $region63: #{bert_forward.9} parent=51 // pred_region
          _
        $region64: #{bert_forward.9} parent=51 // pred_fallthru
          _
      $region52: #{bert_forward.9} parent=5 // pred_fallthru
        _
      %p1166 = scmp.le.s32.totalorder 2, %s16
      // Predicated region
      $region65: #{bert_forward.9} parent=5 // pred_check
        %p1167 = pneg %p1166
      $region66: #{bert_forward.9} parent=5 // pred_check_branch
        %1169 = sbr.rel (%p1167) target = $region68
      $region67: #{bert_forward.9} parent=5 // pred_region
        %s1170 = ssub.s32 %s16, 2
        // Predicated region
        $region69: #{bert_forward.9} parent=67 // pred_check
          %p1171 = pneg %p223
        $region70: #{bert_forward.9} parent=67 // pred_check_branch
          %1173 = sbr.rel (%p1171) target = $region72
        $region71: #{bert_forward.9} parent=67 // pred_region
          %p1174 = scmp.lt.s32.totalorder %s22, 1
          %s1175 = scalar_select %p1174, %s22, 1
          %s1176 = smul.addr %s1175, 2
          %s1177 = smul.addr %s1176, 4
          %s1178 = scalar_lea.vmem %s8, %s1177
        $region72: #{bert_forward.9} parent=67 // pred_fallthru
          _
      $region68: #{bert_forward.9} parent=5 // pred_fallthru
        _
    $region6: #{bert_forward.9} parent=1 // loop_footer
      %s20 = sadd.s32 1, %s16
    $region7: #{bert_forward.9} parent=1 // loop_footer_branch
      %15 = sbr.rel target = $region3
    $region8: #{bert_forward.9} parent=1 // loop_exit
      _
    %1179 = vsyncpa [#allocation3], 1
    %s1180 = scalar_lea.sflag [#allocation3], 1
    %1181 = vsyncpa %s1180, 1
    %1182 = vsyncpa [#allocation5], 1

// kernel: bert_forward.10
$region0: #{bert_forward.10}
  #allocation0 [shape = 'u32[]', space=smem, size = 0x4, offset = 0x4, fixed_abs, tag = 'smem constant byte address 0x4 - core index']
  #allocation1 [shape = 'u32[72,128]{1,0:T(1,128)}', space=vmem, size = 0x9000, scoped, tag = 'internal scratch']
  %s0 = inlined_call_operand.vmem [shape: bf16[32,128], index: 0, kind: input, shape index: {}]
  %s1 = inlined_call_operand.hbm [shape: bf16[128,512], index: 1, kind: input, shape index: {}]
  %s2 = inlined_call_operand.vmem [shape: f32[1,512], index: 2, kind: input, shape index: {}]
  %s3 = inlined_call_operand.hbm [shape: bf16[512,128], index: 3, kind: input, shape index: {}]
  %s4 = inlined_call_operand.vmem [shape: f32[1,128], index: 4, kind: input, shape index: {}]
  %s5 = inlined_call_operand.vmem [shape: f32[1,128], index: 5, kind: input, shape index: {}]
  %s6 = inlined_call_operand.vmem [shape: f32[1,128], index: 6, kind: input, shape index: {}]
  %s7 = inlined_call_operand.vmem [shape: bf16[32,128], index: 7, kind: output, shape index: {}]
  %s8 = sld [smem:[#allocation0]]
  $region69: #{bert_forward.10} parent=0
    _
  %s10 = ssub.s32 1, %s8
  %s11 = scalar_select 0, %s10, %s8
  $region1: #{bert_forward.10} parent=0
    #allocation2 [shape = 'u8[131072]{0}', space=vmem, size = 0x20000, scoped, tag = 'input window, operand 1, single buffered']
    #allocation3 [shape = 's32[2]{0}', space=sflag, size = 0x8, scoped, tag = 'scoped memory for bert_forward.10']
    #allocation4 [shape = 'u8[131072]{0}', space=vmem, size = 0x20000, scoped, tag = 'input window, operand 3, single buffered']
    #allocation5 [shape = 's32[1]{0}', space=sflag, size = 0x4, scoped, tag = 'scoped memory for bert_forward.10']
    %12 = vsyncpa [#allocation3], 0
    %13 = vsyncpa [#allocation5], 0
    loop: start=0, step=1, limit=4
    $region2: #{bert_forward.10} parent=1 // loop_pre_header
      _
    $region3: #{bert_forward.10} parent=1 // loop_header
      %s15 = sphi 0, %s19
      %p16 = scmp.ge.s32.totalorder %s15, 4
      %s25 = sphi 0, %s27
      %s28 = sphi 0, %s25
      %s29 = sphi 0, %s28
      %s45 = sphi 0, %s29
      %s49 = sphi 0, %s49
      %s51 = sphi 0, %s49
      %s52 = sphi 0, %s51
      %s66 = sphi 0, %s52
      %s70 = sphi 0, %s70
      %s72 = sphi 0, %s70
      %s73 = sphi 0, %s72
      %s87 = sphi 0, %s73
      %s91 = sphi 0, %s91
      %s93 = sphi 0, %s91
      %s94 = sphi 0, %s93
      %s108 = sphi 0, %s94
      %s112 = sphi 0, %s112
      %s114 = sphi 0, %s112
      %s115 = sphi 0, %s114
      %s129 = sphi 0, %s115
      %s133 = sphi 0, %s133
      %s135 = sphi 0, %s133
      %s136 = sphi 0, %s135
      %s150 = sphi 0, %s136
      %s154 = sphi 0, %s154
      %s156 = sphi 0, %s154
      %s157 = sphi 0, %s156
      %s171 = sphi 0, %s157
      %s177 = sphi 0, %s179
      %s180 = sphi 0, %s177
      %s181 = sphi 0, %s180
      %s197 = sphi 0, %s181
    $region4: #{bert_forward.10} parent=1 // loop_header_branch
      %18 = sbr.rel (%p16) target = $region8
    $region5: #{bert_forward.10} parent=1 // loop_body
      %s20 = ssub.s32 %s15, 1
      %s21 = ssub.s32 %s15, 2
      %s22 = sadd.s32 %s15, 1
      %s23 = ssub.s32 %s15, %s22
      %p24 = scmp.eq.s32.totalorder %s23, 0
      %s26 = sadd.s32 %s25, 1
      %s27 = scalar_select %p24, %s25, %s26
      %p30 = pneg %p24
      %p31 = scmp.eq.s32.totalorder %s15, 1
      %p32 = por %p30, %p31
      %p33 = scmp.ne.s32.totalorder %s25, %s28
      %p34 = scmp.eq.s32.totalorder %s15, 0
      %p35 = por %p33, %p34
      %p36 = scmp.ne.s32.totalorder %s25, %s28
      %p37 = scmp.eq.s32.totalorder %s20, 1
      %p38 = por %p36, %p37
      %p39 = scmp.ne.s32.totalorder %s28, %s29
      %p40 = scmp.eq.s32.totalorder %s20, 0
      %p41 = por %p39, %p40
      %p42 = scmp.ne.s32.totalorder %s28, %s29
      %p43 = scmp.eq.s32.totalorder %s21, 1
      %p44 = por %p42, %p43
      %p46 = scmp.ne.s32.totalorder %s29, %s45
      %p47 = scmp.eq.s32.totalorder %s21, 0
      %p48 = por %p46, %p47
      %s50 = sadd.s32 %s49, 1
      %p53 = scmp.eq.s32.totalorder %s15, 1
      %p54 = scmp.ne.s32.totalorder %s49, %s51
      %p55 = scmp.eq.s32.totalorder %s15, 0
      %p56 = por %p54, %p55
      %p57 = scmp.ne.s32.totalorder %s49, %s51
      %p58 = scmp.eq.s32.totalorder %s20, 1
      %p59 = por %p57, %p58
      %p60 = scmp.ne.s32.totalorder %s51, %s52
      %p61 = scmp.eq.s32.totalorder %s20, 0
      %p62 = por %p60, %p61
      %p63 = scmp.ne.s32.totalorder %s51, %s52
      %p64 = scmp.eq.s32.totalorder %s21, 1
      %p65 = por %p63, %p64
      %p67 = scmp.ne.s32.totalorder %s52, %s66
      %p68 = scmp.eq.s32.totalorder %s21, 0
      %p69 = por %p67, %p68
      %s71 = sadd.s32 %s70, 1
      %p74 = scmp.eq.s32.totalorder %s15, 1
      %p75 = scmp.ne.s32.totalorder %s70, %s72
      %p76 = scmp.eq.s32.totalorder %s15, 0
      %p77 = por %p75, %p76
      %p78 = scmp.ne.s32.totalorder %s70, %s72
      %p79 = scmp.eq.s32.totalorder %s20, 1
      %p80 = por %p78, %p79
      %p81 = scmp.ne.s32.totalorder %s72, %s73
      %p82 = scmp.eq.s32.totalorder %s20, 0
      %p83 = por %p81, %p82
      %p84 = scmp.ne.s32.totalorder %s72, %s73
      %p85 = scmp.eq.s32.totalorder %s21, 1
      %p86 = por %p84, %p85
      %p88 = scmp.ne.s32.totalorder %s73, %s87
      %p89 = scmp.eq.s32.totalorder %s21, 0
      %p90 = por %p88, %p89
      %s92 = sadd.s32 %s91, 1
      %p95 = scmp.eq.s32.totalorder %s15, 1
      %p96 = scmp.ne.s32.totalorder %s91, %s93
      %p97 = scmp.eq.s32.totalorder %s15, 0
      %p98 = por %p96, %p97
      %p99 = scmp.ne.s32.totalorder %s91, %s93
      %p100 = scmp.eq.s32.totalorder %s20, 1
      %p101 = por %p99, %p100
      %p102 = scmp.ne.s32.totalorder %s93, %s94
      %p103 = scmp.eq.s32.totalorder %s20, 0
      %p104 = por %p102, %p103
      %p105 = scmp.ne.s32.totalorder %s93, %s94
      %p106 = scmp.eq.s32.totalorder %s21, 1
      %p107 = por %p105, %p106
      %p109 = scmp.ne.s32.totalorder %s94, %s108
      %p110 = scmp.eq.s32.totalorder %s21, 0
      %p111 = por %p109, %p110
      %s113 = sadd.s32 %s112, 1
      %p116 = scmp.eq.s32.totalorder %s15, 1
      %p117 = scmp.ne.s32.totalorder %s112, %s114
      %p118 = scmp.eq.s32.totalorder %s15, 0
      %p119 = por %p117, %p118
      %p120 = scmp.ne.s32.totalorder %s112, %s114
      %p121 = scmp.eq.s32.totalorder %s20, 1
      %p122 = por %p120, %p121
      %p123 = scmp.ne.s32.totalorder %s114, %s115
      %p124 = scmp.eq.s32.totalorder %s20, 0
      %p125 = por %p123, %p124
      %p126 = scmp.ne.s32.totalorder %s114, %s115
      %p127 = scmp.eq.s32.totalorder %s21, 1
      %p128 = por %p126, %p127
      %p130 = scmp.ne.s32.totalorder %s115, %s129
      %p131 = scmp.eq.s32.totalorder %s21, 0
      %p132 = por %p130, %p131
      %s134 = sadd.s32 %s133, 1
      %p137 = scmp.eq.s32.totalorder %s15, 1
      %p138 = scmp.ne.s32.totalorder %s133, %s135
      %p139 = scmp.eq.s32.totalorder %s15, 0
      %p140 = por %p138, %p139
      %p141 = scmp.ne.s32.totalorder %s133, %s135
      %p142 = scmp.eq.s32.totalorder %s20, 1
      %p143 = por %p141, %p142
      %p144 = scmp.ne.s32.totalorder %s135, %s136
      %p145 = scmp.eq.s32.totalorder %s20, 0
      %p146 = por %p144, %p145
      %p147 = scmp.ne.s32.totalorder %s135, %s136
      %p148 = scmp.eq.s32.totalorder %s21, 1
      %p149 = por %p147, %p148
      %p151 = scmp.ne.s32.totalorder %s136, %s150
      %p152 = scmp.eq.s32.totalorder %s21, 0
      %p153 = por %p151, %p152
      %s155 = sadd.s32 %s154, 1
      %p158 = scmp.eq.s32.totalorder %s15, 1
      %p159 = scmp.ne.s32.totalorder %s154, %s156
      %p160 = scmp.eq.s32.totalorder %s15, 0
      %p161 = por %p159, %p160
      %p162 = scmp.ne.s32.totalorder %s154, %s156
      %p163 = scmp.eq.s32.totalorder %s20, 1
      %p164 = por %p162, %p163
      %p165 = scmp.ne.s32.totalorder %s156, %s157
      %p166 = scmp.eq.s32.totalorder %s20, 0
      %p167 = por %p165, %p166
      %p168 = scmp.ne.s32.totalorder %s156, %s157
      %p169 = scmp.eq.s32.totalorder %s21, 1
      %p170 = por %p168, %p169
      %p172 = scmp.ne.s32.totalorder %s157, %s171
      %p173 = scmp.eq.s32.totalorder %s21, 0
      %p174 = por %p172, %p173
      %s175 = ssub.s32 %s15, %s22
      %p176 = scmp.eq.s32.totalorder %s175, 0
      %s178 = sadd.s32 %s177, 1
      %s179 = scalar_select %p176, %s177, %s178
      %p182 = pneg %p176
      %p183 = scmp.eq.s32.totalorder %s15, 1
      %p184 = por %p182, %p183
      %p185 = scmp.ne.s32.totalorder %s177, %s180
      %p186 = scmp.eq.s32.totalorder %s15, 0
      %p187 = por %p185, %p186
      %p188 = scmp.ne.s32.totalorder %s177, %s180
      %p189 = scmp.eq.s32.totalorder %s20, 1
      %p190 = por %p188, %p189
      %p191 = scmp.ne.s32.totalorder %s180, %s181
      %p192 = scmp.eq.s32.totalorder %s20, 0
      %p193 = por %p191, %p192
      %p194 = scmp.ne.s32.totalorder %s180, %s181
      %p195 = scmp.eq.s32.totalorder %s21, 1
      %p196 = por %p194, %p195
      %p198 = scmp.ne.s32.totalorder %s181, %s197
      %p199 = scmp.eq.s32.totalorder %s21, 0
      %p200 = por %p198, %p199
      %p201 = scmp.le.s32.totalorder 1, %s15
      %p202 = scmp.lt.s32.totalorder %s15, 3
      %p203 = pnand %p201, %p202
      %p204 = pneg %p203
      // Predicated region
      $region9: #{bert_forward.10} parent=5 // pred_check
        _
      $region10: #{bert_forward.10} parent=5 // pred_check_branch
        %206 = sbr.rel (%p203) target = $region12
      $region11: #{bert_forward.10} parent=5 // pred_region
        %s207 = ssub.s32 %s15, 1
        // Predicated region
        $region13: #{bert_forward.10} parent=11 // pred_check
          %p208 = pneg %p62
        $region14: #{bert_forward.10} parent=11 // pred_check_branch
          %210 = sbr.rel (%p208) target = $region16
        $region15: #{bert_forward.10} parent=11 // pred_region
          %212 = vsyncadd [#allocation3], 0
          %s213 = sshll.u32 %s1, 4
          %s214 = int_to_ptr.hbm [resolvable:$true] %s213
          %s215 = sshll.u32 [#allocation2], 4
          %s216 = int_to_ptr.vmem [resolvable:$true] %s215
          %221 = dma.hbm_to_vmem [thread:$0]  %s214, 4096, %s216, [#allocation3], 256, 256, 16
        $region16: #{bert_forward.10} parent=11 // pred_fallthru
          _
        // Predicated region
        $region17: #{bert_forward.10} parent=11 // pred_check
          %p222 = pneg %p83
        $region18: #{bert_forward.10} parent=11 // pred_check_branch
          %224 = sbr.rel (%p222) target = $region20
        $region19: #{bert_forward.10} parent=11 // pred_region
          _
        $region20: #{bert_forward.10} parent=11 // pred_fallthru
          _
        // Predicated region
        $region21: #{bert_forward.10} parent=11 // pred_check
          %p225 = pneg %p104
        $region22: #{bert_forward.10} parent=11 // pred_check_branch
          %227 = sbr.rel (%p225) target = $region24
        $region23: #{bert_forward.10} parent=11 // pred_region
          %229 = vsyncadd [#allocation5], 0
          %s230 = sshll.u32 %s3, 4
          %s231 = int_to_ptr.hbm [resolvable:$true] %s230
          %s232 = sshll.u32 [#allocation4], 4
          %s233 = int_to_ptr.vmem [resolvable:$true] %s232
          %238 = dma.hbm_to_vmem [thread:$0]  %s231, 4096, %s233, [#allocation5], 64, 64, 4
        $region24: #{bert_forward.10} parent=11 // pred_fallthru
          _
        // Predicated region
        $region25: #{bert_forward.10} parent=11 // pred_check
          %p239 = pneg %p125
        $region26: #{bert_forward.10} parent=11 // pred_check_branch
          %241 = sbr.rel (%p239) target = $region28
        $region27: #{bert_forward.10} parent=11 // pred_region
          _
        $region28: #{bert_forward.10} parent=11 // pred_fallthru
          _
        // Predicated region
        $region29: #{bert_forward.10} parent=11 // pred_check
          %p242 = pneg %p146
        $region30: #{bert_forward.10} parent=11 // pred_check_branch
          %244 = sbr.rel (%p242) target = $region32
        $region31: #{bert_forward.10} parent=11 // pred_region
          _
        $region32: #{bert_forward.10} parent=11 // pred_fallthru
          _
        // Predicated region
        $region33: #{bert_forward.10} parent=11 // pred_check
          %p245 = pneg %p167
        $region34: #{bert_forward.10} parent=11 // pred_check_branch
          %247 = sbr.rel (%p245) target = $region36
        $region35: #{bert_forward.10} parent=11 // pred_region
          _
        $region36: #{bert_forward.10} parent=11 // pred_fallthru
          _
      $region12: #{bert_forward.10} parent=5 // pred_fallthru
        _
      %p248 = scmp.lt.s32.totalorder %s15, 2
      // Predicated region
      $region37: #{bert_forward.10} parent=5 // pred_check
        %p249 = pneg %p248
      $region38: #{bert_forward.10} parent=5 // pred_check_branch
        %251 = sbr.rel (%p249) target = $region40
      $region39: #{bert_forward.10} parent=5 // pred_region
        // Predicated region
        $region41: #{bert_forward.10} parent=39 // pred_check
          %p252 = pneg %p35
        $region42: #{bert_forward.10} parent=39 // pred_check_branch
          %254 = sbr.rel (%p252) target = $region44
        $region43: #{bert_forward.10} parent=39 // pred_region
          %s255 = smul.u32 2, %s15
          %p256 = scmp.lt.s32.totalorder %s255, 3
          %s257 = scalar_select %p256, %s255, 3
          %s258 = smul.addr %s257, 4
          %s259 = scalar_lea.vmem %s0, %s258
          %s260 = smul.u32 2, %s15
        $region44: #{bert_forward.10} parent=39 // pred_fallthru
          _
      $region40: #{bert_forward.10} parent=5 // pred_fallthru
        _
      %p261 = scmp.le.s32.totalorder 1, %s15
      %p262 = scmp.lt.s32.totalorder %s15, 3
      %p263 = pnand %p261, %p262
      %p264 = pneg %p263
      // Predicated region
      $region45: #{bert_forward.10} parent=5 // pred_check
        _
      $region46: #{bert_forward.10} parent=5 // pred_check_branch
        %266 = sbr.rel (%p263) target = $region48
      $region47: #{bert_forward.10} parent=5 // pred_region
        %s267 = ssub.s32 %s15, 1
        // Predicated region
        $region49: #{bert_forward.10} parent=47 // pred_check
          %p268 = pneg %p62
        $region50: #{bert_forward.10} parent=47 // pred_check_branch
          %270 = sbr.rel (%p268) target = $region52
        $region51: #{bert_forward.10} parent=47 // pred_region
          %272 = dma.done [#allocation3], 4096
        $region52: #{bert_forward.10} parent=47 // pred_fallthru
          _
        // Predicated region
        $region53: #{bert_forward.10} parent=47 // pred_check
          %p273 = pneg %p104
        $region54: #{bert_forward.10} parent=47 // pred_check_branch
          %275 = sbr.rel (%p273) target = $region56
        $region55: #{bert_forward.10} parent=47 // pred_region
          %277 = dma.done [#allocation5], 4096
        $region56: #{bert_forward.10} parent=47 // pred_fallthru
          _
        %s278 = smul.u32 2, %s20
        %p279 = scmp.lt.s32.totalorder %s278, 3
        %s280 = scalar_select %p279, %s278, 3
        %s281 = smul.addr %s280, 4
        %s282 = scalar_lea.vmem %s0, %s281
        %p283 = pneg %p41
        %p284 = pneg %p38
        %p285 = pneg %p62
        %p286 = pneg %p59
        %p287 = pneg %p83
        %p288 = pneg %p80
        %p289 = pneg %p104
        %p290 = pneg %p101
        %p291 = pneg %p125
        %p292 = pneg %p122
        %p293 = pneg %p146
        %p294 = pneg %p143
        %p295 = pneg %p167
        %p296 = pneg %p164
        %p297 = pneg %p193
        %p298 = pneg %p190
        %s299 = smul.u32 2, %s20
        %p300 = scmp.lt.s32.totalorder %s299, 3
        %s301 = scalar_select %p300, %s299, 3
        %s302 = smul.addr %s301, 4
        %s303 = scalar_lea.vmem %s7, %s302
        %s304 = smul.u32 2, %s20
        %p305 = scmp.lt.s32.totalorder %s304, 3
        %s306 = scalar_select %p305, %s304, 3
        %s307 = smul.addr %s306, 4
        %s308 = scalar_lea.vmem %s0, %s307
        %s309 = smul.u32 2, %s20
        %s310 = smul.u32 2, %s20
        %p311 = scmp.lt.s32.totalorder %s310, 3
        %s312 = scalar_select %p311, %s310, 3
        %s313 = smul.addr %s312, 4
        %s314 = scalar_lea.vmem %s7, %s313
        %s315 = smul.u32 2, %s20
        %v316 = vld [vmem:[%s308] sm:$0xf]
        %v317 = vld [vmem:[%s308 + $0x4] sm:$0xf]
        %v318 = vld [vmem:[#allocation2] sm:$0xff]
        %v319 = vld [vmem:[#allocation2 + $0x8] sm:$0xff]
        %v320 = vld [vmem:[#allocation2 + $0x10] sm:$0xff]
        %v321 = vld [vmem:[#allocation2 + $0x18] sm:$0xff]
        %v322 = vld [vmem:[#allocation2 + $0x20] sm:$0xff]
        %v323 = vld [vmem:[#allocation2 + $0x28] sm:$0xff]
        %v324 = vld [vmem:[#allocation2 + $0x30] sm:$0xff]
        %v325 = vld [vmem:[#allocation2 + $0x38] sm:$0xff]
        %v326 = vld [vmem:[#allocation2 + $0x40] sm:$0xff]
        %v327 = vld [vmem:[#allocation2 + $0x48] sm:$0xff]
        %v328 = vld [vmem:[#allocation2 + $0x50] sm:$0xff]
        %v329 = vld [vmem:[#allocation2 + $0x58] sm:$0xff]
        %v330 = vld [vmem:[#allocation2 + $0x60] sm:$0xff]
        %v331 = vld [vmem:[#allocation2 + $0x68] sm:$0xff]
        %v332 = vld [vmem:[#allocation2 + $0x70] sm:$0xff]
        %v333 = vld [vmem:[#allocation2 + $0x78] sm:$0xff]
        %v334 = vld [vmem:[#allocation2 + $0x80] sm:$0xff]
        %v335 = vld [vmem:[#allocation2 + $0x88] sm:$0xff]
        %v336 = vld [vmem:[#allocation2 + $0x90] sm:$0xff]
        %v337 = vld [vmem:[#allocation2 + $0x98] sm:$0xff]
        %v338 = vld [vmem:[#allocation2 + $0xa0] sm:$0xff]
        %v339 = vld [vmem:[#allocation2 + $0xa8] sm:$0xff]
        %v340 = vld [vmem:[#allocation2 + $0xb0] sm:$0xff]
        %v341 = vld [vmem:[#allocation2 + $0xb8] sm:$0xff]
        %v342 = vld [vmem:[#allocation2 + $0xc0] sm:$0xff]
        %v343 = vld [vmem:[#allocation2 + $0xc8] sm:$0xff]
        %v344 = vld [vmem:[#allocation2 + $0xd0] sm:$0xff]
        %v345 = vld [vmem:[#allocation2 + $0xd8] sm:$0xff]
        %v346 = vld [vmem:[#allocation2 + $0xe0] sm:$0xff]
        %v347 = vld [vmem:[#allocation2 + $0xe8] sm:$0xff]
        %v348 = vld [vmem:[#allocation2 + $0xf0] sm:$0xff]
        %v349 = vld [vmem:[#allocation2 + $0xf8] sm:$0xff]
        %v350 = vld [vmem:[%s2] sm:$0xf]
        %v352 = vperm.slane %v350, 0
        %v353 = vperm.slane %v350, 1
        %v354 = vperm.slane %v350, 2
        %v355 = vperm.slane %v350, 3
        %v362 = vunpack.c.l.b16 %v316
        %v363 = vunpack.c.l.b16 %v317
        %v364 = vpack.c.b16 %v363, %v362
        %v398 = vunpack.c.l.b16 %v318
        %v399 = vunpack.c.h.b16 %v318
        %v400 = vunpack.c.l.b16 %v319
        %v401 = vunpack.c.h.b16 %v319
        %v402 = vunpack.c.l.b16 %v320
        %v403 = vunpack.c.h.b16 %v320
        %v404 = vunpack.c.l.b16 %v321
        %v405 = vunpack.c.h.b16 %v321
        %v406 = vunpack.c.l.b16 %v322
        %v407 = vunpack.c.h.b16 %v322
        %v408 = vunpack.c.l.b16 %v323
        %v409 = vunpack.c.h.b16 %v323
        %v410 = vunpack.c.l.b16 %v324
        %v411 = vunpack.c.h.b16 %v324
        %v412 = vunpack.c.l.b16 %v325
        %v413 = vunpack.c.h.b16 %v325
        %v414 = vunpack.c.l.b16 %v326
        %v415 = vunpack.c.h.b16 %v326
        %v416 = vunpack.c.l.b16 %v327
        %v417 = vunpack.c.h.b16 %v327
        %v418 = vunpack.c.l.b16 %v328
        %v419 = vunpack.c.h.b16 %v328
        %v420 = vunpack.c.l.b16 %v329
        %v421 = vunpack.c.h.b16 %v329
        %v422 = vunpack.c.l.b16 %v330
        %v423 = vunpack.c.h.b16 %v330
        %v424 = vunpack.c.l.b16 %v331
        %v425 = vunpack.c.h.b16 %v331
        %v426 = vunpack.c.l.b16 %v332
        %v427 = vunpack.c.h.b16 %v332
        %v428 = vunpack.c.l.b16 %v333
        %v429 = vunpack.c.h.b16 %v333
        %v430 = vunpack.c.l.b16 %v334
        %v431 = vunpack.c.h.b16 %v334
        %v432 = vunpack.c.l.b16 %v335
        %v433 = vunpack.c.h.b16 %v335
        %v434 = vunpack.c.l.b16 %v336
        %v435 = vunpack.c.h.b16 %v336
        %v436 = vunpack.c.l.b16 %v337
        %v437 = vunpack.c.h.b16 %v337
        %v438 = vunpack.c.l.b16 %v338
        %v439 = vunpack.c.h.b16 %v338
        %v440 = vunpack.c.l.b16 %v339
        %v441 = vunpack.c.h.b16 %v339
        %v442 = vunpack.c.l.b16 %v340
        %v443 = vunpack.c.h.b16 %v340
        %v444 = vunpack.c.l.b16 %v341
        %v445 = vunpack.c.h.b16 %v341
        %v446 = vunpack.c.l.b16 %v342
        %v447 = vunpack.c.h.b16 %v342
        %v448 = vunpack.c.l.b16 %v343
        %v449 = vunpack.c.h.b16 %v343
        %v450 = vunpack.c.l.b16 %v344
        %v451 = vunpack.c.h.b16 %v344
        %v452 = vunpack.c.l.b16 %v345
        %v453 = vunpack.c.h.b16 %v345
        %v454 = vunpack.c.l.b16 %v346
        %v455 = vunpack.c.h.b16 %v346
        %v456 = vunpack.c.l.b16 %v347
        %v457 = vunpack.c.h.b16 %v347
        %v458 = vunpack.c.l.b16 %v348
        %v459 = vunpack.c.h.b16 %v348
        %v460 = vunpack.c.l.b16 %v349
        %v461 = vunpack.c.h.b16 %v349
        %v462 = vpack.c.b16 %v402, %v398
        %v463 = vpack.c.b16 %v403, %v399
        %v464 = vpack.c.b16 %v404, %v400
        %v465 = vpack.c.b16 %v405, %v401
        %v466 = vpack.c.b16 %v410, %v406
        %v467 = vpack.c.b16 %v411, %v407
        %v468 = vpack.c.b16 %v412, %v408
        %v469 = vpack.c.b16 %v413, %v409
        %v470 = vpack.c.b16 %v418, %v414
        %v471 = vpack.c.b16 %v419, %v415
        %v472 = vpack.c.b16 %v420, %v416
        %v473 = vpack.c.b16 %v421, %v417
        %v474 = vpack.c.b16 %v426, %v422
        %v475 = vpack.c.b16 %v427, %v423
        %v476 = vpack.c.b16 %v428, %v424
        %v477 = vpack.c.b16 %v429, %v425
        %v478 = vpack.c.b16 %v434, %v430
        %v479 = vpack.c.b16 %v435, %v431
        %v480 = vpack.c.b16 %v436, %v432
        %v481 = vpack.c.b16 %v437, %v433
        %v482 = vpack.c.b16 %v442, %v438
        %v483 = vpack.c.b16 %v443, %v439
        %v484 = vpack.c.b16 %v444, %v440
        %v485 = vpack.c.b16 %v445, %v441
        %v486 = vpack.c.b16 %v450, %v446
        %v487 = vpack.c.b16 %v451, %v447
        %v488 = vpack.c.b16 %v452, %v448
        %v489 = vpack.c.b16 %v453, %v449
        %v490 = vpack.c.b16 %v458, %v454
        %v491 = vpack.c.b16 %v459, %v455
        %v492 = vpack.c.b16 %v460, %v456
        %v493 = vpack.c.b16 %v461, %v457
        %526 = vmatpush.bf16.msra.mxu0 %v490
        %527 = vmatpush.bf16.msra.mxu0 %v486
        %528 = vmatpush.bf16.msra.mxu0 %v482
        %529 = vmatpush.bf16.msra.mxu0 %v478
        %530 = vmatpush.bf16.msra.mxu0 %v474
        %531 = vmatpush.bf16.msra.mxu0 %v470
        %532 = vmatpush.bf16.msra.mxu0 %v466
        %533 = vmatpush.bf16.msra.mxu0 %v462
        %534 = vmatmul.bf16.gmra.mxu0 %v364
        %v535 = vpop.f32.mrf.mxu0
        %v536 = vadd.f32 %v352, %v535
        %v537 = vpop.f32.mrf.mxu0
        %v538 = vadd.f32 %v352, %v537
        %539 = vdwg.mxu0
        %540 = vmatpush.bf16.msra.mxu0 %v491
        %541 = vmatpush.bf16.msra.mxu0 %v487
        %542 = vmatpush.bf16.msra.mxu0 %v483
        %543 = vmatpush.bf16.msra.mxu0 %v479
        %544 = vmatpush.bf16.msra.mxu0 %v475
        %545 = vmatpush.bf16.msra.mxu0 %v471
        %546 = vmatpush.bf16.msra.mxu0 %v467
        %547 = vmatpush.bf16.msra.mxu0 %v463
        %548 = vmatmul.bf16.gmra.mxu0 %v364
        %v549 = vpop.f32.mrf.mxu0
        %v550 = vadd.f32 %v353, %v549
        %v551 = vpop.f32.mrf.mxu0
        %v552 = vadd.f32 %v353, %v551
        %553 = vdwg.mxu0
        %554 = vmatpush.bf16.msra.mxu0 %v492
        %555 = vmatpush.bf16.msra.mxu0 %v488
        %556 = vmatpush.bf16.msra.mxu0 %v484
        %557 = vmatpush.bf16.msra.mxu0 %v480
        %558 = vmatpush.bf16.msra.mxu0 %v476
        %559 = vmatpush.bf16.msra.mxu0 %v472
        %560 = vmatpush.bf16.msra.mxu0 %v468
        %561 = vmatpush.bf16.msra.mxu0 %v464
        %562 = vmatmul.bf16.gmra.mxu0 %v364
        %v563 = vpop.f32.mrf.mxu0
        %v564 = vadd.f32 %v354, %v563
        %v565 = vpop.f32.mrf.mxu0
        %v566 = vadd.f32 %v354, %v565
        %567 = vdwg.mxu0
        %568 = vmatpush.bf16.msra.mxu0 %v493
        %569 = vmatpush.bf16.msra.mxu0 %v489
        %570 = vmatpush.bf16.msra.mxu0 %v485
        %571 = vmatpush.bf16.msra.mxu0 %v481
        %572 = vmatpush.bf16.msra.mxu0 %v477
        %573 = vmatpush.bf16.msra.mxu0 %v473
        %574 = vmatpush.bf16.msra.mxu0 %v469
        %575 = vmatpush.bf16.msra.mxu0 %v465
        %576 = vmatmul.bf16.gmra.mxu0 %v364
        %v577 = vpop.f32.mrf.mxu0
        %v578 = vadd.f32 %v355, %v577
        %v579 = vpop.f32.mrf.mxu0
        %v580 = vadd.f32 %v355, %v579
        %581 = vdwg.mxu0
        %v582 = vmul.f32 %v536, 0.5
        %v583 = vmul.f32 %v550, 0.5
        %v584 = vmul.f32 %v564, 0.5
        %v585 = vmul.f32 %v578, 0.5
        %v586 = vmul.f32 %v538, 0.5
        %v587 = vmul.f32 %v552, 0.5
        %v588 = vmul.f32 %v566, 0.5
        %v589 = vmul.f32 %v580, 0.5
        %v590 = vmul.f32 %v536, 0.70710677
        %v591 = vmul.f32 %v550, 0.70710677
        %v592 = vmul.f32 %v564, 0.70710677
        %v593 = vmul.f32 %v578, 0.70710677
        %v594 = vmul.f32 %v538, 0.70710677
        %v595 = vmul.f32 %v552, 0.70710677
        %v596 = vmul.f32 %v566, 0.70710677
        %v597 = vmul.f32 %v580, 0.70710677
        %vm598 = vcmp.ge.f32.partialorder %v590, 0.0
        %vm599 = vcmp.ge.f32.partialorder %v591, 0.0
        %vm600 = vcmp.ge.f32.partialorder %v592, 0.0
        %vm601 = vcmp.ge.f32.partialorder %v593, 0.0
        %vm602 = vcmp.ge.f32.partialorder %v594, 0.0
        %vm603 = vcmp.ge.f32.partialorder %v595, 0.0
        %vm604 = vcmp.ge.f32.partialorder %v596, 0.0
        %vm605 = vcmp.ge.f32.partialorder %v597, 0.0
        %v606 = vsel %vm598, 1.0, -1.0
        %v607 = vsel %vm599, 1.0, -1.0
        %v608 = vsel %vm600, 1.0, -1.0
        %v609 = vsel %vm601, 1.0, -1.0
        %v610 = vsel %vm602, 1.0, -1.0
        %v611 = vsel %vm603, 1.0, -1.0
        %v612 = vsel %vm604, 1.0, -1.0
        %v613 = vsel %vm605, 1.0, -1.0
        %v614 = vand.u32 2147483647, %v590
        %v615 = vand.u32 2147483647, %v591
        %v616 = vand.u32 2147483647, %v592
        %v617 = vand.u32 2147483647, %v593
        %v618 = vand.u32 2147483647, %v594
        %v619 = vand.u32 2147483647, %v595
        %v620 = vand.u32 2147483647, %v596
        %v621 = vand.u32 2147483647, %v597
        %v622 = vmul.f32 %v614, 0.3275911
        %v623 = vmul.f32 %v615, 0.3275911
        %v624 = vmul.f32 %v616, 0.3275911
        %v625 = vmul.f32 %v617, 0.3275911
        %v626 = vmul.f32 %v618, 0.3275911
        %v627 = vmul.f32 %v619, 0.3275911
        %v628 = vmul.f32 %v620, 0.3275911
        %v629 = vmul.f32 %v621, 0.3275911
        %v630 = vadd.f32 %v622, 1.0
        %v631 = vadd.f32 %v623, 1.0
        %v632 = vadd.f32 %v624, 1.0
        %v633 = vadd.f32 %v625, 1.0
        %v634 = vadd.f32 %v626, 1.0
        %v635 = vadd.f32 %v627, 1.0
        %v636 = vadd.f32 %v628, 1.0
        %v637 = vadd.f32 %v629, 1.0
        %v638 = vrcp.pop %v630
        %v639 = vmul.f32 %v630, %v638
        %v640 = vsub.f32 1.0, %v639
        %v641 = vmul.f32 %v638, %v640
        %v642 = vadd.f32 %v638, %v641
        %vm643 = vweird.f32 %v630
        %vm644 = vweird.f32 %v638
        %vm645 = vmor %vm643, %vm644
        %v646 = vsel %vm645, %v638, %v642
        %v647 = vand.u32 2147483647, %v630
        %vm648 = vcmp.eq.f32.partialorder %v647, 8.507059e+37
        %v649 = vand.u32 %v630, 2147483648
        %v650 = vor.u32 1.1754944e-38, %v649
        %v651 = vsel %vm648, %v650, %v646
        %v652 = vmul.f32 1.0, %v651
        %v653 = vrcp.pop %v631
        %v654 = vmul.f32 %v631, %v653
        %v655 = vsub.f32 1.0, %v654
        %v656 = vmul.f32 %v653, %v655
        %v657 = vadd.f32 %v653, %v656
        %vm658 = vweird.f32 %v631
        %vm659 = vweird.f32 %v653
        %vm660 = vmor %vm658, %vm659
        %v661 = vsel %vm660, %v653, %v657
        %v662 = vand.u32 2147483647, %v631
        %vm663 = vcmp.eq.f32.partialorder %v662, 8.507059e+37
        %v664 = vand.u32 %v631, 2147483648
        %v665 = vor.u32 1.1754944e-38, %v664
        %v666 = vsel %vm663, %v665, %v661
        %v667 = vmul.f32 1.0, %v666
        %v668 = vrcp.pop %v632
        %v669 = vmul.f32 %v632, %v668
        %v670 = vsub.f32 1.0, %v669
        %v671 = vmul.f32 %v668, %v670
        %v672 = vadd.f32 %v668, %v671
        %vm673 = vweird.f32 %v632
        %vm674 = vweird.f32 %v668
        %vm675 = vmor %vm673, %vm674
        %v676 = vsel %vm675, %v668, %v672
        %v677 = vand.u32 2147483647, %v632
        %vm678 = vcmp.eq.f32.partialorder %v677, 8.507059e+37
        %v679 = vand.u32 %v632, 2147483648
        %v680 = vor.u32 1.1754944e-38, %v679
        %v681 = vsel %vm678, %v680, %v676
        %v682 = vmul.f32 1.0, %v681
        %v683 = vrcp.pop %v633
        %v684 = vmul.f32 %v633, %v683
        %v685 = vsub.f32 1.0, %v684
        %v686 = vmul.f32 %v683, %v685
        %v687 = vadd.f32 %v683, %v686
        %vm688 = vweird.f32 %v633
        %vm689 = vweird.f32 %v683
        %vm690 = vmor %vm688, %vm689
        %v691 = vsel %vm690, %v683, %v687
        %v692 = vand.u32 2147483647, %v633
        %vm693 = vcmp.eq.f32.partialorder %v692, 8.507059e+37
        %v694 = vand.u32 %v633, 2147483648
        %v695 = vor.u32 1.1754944e-38, %v694
        %v696 = vsel %vm693, %v695, %v691
        %v697 = vmul.f32 1.0, %v696
        %v698 = vrcp.pop %v634
        %v699 = vmul.f32 %v634, %v698
        %v700 = vsub.f32 1.0, %v699
        %v701 = vmul.f32 %v698, %v700
        %v702 = vadd.f32 %v698, %v701
        %vm703 = vweird.f32 %v634
        %vm704 = vweird.f32 %v698
        %vm705 = vmor %vm703, %vm704
        %v706 = vsel %vm705, %v698, %v702
        %v707 = vand.u32 2147483647, %v634
        %vm708 = vcmp.eq.f32.partialorder %v707, 8.507059e+37
        %v709 = vand.u32 %v634, 2147483648
        %v710 = vor.u32 1.1754944e-38, %v709
        %v711 = vsel %vm708, %v710, %v706
        %v712 = vmul.f32 1.0, %v711
        %v713 = vrcp.pop %v635
        %v714 = vmul.f32 %v635, %v713
        %v715 = vsub.f32 1.0, %v714
        %v716 = vmul.f32 %v713, %v715
        %v717 = vadd.f32 %v713, %v716
        %vm718 = vweird.f32 %v635
        %vm719 = vweird.f32 %v713
        %vm720 = vmor %vm718, %vm719
        %v721 = vsel %vm720, %v713, %v717
        %v722 = vand.u32 2147483647, %v635
        %vm723 = vcmp.eq.f32.partialorder %v722, 8.507059e+37
        %v724 = vand.u32 %v635, 2147483648
        %v725 = vor.u32 1.1754944e-38, %v724
        %v726 = vsel %vm723, %v725, %v721
        %v727 = vmul.f32 1.0, %v726
        %v728 = vrcp.pop %v636
        %v729 = vmul.f32 %v636, %v728
        %v730 = vsub.f32 1.0, %v729
        %v731 = vmul.f32 %v728, %v730
        %v732 = vadd.f32 %v728, %v731
        %vm733 = vweird.f32 %v636
        %vm734 = vweird.f32 %v728
        %vm735 = vmor %vm733, %vm734
        %v736 = vsel %vm735, %v728, %v732
        %v737 = vand.u32 2147483647, %v636
        %vm738 = vcmp.eq.f32.partialorder %v737, 8.507059e+37
        %v739 = vand.u32 %v636, 2147483648
        %v740 = vor.u32 1.1754944e-38, %v739
        %v741 = vsel %vm738, %v740, %v736
        %v742 = vmul.f32 1.0, %v741
        %v743 = vrcp.pop %v637
        %v744 = vmul.f32 %v637, %v743
        %v745 = vsub.f32 1.0, %v744
        %v746 = vmul.f32 %v743, %v745
        %v747 = vadd.f32 %v743, %v746
        %vm748 = vweird.f32 %v637
        %vm749 = vweird.f32 %v743
        %vm750 = vmor %vm748, %vm749
        %v751 = vsel %vm750, %v743, %v747
        %v752 = vand.u32 2147483647, %v637
        %vm753 = vcmp.eq.f32.partialorder %v752, 8.507059e+37
        %v754 = vand.u32 %v637, 2147483648
        %v755 = vor.u32 1.1754944e-38, %v754
        %v756 = vsel %vm753, %v755, %v751
        %v757 = vmul.f32 1.0, %v756
        %v758 = vmul.f32 %v652, 1.0614054
        %v759 = vmul.f32 %v667, 1.0614054
        %v760 = vmul.f32 %v682, 1.0614054
        %v761 = vmul.f32 %v697, 1.0614054
        %v762 = vmul.f32 %v712, 1.0614054
        %v763 = vmul.f32 %v727, 1.0614054
        %v764 = vmul.f32 %v742, 1.0614054
        %v765 = vmul.f32 %v757, 1.0614054
        %v766 = vadd.f32 %v758, -1.4531521
        %v767 = vadd.f32 %v759, -1.4531521
        %v768 = vadd.f32 %v760, -1.4531521
        %v769 = vadd.f32 %v761, -1.4531521
        %v770 = vadd.f32 %v762, -1.4531521
        %v771 = vadd.f32 %v763, -1.4531521
        %v772 = vadd.f32 %v764, -1.4531521
        %v773 = vadd.f32 %v765, -1.4531521
        %v774 = vmul.f32 %v766, %v652
        %v775 = vmul.f32 %v767, %v667
        %v776 = vmul.f32 %v768, %v682
        %v777 = vmul.f32 %v769, %v697
        %v778 = vmul.f32 %v770, %v712
        %v779 = vmul.f32 %v771, %v727
        %v780 = vmul.f32 %v772, %v742
        %v781 = vmul.f32 %v773, %v757
        %v782 = vadd.f32 %v774, 1.4214138
        %v783 = vadd.f32 %v775, 1.4214138
        %v784 = vadd.f32 %v776, 1.4214138
        %v785 = vadd.f32 %v777, 1.4214138
        %v786 = vadd.f32 %v778, 1.4214138
        %v787 = vadd.f32 %v779, 1.4214138
        %v788 = vadd.f32 %v780, 1.4214138
        %v789 = vadd.f32 %v781, 1.4214138
        %v790 = vmul.f32 %v782, %v652
        %v791 = vmul.f32 %v783, %v667
        %v792 = vmul.f32 %v784, %v682
        %v793 = vmul.f32 %v785, %v697
        %v794 = vmul.f32 %v786, %v712
        %v795 = vmul.f32 %v787, %v727
        %v796 = vmul.f32 %v788, %v742
        %v797 = vmul.f32 %v789, %v757
        %v798 = vadd.f32 %v790, -0.28449672
        %v799 = vadd.f32 %v791, -0.28449672
        %v800 = vadd.f32 %v792, -0.28449672
        %v801 = vadd.f32 %v793, -0.28449672
        %v802 = vadd.f32 %v794, -0.28449672
        %v803 = vadd.f32 %v795, -0.28449672
        %v804 = vadd.f32 %v796, -0.28449672
        %v805 = vadd.f32 %v797, -0.28449672
        %v806 = vmul.f32 %v798, %v652
        %v807 = vmul.f32 %v799, %v667
        %v808 = vmul.f32 %v800, %v682
        %v809 = vmul.f32 %v801, %v697
        %v810 = vmul.f32 %v802, %v712
        %v811 = vmul.f32 %v803, %v727
        %v812 = vmul.f32 %v804, %v742
        %v813 = vmul.f32 %v805, %v757
        %v814 = vadd.f32 %v806, 0.2548296
        %v815 = vadd.f32 %v807, 0.2548296
        %v816 = vadd.f32 %v808, 0.2548296
        %v817 = vadd.f32 %v809, 0.2548296
        %v818 = vadd.f32 %v810, 0.2548296
        %v819 = vadd.f32 %v811, 0.2548296
        %v820 = vadd.f32 %v812, 0.2548296
        %v821 = vadd.f32 %v813, 0.2548296
        %v822 = vmul.f32 %v814, %v652
        %v823 = vmul.f32 %v815, %v667
        %v824 = vmul.f32 %v816, %v682
        %v825 = vmul.f32 %v817, %v697
        %v826 = vmul.f32 %v818, %v712
        %v827 = vmul.f32 %v819, %v727
        %v828 = vmul.f32 %v820, %v742
        %v829 = vmul.f32 %v821, %v757
        %v830 = vsub.f32 0.0, %v614
        %v831 = vsub.f32 0.0, %v615
        %v832 = vsub.f32 0.0, %v616
        %v833 = vsub.f32 0.0, %v617
        %v834 = vsub.f32 0.0, %v618
        %v835 = vsub.f32 0.0, %v619
        %v836 = vsub.f32 0.0, %v620
        %v837 = vsub.f32 0.0, %v621
        %v838 = vmul.f32 %v830, %v614
        %v839 = vmul.f32 %v831, %v615
        %v840 = vmul.f32 %v832, %v616
        %v841 = vmul.f32 %v833, %v617
        %v842 = vmul.f32 %v834, %v618
        %v843 = vmul.f32 %v835, %v619
        %v844 = vmul.f32 %v836, %v620
        %v845 = vmul.f32 %v837, %v621
        %v846 = vmul.f32 %v838, 1.442695
        %v847 = vpow.pop %v846
        %v848 = vmul.f32 %v839, 1.442695
        %v849 = vpow.pop %v848
        %v850 = vmul.f32 %v840, 1.442695
        %v851 = vpow.pop %v850
        %v852 = vmul.f32 %v841, 1.442695
        %v853 = vpow.pop %v852
        %v854 = vmul.f32 %v842, 1.442695
        %v855 = vpow.pop %v854
        %v856 = vmul.f32 %v843, 1.442695
        %v857 = vpow.pop %v856
        %v858 = vmul.f32 %v844, 1.442695
        %v859 = vpow.pop %v858
        %v860 = vmul.f32 %v845, 1.442695
        %v861 = vpow.pop %v860
        %v862 = vmul.f32 %v822, %v847
        %v863 = vmul.f32 %v823, %v849
        %v864 = vmul.f32 %v824, %v851
        %v865 = vmul.f32 %v825, %v853
        %v866 = vmul.f32 %v826, %v855
        %v867 = vmul.f32 %v827, %v857
        %v868 = vmul.f32 %v828, %v859
        %v869 = vmul.f32 %v829, %v861
        %v870 = vsub.f32 1.0, %v862
        %v871 = vsub.f32 1.0, %v863
        %v872 = vsub.f32 1.0, %v864
        %v873 = vsub.f32 1.0, %v865
        %v874 = vsub.f32 1.0, %v866
        %v875 = vsub.f32 1.0, %v867
        %v876 = vsub.f32 1.0, %v868
        %v877 = vsub.f32 1.0, %v869
        %v878 = vmul.f32 %v606, %v870
        %v879 = vmul.f32 %v607, %v871
        %v880 = vmul.f32 %v608, %v872
        %v881 = vmul.f32 %v609, %v873
        %v882 = vmul.f32 %v610, %v874
        %v883 = vmul.f32 %v611, %v875
        %v884 = vmul.f32 %v612, %v876
        %v885 = vmul.f32 %v613, %v877
        %v886 = vadd.f32 %v878, 1.0
        %v887 = vadd.f32 %v879, 1.0
        %v888 = vadd.f32 %v880, 1.0
        %v889 = vadd.f32 %v881, 1.0
        %v890 = vadd.f32 %v882, 1.0
        %v891 = vadd.f32 %v883, 1.0
        %v892 = vadd.f32 %v884, 1.0
        %v893 = vadd.f32 %v885, 1.0
        %v894 = vmul.f32 %v582, %v886
        %v895 = vmul.f32 %v583, %v887
        %v896 = vmul.f32 %v584, %v888
        %v897 = vmul.f32 %v585, %v889
        %v898 = vmul.f32 %v586, %v890
        %v899 = vmul.f32 %v587, %v891
        %v900 = vmul.f32 %v588, %v892
        %v901 = vmul.f32 %v589, %v893
        %v902 = vpack.c.bf16 %v898, %v894
        %v903 = vpack.c.bf16 %v899, %v895
        %v904 = vpack.c.bf16 %v900, %v896
        %v905 = vpack.c.bf16 %v901, %v897
        %v906 = vld [vmem:[#allocation4] sm:$0xf]
        %v907 = vld [vmem:[#allocation4 + $0x4] sm:$0xf]
        %v908 = vld [vmem:[#allocation4 + $0x8] sm:$0xf]
        %v909 = vld [vmem:[#allocation4 + $0xc] sm:$0xf]
        %v910 = vld [vmem:[#allocation4 + $0x10] sm:$0xf]
        %v911 = vld [vmem:[#allocation4 + $0x14] sm:$0xf]
        %v912 = vld [vmem:[#allocation4 + $0x18] sm:$0xf]
        %v913 = vld [vmem:[#allocation4 + $0x1c] sm:$0xf]
        %v914 = vld [vmem:[#allocation4 + $0x20] sm:$0xf]
        %v915 = vld [vmem:[#allocation4 + $0x24] sm:$0xf]
        %v916 = vld [vmem:[#allocation4 + $0x28] sm:$0xf]
        %v917 = vld [vmem:[#allocation4 + $0x2c] sm:$0xf]
        %v918 = vld [vmem:[#allocation4 + $0x30] sm:$0xf]
        %v919 = vld [vmem:[#allocation4 + $0x34] sm:$0xf]
        %v920 = vld [vmem:[#allocation4 + $0x38] sm:$0xf]
        %v921 = vld [vmem:[#allocation4 + $0x3c] sm:$0xf]
        %v922 = vld [vmem:[#allocation4 + $0x40] sm:$0xf]
        %v923 = vld [vmem:[#allocation4 + $0x44] sm:$0xf]
        %v924 = vld [vmem:[#allocation4 + $0x48] sm:$0xf]
        %v925 = vld [vmem:[#allocation4 + $0x4c] sm:$0xf]
        %v926 = vld [vmem:[#allocation4 + $0x50] sm:$0xf]
        %v927 = vld [vmem:[#allocation4 + $0x54] sm:$0xf]
        %v928 = vld [vmem:[#allocation4 + $0x58] sm:$0xf]
        %v929 = vld [vmem:[#allocation4 + $0x5c] sm:$0xf]
        %v930 = vld [vmem:[#allocation4 + $0x60] sm:$0xf]
        %v931 = vld [vmem:[#allocation4 + $0x64] sm:$0xf]
        %v932 = vld [vmem:[#allocation4 + $0x68] sm:$0xf]
        %v933 = vld [vmem:[#allocation4 + $0x6c] sm:$0xf]
        %v934 = vld [vmem:[#allocation4 + $0x70] sm:$0xf]
        %v935 = vld [vmem:[#allocation4 + $0x74] sm:$0xf]
        %v936 = vld [vmem:[#allocation4 + $0x78] sm:$0xf]
        %v937 = vld [vmem:[#allocation4 + $0x7c] sm:$0xf]
        %v938 = vld [vmem:[#allocation4 + $0x80] sm:$0xf]
        %v939 = vld [vmem:[#allocation4 + $0x84] sm:$0xf]
        %v940 = vld [vmem:[#allocation4 + $0x88] sm:$0xf]
        %v941 = vld [vmem:[#allocation4 + $0x8c] sm:$0xf]
        %v942 = vld [vmem:[#allocation4 + $0x90] sm:$0xf]
        %v943 = vld [vmem:[#allocation4 + $0x94] sm:$0xf]
        %v944 = vld [vmem:[#allocation4 + $0x98] sm:$0xf]
        %v945 = vld [vmem:[#allocation4 + $0x9c] sm:$0xf]
        %v946 = vld [vmem:[#allocation4 + $0xa0] sm:$0xf]
        %v947 = vld [vmem:[#allocation4 + $0xa4] sm:$0xf]
        %v948 = vld [vmem:[#allocation4 + $0xa8] sm:$0xf]
        %v949 = vld [vmem:[#allocation4 + $0xac] sm:$0xf]
        %v950 = vld [vmem:[#allocation4 + $0xb0] sm:$0xf]
        %v951 = vld [vmem:[#allocation4 + $0xb4] sm:$0xf]
        %v952 = vld [vmem:[#allocation4 + $0xb8] sm:$0xf]
        %v953 = vld [vmem:[#allocation4 + $0xbc] sm:$0xf]
        %v954 = vld [vmem:[#allocation4 + $0xc0] sm:$0xf]
        %v955 = vld [vmem:[#allocation4 + $0xc4] sm:$0xf]
        %v956 = vld [vmem:[#allocation4 + $0xc8] sm:$0xf]
        %v957 = vld [vmem:[#allocation4 + $0xcc] sm:$0xf]
        %v958 = vld [vmem:[#allocation4 + $0xd0] sm:$0xf]
        %v959 = vld [vmem:[#allocation4 + $0xd4] sm:$0xf]
        %v960 = vld [vmem:[#allocation4 + $0xd8] sm:$0xf]
        %v961 = vld [vmem:[#allocation4 + $0xdc] sm:$0xf]
        %v962 = vld [vmem:[#allocation4 + $0xe0] sm:$0xf]
        %v963 = vld [vmem:[#allocation4 + $0xe4] sm:$0xf]
        %v964 = vld [vmem:[#allocation4 + $0xe8] sm:$0xf]
        %v965 = vld [vmem:[#allocation4 + $0xec] sm:$0xf]
        %v966 = vld [vmem:[#allocation4 + $0xf0] sm:$0xf]
        %v967 = vld [vmem:[#allocation4 + $0xf4] sm:$0xf]
        %v968 = vld [vmem:[#allocation4 + $0xf8] sm:$0xf]
        %v969 = vld [vmem:[#allocation4 + $0xfc] sm:$0xf]
        %v970 = vld [vmem:[%s4] sm:$0x1]
        %v972 = vperm.slane %v970, 0
        %v1038 = vunpack.c.l.b16 %v906
        %v1039 = vunpack.c.l.b16 %v907
        %v1040 = vunpack.c.l.b16 %v908
        %v1041 = vunpack.c.l.b16 %v909
        %v1042 = vunpack.c.l.b16 %v910
        %v1043 = vunpack.c.l.b16 %v911
        %v1044 = vunpack.c.l.b16 %v912
        %v1045 = vunpack.c.l.b16 %v913
        %v1046 = vunpack.c.l.b16 %v914
        %v1047 = vunpack.c.l.b16 %v915
        %v1048 = vunpack.c.l.b16 %v916
        %v1049 = vunpack.c.l.b16 %v917
        %v1050 = vunpack.c.l.b16 %v918
        %v1051 = vunpack.c.l.b16 %v919
        %v1052 = vunpack.c.l.b16 %v920
        %v1053 = vunpack.c.l.b16 %v921
        %v1054 = vunpack.c.l.b16 %v922
        %v1055 = vunpack.c.l.b16 %v923
        %v1056 = vunpack.c.l.b16 %v924
        %v1057 = vunpack.c.l.b16 %v925
        %v1058 = vunpack.c.l.b16 %v926
        %v1059 = vunpack.c.l.b16 %v927
        %v1060 = vunpack.c.l.b16 %v928
        %v1061 = vunpack.c.l.b16 %v929
        %v1062 = vunpack.c.l.b16 %v930
        %v1063 = vunpack.c.l.b16 %v931
        %v1064 = vunpack.c.l.b16 %v932
        %v1065 = vunpack.c.l.b16 %v933
        %v1066 = vunpack.c.l.b16 %v934
        %v1067 = vunpack.c.l.b16 %v935
        %v1068 = vunpack.c.l.b16 %v936
        %v1069 = vunpack.c.l.b16 %v937
        %v1070 = vunpack.c.l.b16 %v938
        %v1071 = vunpack.c.l.b16 %v939
        %v1072 = vunpack.c.l.b16 %v940
        %v1073 = vunpack.c.l.b16 %v941
        %v1074 = vunpack.c.l.b16 %v942
        %v1075 = vunpack.c.l.b16 %v943
        %v1076 = vunpack.c.l.b16 %v944
        %v1077 = vunpack.c.l.b16 %v945
        %v1078 = vunpack.c.l.b16 %v946
        %v1079 = vunpack.c.l.b16 %v947
        %v1080 = vunpack.c.l.b16 %v948
        %v1081 = vunpack.c.l.b16 %v949
        %v1082 = vunpack.c.l.b16 %v950
        %v1083 = vunpack.c.l.b16 %v951
        %v1084 = vunpack.c.l.b16 %v952
        %v1085 = vunpack.c.l.b16 %v953
        %v1086 = vunpack.c.l.b16 %v954
        %v1087 = vunpack.c.l.b16 %v955
        %v1088 = vunpack.c.l.b16 %v956
        %v1089 = vunpack.c.l.b16 %v957
        %v1090 = vunpack.c.l.b16 %v958
        %v1091 = vunpack.c.l.b16 %v959
        %v1092 = vunpack.c.l.b16 %v960
        %v1093 = vunpack.c.l.b16 %v961
        %v1094 = vunpack.c.l.b16 %v962
        %v1095 = vunpack.c.l.b16 %v963
        %v1096 = vunpack.c.l.b16 %v964
        %v1097 = vunpack.c.l.b16 %v965
        %v1098 = vunpack.c.l.b16 %v966
        %v1099 = vunpack.c.l.b16 %v967
        %v1100 = vunpack.c.l.b16 %v968
        %v1101 = vunpack.c.l.b16 %v969
        %v1102 = vpack.c.b16 %v1039, %v1038
        %v1103 = vpack.c.b16 %v1041, %v1040
        %v1104 = vpack.c.b16 %v1043, %v1042
        %v1105 = vpack.c.b16 %v1045, %v1044
        %v1106 = vpack.c.b16 %v1047, %v1046
        %v1107 = vpack.c.b16 %v1049, %v1048
        %v1108 = vpack.c.b16 %v1051, %v1050
        %v1109 = vpack.c.b16 %v1053, %v1052
        %v1110 = vpack.c.b16 %v1055, %v1054
        %v1111 = vpack.c.b16 %v1057, %v1056
        %v1112 = vpack.c.b16 %v1059, %v1058
        %v1113 = vpack.c.b16 %v1061, %v1060
        %v1114 = vpack.c.b16 %v1063, %v1062
        %v1115 = vpack.c.b16 %v1065, %v1064
        %v1116 = vpack.c.b16 %v1067, %v1066
        %v1117 = vpack.c.b16 %v1069, %v1068
        %v1118 = vpack.c.b16 %v1071, %v1070
        %v1119 = vpack.c.b16 %v1073, %v1072
        %v1120 = vpack.c.b16 %v1075, %v1074
        %v1121 = vpack.c.b16 %v1077, %v1076
        %v1122 = vpack.c.b16 %v1079, %v1078
        %v1123 = vpack.c.b16 %v1081, %v1080
        %v1124 = vpack.c.b16 %v1083, %v1082
        %v1125 = vpack.c.b16 %v1085, %v1084
        %v1126 = vpack.c.b16 %v1087, %v1086
        %v1127 = vpack.c.b16 %v1089, %v1088
        %v1128 = vpack.c.b16 %v1091, %v1090
        %v1129 = vpack.c.b16 %v1093, %v1092
        %v1130 = vpack.c.b16 %v1095, %v1094
        %v1131 = vpack.c.b16 %v1097, %v1096
        %v1132 = vpack.c.b16 %v1099, %v1098
        %v1133 = vpack.c.b16 %v1101, %v1100
        %1166 = vmatpush.bf16.msra.mxu0 %v1109
        %1167 = vmatpush.bf16.msra.mxu0 %v1108
        %1168 = vmatpush.bf16.msra.mxu0 %v1107
        %1169 = vmatpush.bf16.msra.mxu0 %v1106
        %1170 = vmatpush.bf16.msra.mxu0 %v1105
        %1171 = vmatpush.bf16.msra.mxu0 %v1104
        %1172 = vmatpush.bf16.msra.mxu0 %v1103
        %1173 = vmatpush.bf16.msra.mxu0 %v1102
        %1174 = vmatmul.bf16.gmra.mxu0 %v902
        %v1175 = vpop.f32.mrf.mxu0
        %v1176 = vadd.f32 %v972, %v1175
        %v1177 = vpop.f32.mrf.mxu0
        %v1178 = vadd.f32 %v972, %v1177
        %1179 = vdwg.mxu0
        %1180 = vmatpush.bf16.msra.mxu0 %v1117
        %1181 = vmatpush.bf16.msra.mxu0 %v1116
        %1182 = vmatpush.bf16.msra.mxu0 %v1115
        %1183 = vmatpush.bf16.msra.mxu0 %v1114
        %1184 = vmatpush.bf16.msra.mxu0 %v1113
        %1185 = vmatpush.bf16.msra.mxu0 %v1112
        %1186 = vmatpush.bf16.msra.mxu0 %v1111
        %1187 = vmatpush.bf16.msra.mxu0 %v1110
        %1188 = vmatmul.bf16.gmra.mxu0 %v903
        %v1189 = vpop.f32.mrf.mxu0
        %v1190 = vadd.f32 %v1176, %v1189
        %v1191 = vpop.f32.mrf.mxu0
        %v1192 = vadd.f32 %v1178, %v1191
        %1193 = vdwg.mxu0
        %1194 = vmatpush.bf16.msra.mxu0 %v1125
        %1195 = vmatpush.bf16.msra.mxu0 %v1124
        %1196 = vmatpush.bf16.msra.mxu0 %v1123
        %1197 = vmatpush.bf16.msra.mxu0 %v1122
        %1198 = vmatpush.bf16.msra.mxu0 %v1121
        %1199 = vmatpush.bf16.msra.mxu0 %v1120
        %1200 = vmatpush.bf16.msra.mxu0 %v1119
        %1201 = vmatpush.bf16.msra.mxu0 %v1118
        %1202 = vmatmul.bf16.gmra.mxu0 %v904
        %v1203 = vpop.f32.mrf.mxu0
        %v1204 = vadd.f32 %v1190, %v1203
        %v1205 = vpop.f32.mrf.mxu0
        %v1206 = vadd.f32 %v1192, %v1205
        %1207 = vdwg.mxu0
        %1208 = vmatpush.bf16.msra.mxu0 %v1133
        %1209 = vmatpush.bf16.msra.mxu0 %v1132
        %1210 = vmatpush.bf16.msra.mxu0 %v1131
        %1211 = vmatpush.bf16.msra.mxu0 %v1130
        %1212 = vmatpush.bf16.msra.mxu0 %v1129
        %1213 = vmatpush.bf16.msra.mxu0 %v1128
        %1214 = vmatpush.bf16.msra.mxu0 %v1127
        %1215 = vmatpush.bf16.msra.mxu0 %v1126
        %1216 = vmatmul.bf16.gmra.mxu0 %v905
        %v1217 = vpop.f32.mrf.mxu0
        %v1218 = vadd.f32 %v1204, %v1217
        %v1219 = vpop.f32.mrf.mxu0
        %v1220 = vadd.f32 %v1206, %v1219
        %1221 = vdwg.mxu0
        %v1222 = vunpack.c.l.bf16 %v316
        %v1223 = vunpack.c.l.bf16 %v317
        %v1224 = vadd.f32 %v1218, %v1222
        %v1225 = vadd.f32 %v1220, %v1223
        %v1226 = vld [vmem:[%s5] sm:$0x1]
        %v1227 = vld [vmem:[%s6] sm:$0x1]
        %1228 = vadd.xlane.f32.xlu0 %v1224
        %v1229 = vpop.xlane.xlu0 %1228
        %1230 = vadd.xlane.f32.xlu0 %v1225
        %v1231 = vpop.xlane.xlu0 %1230
        %v1232 = vrcp.pop 128.0
        %v1233 = vmul.f32 128.0, %v1232
        %v1234 = vsub.f32 1.0, %v1233
        %v1235 = vmul.f32 %v1232, %v1234
        %v1236 = vadd.f32 %v1232, %v1235
        %vm1237 = vweird.f32 %v1232
        %v1238 = vsel %vm1237, %v1232, %v1236
        %v1239 = vmul.f32 %v1229, %v1238
        %v1240 = vmul.f32 %v1231, %v1238
        %v1241 = vmul.f32 %v1224, %v1224
        %v1242 = vmul.f32 %v1225, %v1225
        %1243 = vadd.xlane.f32.xlu0 %v1241
        %v1244 = vpop.xlane.xlu0 %1243
        %1245 = vadd.xlane.f32.xlu0 %v1242
        %v1246 = vpop.xlane.xlu0 %1245
        %v1247 = vmul.f32 %v1244, %v1238
        %v1248 = vmul.f32 %v1246, %v1238
        %v1249 = vmul.f32 %v1239, %v1239
        %v1250 = vmul.f32 %v1240, %v1240
        %v1251 = vsub.f32 %v1247, %v1249
        %v1252 = vsub.f32 %v1248, %v1250
        %v1253 = vmax.f32 %v1251, 0.0
        %v1254 = vmax.f32 %v1252, 0.0
        %v1255 = vsub.f32 %v1224, %v1239
        %v1256 = vsub.f32 %v1225, %v1240
        %v1257 = vadd.f32 %v1253, 1e-12
        %v1258 = vadd.f32 %v1254, 1e-12
        %v1259 = vrsqrt.pop %v1257
        %v1260 = vmul.f32 %v1259, %v1257
        %v1261 = vmul.f32 %v1260, %v1259
        %v1262 = vmul.f32 0.5, %v1261
        %v1263 = vsub.f32 1.5, %v1262
        %v1264 = vmul.f32 %v1259, %v1263
        %vm1265 = vweird.f32 %v1257
        %vm1266 = vweird.f32 %v1259
        %vm1267 = vmor %vm1265, %vm1266
        %v1268 = vsel %vm1267, %v1259, %v1264
        %v1269 = vrsqrt.pop %v1258
        %v1270 = vmul.f32 %v1269, %v1258
        %v1271 = vmul.f32 %v1270, %v1269
        %v1272 = vmul.f32 0.5, %v1271
        %v1273 = vsub.f32 1.5, %v1272
        %v1274 = vmul.f32 %v1269, %v1273
        %vm1275 = vweird.f32 %v1258
        %vm1276 = vweird.f32 %v1269
        %vm1277 = vmor %vm1275, %vm1276
        %v1278 = vsel %vm1277, %v1269, %v1274
        %v1279 = vmul.f32 %v1255, %v1268
        %v1280 = vmul.f32 %v1256, %v1278
        %v1282 = vperm.slane %v1226, 0
        %v1284 = vmul.f32 %v1279, %v1282
        %v1285 = vmul.f32 %v1280, %v1282
        %v1287 = vperm.slane %v1227, 0
        %v1289 = vadd.f32 %v1284, %v1287
        %v1290 = vadd.f32 %v1285, %v1287
        %v1291 = vpack.c.bf16 %v1289, %v1289
        %v1292 = vpack.c.bf16 %v1290, %v1290
        %1293 = vst [vmem:[%s314] sm:$0xf] %v1291
        %1294 = vst [vmem:[%s314 + $0x4] sm:$0xf] %v1292
        %s1295 = smul.u32 2, %s20
        %p1296 = scmp.lt.s32.totalorder %s1295, 3
        %s1297 = scalar_select %p1296, %s1295, 3
        %s1298 = smul.addr %s1297, 4
        %s1299 = scalar_lea.vmem %s7, %s1298
        // Predicated region
        $region57: #{bert_forward.10} parent=47 // pred_check
          %p1300 = pneg %p190
        $region58: #{bert_forward.10} parent=47 // pred_check_branch
          %1302 = sbr.rel (%p1300) target = $region60
        $region59: #{bert_forward.10} parent=47 // pred_region
          %s1303 = smul.u32 2, %s20
        $region60: #{bert_forward.10} parent=47 // pred_fallthru
          _
      $region48: #{bert_forward.10} parent=5 // pred_fallthru
        _
      %p1304 = scmp.le.s32.totalorder 2, %s15
      // Predicated region
      $region61: #{bert_forward.10} parent=5 // pred_check
        %p1305 = pneg %p1304
      $region62: #{bert_forward.10} parent=5 // pred_check_branch
        %1307 = sbr.rel (%p1305) target = $region64
      $region63: #{bert_forward.10} parent=5 // pred_region
        %s1308 = ssub.s32 %s15, 2
        // Predicated region
        $region65: #{bert_forward.10} parent=63 // pred_check
          %p1309 = pneg %p196
        $region66: #{bert_forward.10} parent=63 // pred_check_branch
          %1311 = sbr.rel (%p1309) target = $region68
        $region67: #{bert_forward.10} parent=63 // pred_region
          %s1312 = smul.u32 2, %s21
          %p1313 = scmp.lt.s32.totalorder %s1312, 3
          %s1314 = scalar_select %p1313, %s1312, 3
          %s1315 = smul.addr %s1314, 4
          %s1316 = scalar_lea.vmem %s7, %s1315
        $region68: #{bert_forward.10} parent=63 // pred_fallthru
          _
      $region64: #{bert_forward.10} parent=5 // pred_fallthru
        _
    $region6: #{bert_forward.10} parent=1 // loop_footer
      %s19 = sadd.s32 1, %s15
    $region7: #{bert_forward.10} parent=1 // loop_footer_branch
      %14 = sbr.rel target = $region3
    $region8: #{bert_forward.10} parent=1 // loop_exit
      _
    %1317 = vsyncpa [#allocation3], 1
    %s1318 = scalar_lea.sflag [#allocation3], 1
    %1319 = vsyncpa %s1318, 1
    %1320 = vsyncpa [#allocation5], 1

// kernel: bert_forward.11
$region0: #{bert_forward.11}
  #allocation0 [shape = 'u32[]', space=smem, size = 0x4, offset = 0x4, fixed_abs, tag = 'smem constant byte address 0x4 - core index']
  #allocation1 [shape = 'u32[72,128]{1,0:T(1,128)}', space=vmem, size = 0x9000, scoped, tag = 'internal scratch']
  %s0 = inlined_call_operand.vmem [shape: bf16[2,128], index: 0, kind: input, shape index: {}]
  %s1 = inlined_call_operand.vmem [shape: bf16[128,128], index: 1, kind: input, shape index: {}]
  %s2 = inlined_call_operand.vmem [shape: f32[1,128], index: 2, kind: input, shape index: {}]
  %s3 = inlined_call_operand.vmem [shape: bf16[128,2], index: 3, kind: input, shape index: {}]
  %s4 = inlined_call_operand.vmem [shape: f32[1,2], index: 4, kind: input, shape index: {}]
  %s5 = inlined_call_operand.hbm [shape: f32[2,2], index: 5, kind: output, shape index: {}]
  %s6 = sld [smem:[#allocation0]]
  $region30: #{bert_forward.11} parent=0
    _
  %s8 = ssub.s32 1, %s6
  %s9 = scalar_select 0, %s8, %s6
  $region1: #{bert_forward.11} parent=0
    #allocation2 [shape = 'u8[1024]{0}', space=vmem, size = 0x400, scoped, tag = 'output window, operand 0, single buffered']
    #allocation3 [shape = 's32[1]{0}', space=sflag, size = 0x4, scoped, tag = 'scoped memory for bert_forward.11']
    %10 = vsyncpa [#allocation3], 0
    // Predicated region
    $region2: #{bert_forward.11} parent=1 // pred_check
      _
    $region3: #{bert_forward.11} parent=1 // pred_check_branch
      %12 = sbr.rel (0) target = $region5
    $region4: #{bert_forward.11} parent=1 // pred_region
      _
    $region5: #{bert_forward.11} parent=1 // pred_fallthru
      _
    // Predicated region
    $region6: #{bert_forward.11} parent=1 // pred_check
      _
    $region7: #{bert_forward.11} parent=1 // pred_check_branch
      %14 = sbr.rel (0) target = $region9
    $region8: #{bert_forward.11} parent=1 // pred_region
      _
    $region9: #{bert_forward.11} parent=1 // pred_fallthru
      _
    // Predicated region
    $region10: #{bert_forward.11} parent=1 // pred_check
      _
    $region11: #{bert_forward.11} parent=1 // pred_check_branch
      %16 = sbr.rel (0) target = $region13
    $region12: #{bert_forward.11} parent=1 // pred_region
      _
    $region13: #{bert_forward.11} parent=1 // pred_fallthru
      _
    // Predicated region
    $region14: #{bert_forward.11} parent=1 // pred_check
      _
    $region15: #{bert_forward.11} parent=1 // pred_check_branch
      %18 = sbr.rel (0) target = $region17
    $region16: #{bert_forward.11} parent=1 // pred_region
      _
    $region17: #{bert_forward.11} parent=1 // pred_fallthru
      _
    // Predicated region
    $region18: #{bert_forward.11} parent=1 // pred_check
      _
    $region19: #{bert_forward.11} parent=1 // pred_check_branch
      %20 = sbr.rel (0) target = $region21
    $region20: #{bert_forward.11} parent=1 // pred_region
      _
    $region21: #{bert_forward.11} parent=1 // pred_fallthru
      _
    %v21 = vld [vmem:[%s0] sm:$0x1]
    %v22 = vld [vmem:[%s1] sm:$0xf]
    %v23 = vld [vmem:[%s1 + $0x4] sm:$0xf]
    %v24 = vld [vmem:[%s1 + $0x8] sm:$0xf]
    %v25 = vld [vmem:[%s1 + $0xc] sm:$0xf]
    %v26 = vld [vmem:[%s1 + $0x10] sm:$0xf]
    %v27 = vld [vmem:[%s1 + $0x14] sm:$0xf]
    %v28 = vld [vmem:[%s1 + $0x18] sm:$0xf]
    %v29 = vld [vmem:[%s1 + $0x1c] sm:$0xf]
    %v30 = vld [vmem:[%s1 + $0x20] sm:$0xf]
    %v31 = vld [vmem:[%s1 + $0x24] sm:$0xf]
    %v32 = vld [vmem:[%s1 + $0x28] sm:$0xf]
    %v33 = vld [vmem:[%s1 + $0x2c] sm:$0xf]
    %v34 = vld [vmem:[%s1 + $0x30] sm:$0xf]
    %v35 = vld [vmem:[%s1 + $0x34] sm:$0xf]
    %v36 = vld [vmem:[%s1 + $0x38] sm:$0xf]
    %v37 = vld [vmem:[%s1 + $0x3c] sm:$0xf]
    %v38 = vld [vmem:[%s2] sm:$0x1]
    %v40 = vperm.slane %v38, 0
    %v58 = vunpack.c.l.b16 %v22
    %v59 = vunpack.c.l.b16 %v23
    %v60 = vunpack.c.l.b16 %v24
    %v61 = vunpack.c.l.b16 %v25
    %v62 = vunpack.c.l.b16 %v26
    %v63 = vunpack.c.l.b16 %v27
    %v64 = vunpack.c.l.b16 %v28
    %v65 = vunpack.c.l.b16 %v29
    %v66 = vunpack.c.l.b16 %v30
    %v67 = vunpack.c.l.b16 %v31
    %v68 = vunpack.c.l.b16 %v32
    %v69 = vunpack.c.l.b16 %v33
    %v70 = vunpack.c.l.b16 %v34
    %v71 = vunpack.c.l.b16 %v35
    %v72 = vunpack.c.l.b16 %v36
    %v73 = vunpack.c.l.b16 %v37
    %v74 = vpack.c.b16 %v59, %v58
    %v75 = vpack.c.b16 %v61, %v60
    %v76 = vpack.c.b16 %v63, %v62
    %v77 = vpack.c.b16 %v65, %v64
    %v78 = vpack.c.b16 %v67, %v66
    %v79 = vpack.c.b16 %v69, %v68
    %v80 = vpack.c.b16 %v71, %v70
    %v81 = vpack.c.b16 %v73, %v72
    %90 = vmatpush.bf16.msra.mxu0 %v81
    %91 = vmatpush.bf16.msra.mxu0 %v80
    %92 = vmatpush.bf16.msra.mxu0 %v79
    %93 = vmatpush.bf16.msra.mxu0 %v78
    %94 = vmatpush.bf16.msra.mxu0 %v77
    %95 = vmatpush.bf16.msra.mxu0 %v76
    %96 = vmatpush.bf16.msra.mxu0 %v75
    %97 = vmatpush.bf16.msra.mxu0 %v74
    %98 = vmatmul.bf16.gmra.mxu0 %v21
    %v99 = vpop.f32.mrf.mxu0
    %v100 = vadd.f32 %v40, %v99
    %v101 = vpop.f32.mrf.mxu0
    %102 = vdwg.mxu0
    %v103 = vtanh.pop %v100
    %v104 = vpack.c.bf16 %v103, %v103
    %v105 = vld [vmem:[%s3] sm:$0xf]
    %v106 = vld [vmem:[%s3 + $0x4] sm:$0xf]
    %v107 = vld [vmem:[%s3 + $0x8] sm:$0xf]
    %v108 = vld [vmem:[%s3 + $0xc] sm:$0xf]
    %v109 = vld [vmem:[%s3 + $0x10] sm:$0xf]
    %v110 = vld [vmem:[%s3 + $0x14] sm:$0xf]
    %v111 = vld [vmem:[%s3 + $0x18] sm:$0xf]
    %v112 = vld [vmem:[%s3 + $0x1c] sm:$0xf]
    %v113 = vld [vmem:[%s3 + $0x20] sm:$0xf]
    %v114 = vld [vmem:[%s3 + $0x24] sm:$0xf]
    %v115 = vld [vmem:[%s3 + $0x28] sm:$0xf]
    %v116 = vld [vmem:[%s3 + $0x2c] sm:$0xf]
    %v117 = vld [vmem:[%s3 + $0x30] sm:$0xf]
    %v118 = vld [vmem:[%s3 + $0x34] sm:$0xf]
    %v119 = vld [vmem:[%s3 + $0x38] sm:$0xf]
    %v120 = vld [vmem:[%s3 + $0x3c] sm:$0xf]
    %v121 = vld [vmem:[%s4] sm:$0x1]
    %v123 = vperm.slane %v121, 0
    %v141 = vunpack.c.l.b16 %v105
    %v142 = vunpack.c.l.b16 %v106
    %v143 = vunpack.c.l.b16 %v107
    %v144 = vunpack.c.l.b16 %v108
    %v145 = vunpack.c.l.b16 %v109
    %v146 = vunpack.c.l.b16 %v110
    %v147 = vunpack.c.l.b16 %v111
    %v148 = vunpack.c.l.b16 %v112
    %v149 = vunpack.c.l.b16 %v113
    %v150 = vunpack.c.l.b16 %v114
    %v151 = vunpack.c.l.b16 %v115
    %v152 = vunpack.c.l.b16 %v116
    %v153 = vunpack.c.l.b16 %v117
    %v154 = vunpack.c.l.b16 %v118
    %v155 = vunpack.c.l.b16 %v119
    %v156 = vunpack.c.l.b16 %v120
    %v157 = vpack.c.b16 %v142, %v141
    %v158 = vpack.c.b16 %v144, %v143
    %v159 = vpack.c.b16 %v146, %v145
    %v160 = vpack.c.b16 %v148, %v147
    %v161 = vpack.c.b16 %v150, %v149
    %v162 = vpack.c.b16 %v152, %v151
    %v163 = vpack.c.b16 %v154, %v153
    %v164 = vpack.c.b16 %v156, %v155
    %173 = vmatpush.bf16.msra.mxu0 %v164
    %174 = vmatpush.bf16.msra.mxu0 %v163
    %175 = vmatpush.bf16.msra.mxu0 %v162
    %176 = vmatpush.bf16.msra.mxu0 %v161
    %177 = vmatpush.bf16.msra.mxu0 %v160
    %178 = vmatpush.bf16.msra.mxu0 %v159
    %179 = vmatpush.bf16.msra.mxu0 %v158
    %180 = vmatpush.bf16.msra.mxu0 %v157
    %181 = vmatmul.bf16.gmra.mxu0 %v104
    %v182 = vpop.f32.mrf.mxu0
    %v183 = vadd.f32 %v123, %v182
    %v184 = vpop.f32.mrf.mxu0
    %185 = vdwg.mxu0
    %vm186 = vcmask 9216
    %187 = vst.msk [vmem:[#allocation2] sm:$0x3] %vm186, %v183
    // Predicated region
    $region22: #{bert_forward.11} parent=1 // pred_check
      _
    $region23: #{bert_forward.11} parent=1 // pred_check_branch
      %189 = sbr.rel (0) target = $region25
    $region24: #{bert_forward.11} parent=1 // pred_region
      %191 = vsyncadd [#allocation3], 0
      %s193 = sshll.u32 [#allocation2], 4
      %s194 = int_to_ptr.vmem [resolvable:$true] %s193
      %s195 = sshll.u32 %s5, 4
      %s196 = int_to_ptr.hbm [resolvable:$true] %s195
      %198 = dma.vmem_to_hbm [thread:$0]  %s194, 32, %s196, [#allocation3]
    $region25: #{bert_forward.11} parent=1 // pred_fallthru
      _
    // Predicated region
    $region26: #{bert_forward.11} parent=1 // pred_check
      _
    $region27: #{bert_forward.11} parent=1 // pred_check_branch
      %200 = sbr.rel (0) target = $region29
    $region28: #{bert_forward.11} parent=1 // pred_region
      %202 = dma.done [#allocation3], 32
    $region29: #{bert_forward.11} parent=1 // pred_fallthru
      _
    %203 = vsyncpa [#allocation3], 1

</llo_original>
